<compile_context>
chip_gen: v7x
topology: tpu7x:2x2x1
jax: 0.10.0
libtpu: 0.0.40
codegen_flags: <defaults>
</compile_context>

<pallas_src>
import functools
import math

import jax
import jax.numpy as jnp
from jax.experimental import pallas as pl
from jax.experimental.pallas import tpu as pltpu

# ----------------------------------------------------------------------------
# Bregman (activation, offset, range) triple for activation='atan', version='bregman'.
# TODO(synk): the reference repo's `get()` is not included in the provided source;
# we use the canonical Bregman pair (activation=arctan, offset=tan (its inverse),
# range=(-pi/2+eps, pi/2-eps)).
_EPS = 1e-2
_RANGE = (-math.pi / 2.0 + _EPS, math.pi / 2.0 - _EPS)

_LANE = 128  # TPU lane width; packed slabs and the output are padded to this


# ----------------------------------------------------------------------------
# VPU-only transcendental approximations.  `recip` defaults to an exact divide
# (host-side asserts / references); the kernel passes pl.reciprocal(approx=True)
# so the divides ride the otherwise-idle EUP slot.
# ----------------------------------------------------------------------------
def _exact_recip(v):
    return 1.0 / v


def tan_approx(x, recip=_exact_recip):
    """tan(x) on (-pi/2, pi/2) as sin(x)/cos(x) with Taylor polynomials.

    Only mul/add/(recip). Relative error <~5e-5 even at the clamp boundary,
    where the subsequent arctan compresses it further.
    """
    z = x * x
    s = x * (1.0 + z * (-1.0 / 6.0 + z * (1.0 / 120.0 + z * (-1.0 / 5040.0
            + z * (1.0 / 362880.0 + z * (-1.0 / 39916800.0))))))
    c = 1.0 + z * (-0.5 + z * (1.0 / 24.0 + z * (-1.0 / 720.0
            + z * (1.0 / 40320.0 + z * (-1.0 / 3628800.0
            + z * (1.0 / 479001600.0))))))
    return s * recip(c)


def atan_approx(y, recip=_exact_recip):
    """arctan(y) for arbitrary y: Cephes-style 3-region reduction + odd poly.

    Only mul/add/(recip)/abs/where. Max error ~2e-7 rad with exact divides.
    """
    ay = jnp.abs(y)
    big = ay > 2.414213562373095     # tan(3*pi/8)
    mid = ay > 0.4142135623730951    # tan(pi/8)
    # max() guard keeps the unselected big-branch finite at ay == 0
    # (selected only when ay > 2.414, so results are unchanged).
    t = jnp.where(big, -recip(jnp.maximum(ay, 1.0)),
                  jnp.where(mid, (ay - 1.0) * recip(ay + 1.0), ay))
    base = jnp.where(big, math.pi / 2.0, jnp.where(mid, math.pi / 4.0, 0.0))
    z = t * t
    p = ((8.05374449538e-2 * z - 1.38776856032e-1) * z
         + 1.99777106478e-1) * z - 3.33329491539e-1
    r = base + t + t * z * p
    return jnp.where(y < 0.0, -r, r)


# ----------------------------------------------------------------------------
# Fused forward kernel: 7 layers + log_softmax, everything VMEM-resident.
# ----------------------------------------------------------------------------
def gcnnet7_kernel(x_ref, ahat_ref, w_ref, b_ref, o_ref, *, lo, hi, nhid, ncls):
    recip = lambda v: pl.reciprocal(v, approx=True)   # EUP; VPU slots stay free

    a_hat = ahat_ref[...]      # (N, N) bf16 — loaded once, reused by all layers
    h = x_ref[...]             # (N, F) f32

    def layer(h, wr, w, b):
        hb = h.astype(jnp.bfloat16)                      # MXU operand cast only
        # reparametrization (Identity for middle layers -> no matmul) + clamp + tan offset
        z = h if wr is None else jnp.dot(hb, wr, preferred_element_type=jnp.float32)
        z_off = tan_approx(jnp.clip(z, lo, hi), recip)
        # dense GCNConv: A_hat @ (h @ W) + b  (bf16 operands, f32 accumulate)
        inner = jnp.dot(hb, w, preferred_element_type=jnp.float32).astype(jnp.bfloat16)
        msg = jnp.dot(a_hat, inner, preferred_element_type=jnp.float32) + b
        # Bregman activation; dropout(p=0.3) is identity at inference time.
        return atan_approx(z_off + msg, recip)

    # --- static lane slices of the packed weight / bias slabs (free) ---
    # w_ref columns: [0:nhid]=wr0 | [nhid:7*nhid]=W0..W5 | [..+ncls]=W6 | [..+ncls]=wr6
    h = layer(h, w_ref[:, 0:nhid], w_ref[:, nhid:2 * nhid], b_ref[:, 0:nhid])
    for i in range(1, 6):      # Identity reparametrization layers
        h = layer(h, None,
                  w_ref[:, (i + 1) * nhid:(i + 2) * nhid],
                  b_ref[:, i * nhid:(i + 1) * nhid])
    h = layer(h,
              w_ref[:, 7 * nhid + ncls:7 * nhid + 2 * ncls],   # wr6
              w_ref[:, 7 * nhid:7 * nhid + ncls],              # W6
              b_ref[:, 6 * nhid:6 * nhid + ncls])              # b6

    # fused epilogue: F.log_softmax(x, dim=1), stored as one lane-dense slab
    m = jnp.max(h, axis=1, keepdims=True)
    s = h - m
    lse = jnp.log(jnp.sum(jnp.exp(s), axis=1, keepdims=True))
    res = s - lse
    n, out_w = o_ref.shape
    o_ref[...] = jnp.concatenate(
        [res, jnp.zeros((n, out_w - ncls), jnp.float32)], axis=1)


def gcnnet7_forward(x, ahat_bf16, w_pack, b_pack, *, lo, hi, nhid, ncls):
    n = x.shape[0]
    kernel = functools.partial(gcnnet7_kernel, lo=lo, hi=hi, nhid=nhid, ncls=ncls)
    vmem = pl.BlockSpec(memory_space=pltpu.MemorySpace.VMEM)
    out = pl.pallas_call(
        kernel,
        out_shape=jax.ShapeDtypeStruct((n, _LANE), jnp.float32),
        in_specs=[vmem] * 4,
        out_specs=vmem,
    )(x, ahat_bf16, w_pack, b_pack)
    return out[:, :ncls]


# ----------------------------------------------------------------------------
# Pure-JAX references for validation.
#   bf16_mxu=True  : mirrors the kernel's bf16 MXU operand casts but uses exact
#                    tan/arctan/divides -> tight structural check.
#   bf16_mxu=False : full f32 HIGHEST-precision reference -> loose sanity check.
# ----------------------------------------------------------------------------
def gcnnet7_reference(x, ahat, wr0_t, wr6_t, ws_t, bs, lo, hi, *, bf16_mxu):
    P = jax.lax.Precision.HIGHEST

    def dot(a, b):
        if bf16_mxu:
            return jnp.dot(a.astype(jnp.bfloat16), b.astype(jnp.bfloat16),
                           preferred_element_type=jnp.float32)
        return jnp.dot(a, b, precision=P)

    def layer(h, wr, w, b):
        z = h if wr is None else dot(h, wr)
        z_off = jnp.tan(jnp.clip(z, lo, hi))
        msg = dot(ahat, dot(h, w)) + b
        return jnp.arctan(z_off + msg)

    h = layer(x, wr0_t, ws_t[0], bs[0])
    for i in range(1, 6):
        h = layer(h, None, ws_t[i], bs[i])
    h = layer(h, wr6_t, ws_t[6], bs[6])
    return jax.nn.log_softmax(h, axis=1)


# ----------------------------------------------------------------------------
# Parameter setup / graph glue (plain JAX, deterministic)
# ----------------------------------------------------------------------------
def projection_simplex(v, radius=1.0):
    """JAX port of the module's projection_simplex (row-wise simplex projection)."""
    n_feat = v.shape[1]
    u = jnp.sort(v, axis=1)
    cssv = jnp.cumsum(u, axis=1) - radius
    ind = jnp.arange(1, n_feat + 1)
    cond = u - cssv / ind.astype(v.dtype) > 0
    rho = jnp.max(jnp.where(cond, ind, 0), axis=1)  # last index where cond holds
    cssv_rho = jnp.take_along_axis(cssv, (rho - 1)[:, None], axis=1)[:, 0]
    theta = cssv_rho / rho.astype(v.dtype)
    return jnp.maximum(v - theta[:, None], 0.0)


def init_linear_weight(key, out_f, in_f):
    # PyTorch nn.Linear default init: U(-1/sqrt(in), 1/sqrt(in))
    bound = 1.0 / math.sqrt(in_f)
    return jax.random.uniform(key, (out_f, in_f), jnp.float32, -bound, bound)


def glorot_weight(key, out_f, in_f):
    # PyG GCNConv weight init (glorot), bias init zeros
    bound = math.sqrt(6.0 / (in_f + out_f))
    return jax.random.uniform(key, (out_f, in_f), jnp.float32, -bound, bound)


def build_ahat(edge_index, n):
    """Dense symmetric-normalized adjacency with self loops (GCN gcn_norm)."""
    src, dst = edge_index
    a = jnp.zeros((n, n), jnp.float32).at[dst, src].set(1.0)
    a = jnp.where(jnp.eye(n, dtype=bool), 1.0, a)  # add (remaining) self loops
    deg = jnp.sum(a, axis=1)
    dinv = jnp.where(deg > 0, 1.0 / jnp.sqrt(deg), 0.0)
    return dinv[:, None] * a * dinv[None, :]


# ----------------------------------------------------------------------------
if __name__ == "__main__":
    N, F_IN, NHID, NCLS = 32, 16, 16, 8  # nodes, num_features, nhid, num_classes

    key = jax.random.PRNGKey(0)
    k_x, k_r0, k_r6, *k_layers = jax.random.split(key, 3 + 7)

    # node features
    x = jax.random.normal(k_x, (N, F_IN), jnp.float32)

    # deterministic undirected graph: ring + chord, expressed as edge_index (2, E)
    idx = jnp.arange(N)
    src = jnp.concatenate([idx, (idx + 1) % N, idx, (idx + 5) % N])
    dst = jnp.concatenate([(idx + 1) % N, idx, (idx + 5) % N, idx])
    edge_index = jnp.stack([src, dst])
    ahat = build_ahat(edge_index, N)

    lo, hi = _RANGE

    # reparametrization: simplex-projected Linear (no bias) for layers 0 and 6,
    # Identity for layers 1..5.  constraint() in forward re-projects every call,
    # but the simplex projection is idempotent, so projecting once at init is exact.
    wr0 = projection_simplex(init_linear_weight(k_r0, NHID, F_IN))
    wr6 = projection_simplex(init_linear_weight(k_r6, NCLS, NHID))

    # GCNConv weights (glorot) / biases (zeros) for the 7 layers
    dims = [(F_IN, NHID)] + [(NHID, NHID)] * 5 + [(NHID, NCLS)]
    ws, bs = [], []
    for kk, (fi, fo) in zip(k_layers, dims):
        ws.append(glorot_weight(kk, fo, fi))
        bs.append(jnp.zeros((1, fo), jnp.float32))

    # pre-transpose once: kernel contracts as x @ W with W = (in, out)
    wr0_t, wr6_t = wr0.T, wr6.T
    ws_t = [w.T for w in ws]

    # --- host-side packing into lane-dense slabs --------------------------------
    # weights: wr0 | W0..W5 | W6 | wr6 along lanes -> (16, 16+6*16+8+8) = (16, 128)
    w_pack = jnp.concatenate([wr0_t] + ws_t[:6] + [ws_t[6], wr6_t], axis=1)
    lane_pad = (-w_pack.shape[1]) % _LANE
    if lane_pad:
        w_pack = jnp.pad(w_pack, ((0, 0), (0, lane_pad)))
    w_pack = w_pack.astype(jnp.bfloat16)
    # biases: b0..b5 | b6 -> (1, 104) padded to (1, 128)
    b_pack = jnp.concatenate(bs, axis=1)
    b_pack = jnp.pad(b_pack, ((0, 0), (0, _LANE - b_pack.shape[1])))
    # adjacency pre-cast to bf16 (MXU operand; halves its VMEM/DMA bytes)
    ahat_bf = ahat.astype(jnp.bfloat16)

    @jax.jit
    def forward(xx):
        return gcnnet7_forward(xx, ahat_bf, w_pack, b_pack,
                               lo=lo, hi=hi, nhid=NHID, ncls=NCLS)

    out = jax.block_until_ready(forward(x))
    assert out.shape == (N, NCLS)
    assert bool(jnp.all(jnp.isfinite(out)))

    # --- correctness checks ---
    # 1) polynomial approximations vs jnp.tan / jnp.arctan (exact-divide host path)
    zs = jnp.linspace(lo, hi, 4096, dtype=jnp.float32)
    t_ref = jnp.tan(zs)
    t_err = jnp.max(jnp.abs(tan_approx(zs) - t_ref) / (1.0 + jnp.abs(t_ref)))
    assert float(t_err) < 1e-3, float(t_err)
    ys = jnp.concatenate([jnp.linspace(-200.0, 200.0, 4096, dtype=jnp.float32),
                          jnp.linspace(-2.0, 2.0, 4096, dtype=jnp.float32)])
    a_err = jnp.max(jnp.abs(atan_approx(ys) - jnp.arctan(ys)))
    assert float(a_err) < 1e-4, float(a_err)
    # 2) tight structural check vs a reference that mirrors the kernel's bf16 MXU
    #    casts (exact tan/arctan/divides); catches packing / slicing / layout bugs.
    mirror = gcnnet7_reference(x, ahat, wr0_t, wr6_t, ws_t, bs, lo, hi, bf16_mxu=True)
    mirror_err = float(jnp.max(jnp.abs(out - mirror)))
    assert mirror_err < 5e-2, mirror_err
    # 3) loose sanity check vs the full-f32 exact reference (bf16 MXU rounding
    #    accumulates over 7 layers; a structural bug would be O(1)).
    ref = gcnnet7_reference(x, ahat, wr0_t, wr6_t, ws_t, bs, lo, hi, bf16_mxu=False)
    e2e_err = float(jnp.max(jnp.abs(out - ref)))
    assert e2e_err < 2.5e-1, e2e_err

    print("KERNEL_OK")
</pallas_src>

<mosaic_0001>
module attributes {stable_mosaic.version = 11 : i64} {
  func.func @gcnnet7_kernel(%arg0: memref<32x16xf32, #tpu.memory_space<vmem>>, %arg1: memref<32x32xbf16, #tpu.memory_space<vmem>>, %arg2: memref<16x128xbf16, #tpu.memory_space<vmem>>, %arg3: memref<1x128xf32, #tpu.memory_space<vmem>>, %arg4: memref<32x128xf32, #tpu.memory_space<vmem>>) attributes {dimension_semantics = [], scalar_prefetch = 0 : i64, scratch_operands = 0 : i64, tpu.core_type = #tpu.core_type<tc>} {
    %c0 = arith.constant 0 : index
    %c0_0 = arith.constant 0 : index
    %0 = vector.load %arg1[%c0, %c0_0] : memref<32x32xbf16, #tpu.memory_space<vmem>>, vector<32x32xbf16>
    %c0_1 = arith.constant 0 : index
    %c0_2 = arith.constant 0 : index
    %1 = vector.load %arg0[%c0_1, %c0_2] : memref<32x16xf32, #tpu.memory_space<vmem>>, vector<32x16xf32>
    %c0_3 = arith.constant 0 : index
    %c0_4 = arith.constant 0 : index
    %2 = vector.load %arg2[%c0_3, %c0_4] : memref<16x128xbf16, #tpu.memory_space<vmem>>, vector<16x16xbf16>
    %c0_5 = arith.constant 0 : index
    %c16 = arith.constant 16 : index
    %3 = vector.load %arg2[%c0_5, %c16] : memref<16x128xbf16, #tpu.memory_space<vmem>>, vector<16x16xbf16>
    %c0_6 = arith.constant 0 : index
    %c0_7 = arith.constant 0 : index
    %4 = vector.load %arg3[%c0_6, %c0_7] : memref<1x128xf32, #tpu.memory_space<vmem>>, vector<1x16xf32>
    %5 = arith.truncf %1 : vector<32x16xf32> to vector<32x16xbf16>
    %cst = arith.constant dense<0.000000e+00> : vector<32x16xf32>
    %6 = tpu.matmul %5, %2, %cst {dimension_numbers = #tpu.dot_dimension_numbers<[1], [0], [0], [1], [0, 0, 1, 1], [], []>} : vector<32x16xbf16>, vector<16x16xbf16>, vector<32x16xf32> -> vector<32x16xf32>
    %cst_8 = arith.constant -1.56079638 : f32
    %cst_9 = arith.constant 1.56079638 : f32
    %7 = vector.broadcast %cst_8 : f32 to vector<32x16xf32>
    %8 = arith.maximumf %7, %6 : vector<32x16xf32>
    %9 = vector.broadcast %cst_9 : f32 to vector<32x16xf32>
    %10 = arith.minimumf %9, %8 : vector<32x16xf32>
    %11 = arith.mulf %10, %10 : vector<32x16xf32>
    %cst_10 = arith.constant -2.50521079E-8 : f32
    %12 = vector.broadcast %cst_10 : f32 to vector<32x16xf32>
    %13 = arith.mulf %11, %12 : vector<32x16xf32>
    %cst_11 = arith.constant 2.75573188E-6 : f32
    %14 = vector.broadcast %cst_11 : f32 to vector<32x16xf32>
    %15 = arith.addf %14, %13 : vector<32x16xf32>
    %16 = arith.mulf %11, %15 : vector<32x16xf32>
    %cst_12 = arith.constant -1.98412701E-4 : f32
    %17 = vector.broadcast %cst_12 : f32 to vector<32x16xf32>
    %18 = arith.addf %17, %16 : vector<32x16xf32>
    %19 = arith.mulf %11, %18 : vector<32x16xf32>
    %cst_13 = arith.constant 0.00833333377 : f32
    %20 = vector.broadcast %cst_13 : f32 to vector<32x16xf32>
    %21 = arith.addf %20, %19 : vector<32x16xf32>
    %22 = arith.mulf %11, %21 : vector<32x16xf32>
    %cst_14 = arith.constant -0.166666672 : f32
    %23 = vector.broadcast %cst_14 : f32 to vector<32x16xf32>
    %24 = arith.addf %23, %22 : vector<32x16xf32>
    %25 = arith.mulf %11, %24 : vector<32x16xf32>
    %cst_15 = arith.constant 1.000000e+00 : f32
    %26 = vector.broadcast %cst_15 : f32 to vector<32x16xf32>
    %27 = arith.addf %26, %25 : vector<32x16xf32>
    %28 = arith.mulf %10, %27 : vector<32x16xf32>
    %cst_16 = arith.constant 2.08767559E-9 : f32
    %29 = vector.broadcast %cst_16 : f32 to vector<32x16xf32>
    %30 = arith.mulf %11, %29 : vector<32x16xf32>
    %cst_17 = arith.constant -2.755732E-7 : f32
    %31 = vector.broadcast %cst_17 : f32 to vector<32x16xf32>
    %32 = arith.addf %31, %30 : vector<32x16xf32>
    %33 = arith.mulf %11, %32 : vector<32x16xf32>
    %cst_18 = arith.constant 2.48015876E-5 : f32
    %34 = vector.broadcast %cst_18 : f32 to vector<32x16xf32>
    %35 = arith.addf %34, %33 : vector<32x16xf32>
    %36 = arith.mulf %11, %35 : vector<32x16xf32>
    %cst_19 = arith.constant -0.00138888892 : f32
    %37 = vector.broadcast %cst_19 : f32 to vector<32x16xf32>
    %38 = arith.addf %37, %36 : vector<32x16xf32>
    %39 = arith.mulf %11, %38 : vector<32x16xf32>
    %cst_20 = arith.constant 0.0416666679 : f32
    %40 = vector.broadcast %cst_20 : f32 to vector<32x16xf32>
    %41 = arith.addf %40, %39 : vector<32x16xf32>
    %42 = arith.mulf %11, %41 : vector<32x16xf32>
    %cst_21 = arith.constant -5.000000e-01 : f32
    %43 = vector.broadcast %cst_21 : f32 to vector<32x16xf32>
    %44 = arith.addf %43, %42 : vector<32x16xf32>
    %45 = arith.mulf %11, %44 : vector<32x16xf32>
    %cst_22 = arith.constant 1.000000e+00 : f32
    %46 = vector.broadcast %cst_22 : f32 to vector<32x16xf32>
    %47 = arith.addf %46, %45 : vector<32x16xf32>
    %48 = tpu.reciprocal %47 {approx = true} : vector<32x16xf32> -> vector<32x16xf32>
    %49 = arith.mulf %28, %48 : vector<32x16xf32>
    %cst_23 = arith.constant dense<0.000000e+00> : vector<32x16xf32>
    %50 = tpu.matmul %5, %3, %cst_23 {dimension_numbers = #tpu.dot_dimension_numbers<[1], [0], [0], [1], [0, 0, 1, 1], [], []>} : vector<32x16xbf16>, vector<16x16xbf16>, vector<32x16xf32> -> vector<32x16xf32>
    %51 = arith.truncf %50 : vector<32x16xf32> to vector<32x16xbf16>
    %cst_24 = arith.constant dense<0.000000e+00> : vector<32x16xf32>
    %52 = tpu.matmul %0, %51, %cst_24 {dimension_numbers = #tpu.dot_dimension_numbers<[1], [0], [0], [1], [0, 0, 1, 1], [], []>} : vector<32x32xbf16>, vector<32x16xbf16>, vector<32x16xf32> -> vector<32x16xf32>
    %53 = vector.broadcast %4 : vector<1x16xf32> to vector<32x16xf32>
    %54 = arith.addf %52, %53 : vector<32x16xf32>
    %55 = arith.addf %49, %54 : vector<32x16xf32>
    %56 = math.absf %55 : vector<32x16xf32>
    %cst_25 = arith.constant 2.41421366 : f32
    %57 = vector.broadcast %cst_25 : f32 to vector<32x16xf32>
    %58 = arith.cmpf ogt, %56, %57 : vector<32x16xf32>
    %cst_26 = arith.constant 0.414213568 : f32
    %59 = vector.broadcast %cst_26 : f32 to vector<32x16xf32>
    %60 = arith.cmpf ogt, %56, %59 : vector<32x16xf32>
    %cst_27 = arith.constant 1.000000e+00 : f32
    %61 = vector.broadcast %cst_27 : f32 to vector<32x16xf32>
    %62 = arith.maximumf %56, %61 : vector<32x16xf32>
    %63 = tpu.reciprocal %62 {approx = true} : vector<32x16xf32> -> vector<32x16xf32>
    %cst_28 = arith.constant 0.000000e+00 : f32
    %64 = vector.broadcast %cst_28 : f32 to vector<32x16xf32>
    %65 = arith.subf %64, %63 : vector<32x16xf32>
    %cst_29 = arith.constant 1.000000e+00 : f32
    %66 = vector.broadcast %cst_29 : f32 to vector<32x16xf32>
    %67 = arith.subf %56, %66 : vector<32x16xf32>
    %cst_30 = arith.constant 1.000000e+00 : f32
    %68 = vector.broadcast %cst_30 : f32 to vector<32x16xf32>
    %69 = arith.addf %56, %68 : vector<32x16xf32>
    %70 = tpu.reciprocal %69 {approx = true} : vector<32x16xf32> -> vector<32x16xf32>
    %71 = arith.mulf %67, %70 : vector<32x16xf32>
    %72 = arith.select %60, %71, %56 : vector<32x16xi1>, vector<32x16xf32>
    %73 = arith.select %58, %65, %72 : vector<32x16xi1>, vector<32x16xf32>
    %cst_31 = arith.constant 0.785398185 : f32
    %cst_32 = arith.constant 0.000000e+00 : f32
    %74 = vector.broadcast %cst_31 : f32 to vector<32x16xf32>
    %75 = vector.broadcast %cst_32 : f32 to vector<32x16xf32>
    %76 = arith.select %60, %74, %75 : vector<32x16xi1>, vector<32x16xf32>
    %cst_33 = arith.constant 1.57079637 : f32
    %77 = vector.broadcast %cst_33 : f32 to vector<32x16xf32>
    %78 = arith.select %58, %77, %76 : vector<32x16xi1>, vector<32x16xf32>
    %79 = arith.mulf %73, %73 : vector<32x16xf32>
    %cst_34 = arith.constant 0.0805374458 : f32
    %80 = vector.broadcast %cst_34 : f32 to vector<32x16xf32>
    %81 = arith.mulf %80, %79 : vector<32x16xf32>
    %cst_35 = arith.constant 0.138776854 : f32
    %82 = vector.broadcast %cst_35 : f32 to vector<32x16xf32>
    %83 = arith.subf %81, %82 : vector<32x16xf32>
    %84 = arith.mulf %83, %79 : vector<32x16xf32>
    %cst_36 = arith.constant 0.199777111 : f32
    %85 = vector.broadcast %cst_36 : f32 to vector<32x16xf32>
    %86 = arith.addf %84, %85 : vector<32x16xf32>
    %87 = arith.mulf %86, %79 : vector<32x16xf32>
    %cst_37 = arith.constant 0.333329499 : f32
    %88 = vector.broadcast %cst_37 : f32 to vector<32x16xf32>
    %89 = arith.subf %87, %88 : vector<32x16xf32>
    %90 = arith.addf %78, %73 : vector<32x16xf32>
    %91 = arith.mulf %73, %79 : vector<32x16xf32>
    %92 = arith.mulf %91, %89 : vector<32x16xf32>
    %93 = arith.addf %90, %92 : vector<32x16xf32>
    %cst_38 = arith.constant 0.000000e+00 : f32
    %94 = vector.broadcast %cst_38 : f32 to vector<32x16xf32>
    %95 = arith.cmpf olt, %55, %94 : vector<32x16xf32>
    %cst_39 = arith.constant 0.000000e+00 : f32
    %96 = vector.broadcast %cst_39 : f32 to vector<32x16xf32>
    %97 = arith.subf %96, %93 : vector<32x16xf32>
    %98 = arith.select %95, %97, %93 : vector<32x16xi1>, vector<32x16xf32>
    %c0_40 = arith.constant 0 : index
    %c32 = arith.constant 32 : index
    %99 = vector.load %arg2[%c0_40, %c32] : memref<16x128xbf16, #tpu.memory_space<vmem>>, vector<16x16xbf16>
    %c0_41 = arith.constant 0 : index
    %c16_42 = arith.constant 16 : index
    %100 = vector.load %arg3[%c0_41, %c16_42] : memref<1x128xf32, #tpu.memory_space<vmem>>, vector<1x16xf32>
    %101 = arith.truncf %98 : vector<32x16xf32> to vector<32x16xbf16>
    %cst_43 = arith.constant -1.56079638 : f32
    %cst_44 = arith.constant 1.56079638 : f32
    %102 = vector.broadcast %cst_43 : f32 to vector<32x16xf32>
    %103 = arith.maximumf %102, %98 : vector<32x16xf32>
    %104 = vector.broadcast %cst_44 : f32 to vector<32x16xf32>
    %105 = arith.minimumf %104, %103 : vector<32x16xf32>
    %106 = arith.mulf %105, %105 : vector<32x16xf32>
    %cst_45 = arith.constant -2.50521079E-8 : f32
    %107 = vector.broadcast %cst_45 : f32 to vector<32x16xf32>
    %108 = arith.mulf %106, %107 : vector<32x16xf32>
    %cst_46 = arith.constant 2.75573188E-6 : f32
    %109 = vector.broadcast %cst_46 : f32 to vector<32x16xf32>
    %110 = arith.addf %109, %108 : vector<32x16xf32>
    %111 = arith.mulf %106, %110 : vector<32x16xf32>
    %cst_47 = arith.constant -1.98412701E-4 : f32
    %112 = vector.broadcast %cst_47 : f32 to vector<32x16xf32>
    %113 = arith.addf %112, %111 : vector<32x16xf32>
    %114 = arith.mulf %106, %113 : vector<32x16xf32>
    %cst_48 = arith.constant 0.00833333377 : f32
    %115 = vector.broadcast %cst_48 : f32 to vector<32x16xf32>
    %116 = arith.addf %115, %114 : vector<32x16xf32>
    %117 = arith.mulf %106, %116 : vector<32x16xf32>
    %cst_49 = arith.constant -0.166666672 : f32
    %118 = vector.broadcast %cst_49 : f32 to vector<32x16xf32>
    %119 = arith.addf %118, %117 : vector<32x16xf32>
    %120 = arith.mulf %106, %119 : vector<32x16xf32>
    %cst_50 = arith.constant 1.000000e+00 : f32
    %121 = vector.broadcast %cst_50 : f32 to vector<32x16xf32>
    %122 = arith.addf %121, %120 : vector<32x16xf32>
    %123 = arith.mulf %105, %122 : vector<32x16xf32>
    %cst_51 = arith.constant 2.08767559E-9 : f32
    %124 = vector.broadcast %cst_51 : f32 to vector<32x16xf32>
    %125 = arith.mulf %106, %124 : vector<32x16xf32>
    %cst_52 = arith.constant -2.755732E-7 : f32
    %126 = vector.broadcast %cst_52 : f32 to vector<32x16xf32>
    %127 = arith.addf %126, %125 : vector<32x16xf32>
    %128 = arith.mulf %106, %127 : vector<32x16xf32>
    %cst_53 = arith.constant 2.48015876E-5 : f32
    %129 = vector.broadcast %cst_53 : f32 to vector<32x16xf32>
    %130 = arith.addf %129, %128 : vector<32x16xf32>
    %131 = arith.mulf %106, %130 : vector<32x16xf32>
    %cst_54 = arith.constant -0.00138888892 : f32
    %132 = vector.broadcast %cst_54 : f32 to vector<32x16xf32>
    %133 = arith.addf %132, %131 : vector<32x16xf32>
    %134 = arith.mulf %106, %133 : vector<32x16xf32>
    %cst_55 = arith.constant 0.0416666679 : f32
    %135 = vector.broadcast %cst_55 : f32 to vector<32x16xf32>
    %136 = arith.addf %135, %134 : vector<32x16xf32>
    %137 = arith.mulf %106, %136 : vector<32x16xf32>
    %cst_56 = arith.constant -5.000000e-01 : f32
    %138 = vector.broadcast %cst_56 : f32 to vector<32x16xf32>
    %139 = arith.addf %138, %137 : vector<32x16xf32>
    %140 = arith.mulf %106, %139 : vector<32x16xf32>
    %cst_57 = arith.constant 1.000000e+00 : f32
    %141 = vector.broadcast %cst_57 : f32 to vector<32x16xf32>
    %142 = arith.addf %141, %140 : vector<32x16xf32>
    %143 = tpu.reciprocal %142 {approx = true} : vector<32x16xf32> -> vector<32x16xf32>
    %144 = arith.mulf %123, %143 : vector<32x16xf32>
    %cst_58 = arith.constant dense<0.000000e+00> : vector<32x16xf32>
    %145 = tpu.matmul %101, %99, %cst_58 {dimension_numbers = #tpu.dot_dimension_numbers<[1], [0], [0], [1], [0, 0, 1, 1], [], []>} : vector<32x16xbf16>, vector<16x16xbf16>, vector<32x16xf32> -> vector<32x16xf32>
    %146 = arith.truncf %145 : vector<32x16xf32> to vector<32x16xbf16>
    %cst_59 = arith.constant dense<0.000000e+00> : vector<32x16xf32>
    %147 = tpu.matmul %0, %146, %cst_59 {dimension_numbers = #tpu.dot_dimension_numbers<[1], [0], [0], [1], [0, 0, 1, 1], [], []>} : vector<32x32xbf16>, vector<32x16xbf16>, vector<32x16xf32> -> vector<32x16xf32>
    %148 = vector.broadcast %100 : vector<1x16xf32> to vector<32x16xf32>
    %149 = arith.addf %147, %148 : vector<32x16xf32>
    %150 = arith.addf %144, %149 : vector<32x16xf32>
    %151 = math.absf %150 : vector<32x16xf32>
    %cst_60 = arith.constant 2.41421366 : f32
    %152 = vector.broadcast %cst_60 : f32 to vector<32x16xf32>
    %153 = arith.cmpf ogt, %151, %152 : vector<32x16xf32>
    %cst_61 = arith.constant 0.414213568 : f32
    %154 = vector.broadcast %cst_61 : f32 to vector<32x16xf32>
    %155 = arith.cmpf ogt, %151, %154 : vector<32x16xf32>
    %cst_62 = arith.constant 1.000000e+00 : f32
    %156 = vector.broadcast %cst_62 : f32 to vector<32x16xf32>
    %157 = arith.maximumf %151, %156 : vector<32x16xf32>
    %158 = tpu.reciprocal %157 {approx = true} : vector<32x16xf32> -> vector<32x16xf32>
    %cst_63 = arith.constant 0.000000e+00 : f32
    %159 = vector.broadcast %cst_63 : f32 to vector<32x16xf32>
    %160 = arith.subf %159, %158 : vector<32x16xf32>
    %cst_64 = arith.constant 1.000000e+00 : f32
    %161 = vector.broadcast %cst_64 : f32 to vector<32x16xf32>
    %162 = arith.subf %151, %161 : vector<32x16xf32>
    %cst_65 = arith.constant 1.000000e+00 : f32
    %163 = vector.broadcast %cst_65 : f32 to vector<32x16xf32>
    %164 = arith.addf %151, %163 : vector<32x16xf32>
    %165 = tpu.reciprocal %164 {approx = true} : vector<32x16xf32> -> vector<32x16xf32>
    %166 = arith.mulf %162, %165 : vector<32x16xf32>
    %167 = arith.select %155, %166, %151 : vector<32x16xi1>, vector<32x16xf32>
    %168 = arith.select %153, %160, %167 : vector<32x16xi1>, vector<32x16xf32>
    %cst_66 = arith.constant 0.785398185 : f32
    %cst_67 = arith.constant 0.000000e+00 : f32
    %169 = vector.broadcast %cst_66 : f32 to vector<32x16xf32>
    %170 = vector.broadcast %cst_67 : f32 to vector<32x16xf32>
    %171 = arith.select %155, %169, %170 : vector<32x16xi1>, vector<32x16xf32>
    %cst_68 = arith.constant 1.57079637 : f32
    %172 = vector.broadcast %cst_68 : f32 to vector<32x16xf32>
    %173 = arith.select %153, %172, %171 : vector<32x16xi1>, vector<32x16xf32>
    %174 = arith.mulf %168, %168 : vector<32x16xf32>
    %cst_69 = arith.constant 0.0805374458 : f32
    %175 = vector.broadcast %cst_69 : f32 to vector<32x16xf32>
    %176 = arith.mulf %175, %174 : vector<32x16xf32>
    %cst_70 = arith.constant 0.138776854 : f32
    %177 = vector.broadcast %cst_70 : f32 to vector<32x16xf32>
    %178 = arith.subf %176, %177 : vector<32x16xf32>
    %179 = arith.mulf %178, %174 : vector<32x16xf32>
    %cst_71 = arith.constant 0.199777111 : f32
    %180 = vector.broadcast %cst_71 : f32 to vector<32x16xf32>
    %181 = arith.addf %179, %180 : vector<32x16xf32>
    %182 = arith.mulf %181, %174 : vector<32x16xf32>
    %cst_72 = arith.constant 0.333329499 : f32
    %183 = vector.broadcast %cst_72 : f32 to vector<32x16xf32>
    %184 = arith.subf %182, %183 : vector<32x16xf32>
    %185 = arith.addf %173, %168 : vector<32x16xf32>
    %186 = arith.mulf %168, %174 : vector<32x16xf32>
    %187 = arith.mulf %186, %184 : vector<32x16xf32>
    %188 = arith.addf %185, %187 : vector<32x16xf32>
    %cst_73 = arith.constant 0.000000e+00 : f32
    %189 = vector.broadcast %cst_73 : f32 to vector<32x16xf32>
    %190 = arith.cmpf olt, %150, %189 : vector<32x16xf32>
    %cst_74 = arith.constant 0.000000e+00 : f32
    %191 = vector.broadcast %cst_74 : f32 to vector<32x16xf32>
    %192 = arith.subf %191, %188 : vector<32x16xf32>
    %193 = arith.select %190, %192, %188 : vector<32x16xi1>, vector<32x16xf32>
    %c0_75 = arith.constant 0 : index
    %c48 = arith.constant 48 : index
    %194 = vector.load %arg2[%c0_75, %c48] : memref<16x128xbf16, #tpu.memory_space<vmem>>, vector<16x16xbf16>
    %c0_76 = arith.constant 0 : index
    %c32_77 = arith.constant 32 : index
    %195 = vector.load %arg3[%c0_76, %c32_77] : memref<1x128xf32, #tpu.memory_space<vmem>>, vector<1x16xf32>
    %196 = arith.truncf %193 : vector<32x16xf32> to vector<32x16xbf16>
    %cst_78 = arith.constant -1.56079638 : f32
    %cst_79 = arith.constant 1.56079638 : f32
    %197 = vector.broadcast %cst_78 : f32 to vector<32x16xf32>
    %198 = arith.maximumf %197, %193 : vector<32x16xf32>
    %199 = vector.broadcast %cst_79 : f32 to vector<32x16xf32>
    %200 = arith.minimumf %199, %198 : vector<32x16xf32>
    %201 = arith.mulf %200, %200 : vector<32x16xf32>
    %cst_80 = arith.constant -2.50521079E-8 : f32
    %202 = vector.broadcast %cst_80 : f32 to vector<32x16xf32>
    %203 = arith.mulf %201, %202 : vector<32x16xf32>
    %cst_81 = arith.constant 2.75573188E-6 : f32
    %204 = vector.broadcast %cst_81 : f32 to vector<32x16xf32>
    %205 = arith.addf %204, %203 : vector<32x16xf32>
    %206 = arith.mulf %201, %205 : vector<32x16xf32>
    %cst_82 = arith.constant -1.98412701E-4 : f32
    %207 = vector.broadcast %cst_82 : f32 to vector<32x16xf32>
    %208 = arith.addf %207, %206 : vector<32x16xf32>
    %209 = arith.mulf %201, %208 : vector<32x16xf32>
    %cst_83 = arith.constant 0.00833333377 : f32
    %210 = vector.broadcast %cst_83 : f32 to vector<32x16xf32>
    %211 = arith.addf %210, %209 : vector<32x16xf32>
    %212 = arith.mulf %201, %211 : vector<32x16xf32>
    %cst_84 = arith.constant -0.166666672 : f32
    %213 = vector.broadcast %cst_84 : f32 to vector<32x16xf32>
    %214 = arith.addf %213, %212 : vector<32x16xf32>
    %215 = arith.mulf %201, %214 : vector<32x16xf32>
    %cst_85 = arith.constant 1.000000e+00 : f32
    %216 = vector.broadcast %cst_85 : f32 to vector<32x16xf32>
    %217 = arith.addf %216, %215 : vector<32x16xf32>
    %218 = arith.mulf %200, %217 : vector<32x16xf32>
    %cst_86 = arith.constant 2.08767559E-9 : f32
    %219 = vector.broadcast %cst_86 : f32 to vector<32x16xf32>
    %220 = arith.mulf %201, %219 : vector<32x16xf32>
    %cst_87 = arith.constant -2.755732E-7 : f32
    %221 = vector.broadcast %cst_87 : f32 to vector<32x16xf32>
    %222 = arith.addf %221, %220 : vector<32x16xf32>
    %223 = arith.mulf %201, %222 : vector<32x16xf32>
    %cst_88 = arith.constant 2.48015876E-5 : f32
    %224 = vector.broadcast %cst_88 : f32 to vector<32x16xf32>
    %225 = arith.addf %224, %223 : vector<32x16xf32>
    %226 = arith.mulf %201, %225 : vector<32x16xf32>
    %cst_89 = arith.constant -0.00138888892 : f32
    %227 = vector.broadcast %cst_89 : f32 to vector<32x16xf32>
    %228 = arith.addf %227, %226 : vector<32x16xf32>
    %229 = arith.mulf %201, %228 : vector<32x16xf32>
    %cst_90 = arith.constant 0.0416666679 : f32
    %230 = vector.broadcast %cst_90 : f32 to vector<32x16xf32>
    %231 = arith.addf %230, %229 : vector<32x16xf32>
    %232 = arith.mulf %201, %231 : vector<32x16xf32>
    %cst_91 = arith.constant -5.000000e-01 : f32
    %233 = vector.broadcast %cst_91 : f32 to vector<32x16xf32>
    %234 = arith.addf %233, %232 : vector<32x16xf32>
    %235 = arith.mulf %201, %234 : vector<32x16xf32>
    %cst_92 = arith.constant 1.000000e+00 : f32
    %236 = vector.broadcast %cst_92 : f32 to vector<32x16xf32>
    %237 = arith.addf %236, %235 : vector<32x16xf32>
    %238 = tpu.reciprocal %237 {approx = true} : vector<32x16xf32> -> vector<32x16xf32>
    %239 = arith.mulf %218, %238 : vector<32x16xf32>
    %cst_93 = arith.constant dense<0.000000e+00> : vector<32x16xf32>
    %240 = tpu.matmul %196, %194, %cst_93 {dimension_numbers = #tpu.dot_dimension_numbers<[1], [0], [0], [1], [0, 0, 1, 1], [], []>} : vector<32x16xbf16>, vector<16x16xbf16>, vector<32x16xf32> -> vector<32x16xf32>
    %241 = arith.truncf %240 : vector<32x16xf32> to vector<32x16xbf16>
    %cst_94 = arith.constant dense<0.000000e+00> : vector<32x16xf32>
    %242 = tpu.matmul %0, %241, %cst_94 {dimension_numbers = #tpu.dot_dimension_numbers<[1], [0], [0], [1], [0, 0, 1, 1], [], []>} : vector<32x32xbf16>, vector<32x16xbf16>, vector<32x16xf32> -> vector<32x16xf32>
    %243 = vector.broadcast %195 : vector<1x16xf32> to vector<32x16xf32>
    %244 = arith.addf %242, %243 : vector<32x16xf32>
    %245 = arith.addf %239, %244 : vector<32x16xf32>
    %246 = math.absf %245 : vector<32x16xf32>
    %cst_95 = arith.constant 2.41421366 : f32
    %247 = vector.broadcast %cst_95 : f32 to vector<32x16xf32>
    %248 = arith.cmpf ogt, %246, %247 : vector<32x16xf32>
    %cst_96 = arith.constant 0.414213568 : f32
    %249 = vector.broadcast %cst_96 : f32 to vector<32x16xf32>
    %250 = arith.cmpf ogt, %246, %249 : vector<32x16xf32>
    %cst_97 = arith.constant 1.000000e+00 : f32
    %251 = vector.broadcast %cst_97 : f32 to vector<32x16xf32>
    %252 = arith.maximumf %246, %251 : vector<32x16xf32>
    %253 = tpu.reciprocal %252 {approx = true} : vector<32x16xf32> -> vector<32x16xf32>
    %cst_98 = arith.constant 0.000000e+00 : f32
    %254 = vector.broadcast %cst_98 : f32 to vector<32x16xf32>
    %255 = arith.subf %254, %253 : vector<32x16xf32>
    %cst_99 = arith.constant 1.000000e+00 : f32
    %256 = vector.broadcast %cst_99 : f32 to vector<32x16xf32>
    %257 = arith.subf %246, %256 : vector<32x16xf32>
    %cst_100 = arith.constant 1.000000e+00 : f32
    %258 = vector.broadcast %cst_100 : f32 to vector<32x16xf32>
    %259 = arith.addf %246, %258 : vector<32x16xf32>
    %260 = tpu.reciprocal %259 {approx = true} : vector<32x16xf32> -> vector<32x16xf32>
    %261 = arith.mulf %257, %260 : vector<32x16xf32>
    %262 = arith.select %250, %261, %246 : vector<32x16xi1>, vector<32x16xf32>
    %263 = arith.select %248, %255, %262 : vector<32x16xi1>, vector<32x16xf32>
    %cst_101 = arith.constant 0.785398185 : f32
    %cst_102 = arith.constant 0.000000e+00 : f32
    %264 = vector.broadcast %cst_101 : f32 to vector<32x16xf32>
    %265 = vector.broadcast %cst_102 : f32 to vector<32x16xf32>
    %266 = arith.select %250, %264, %265 : vector<32x16xi1>, vector<32x16xf32>
    %cst_103 = arith.constant 1.57079637 : f32
    %267 = vector.broadcast %cst_103 : f32 to vector<32x16xf32>
    %268 = arith.select %248, %267, %266 : vector<32x16xi1>, vector<32x16xf32>
    %269 = arith.mulf %263, %263 : vector<32x16xf32>
    %cst_104 = arith.constant 0.0805374458 : f32
    %270 = vector.broadcast %cst_104 : f32 to vector<32x16xf32>
    %271 = arith.mulf %270, %269 : vector<32x16xf32>
    %cst_105 = arith.constant 0.138776854 : f32
    %272 = vector.broadcast %cst_105 : f32 to vector<32x16xf32>
    %273 = arith.subf %271, %272 : vector<32x16xf32>
    %274 = arith.mulf %273, %269 : vector<32x16xf32>
    %cst_106 = arith.constant 0.199777111 : f32
    %275 = vector.broadcast %cst_106 : f32 to vector<32x16xf32>
    %276 = arith.addf %274, %275 : vector<32x16xf32>
    %277 = arith.mulf %276, %269 : vector<32x16xf32>
    %cst_107 = arith.constant 0.333329499 : f32
    %278 = vector.broadcast %cst_107 : f32 to vector<32x16xf32>
    %279 = arith.subf %277, %278 : vector<32x16xf32>
    %280 = arith.addf %268, %263 : vector<32x16xf32>
    %281 = arith.mulf %263, %269 : vector<32x16xf32>
    %282 = arith.mulf %281, %279 : vector<32x16xf32>
    %283 = arith.addf %280, %282 : vector<32x16xf32>
    %cst_108 = arith.constant 0.000000e+00 : f32
    %284 = vector.broadcast %cst_108 : f32 to vector<32x16xf32>
    %285 = arith.cmpf olt, %245, %284 : vector<32x16xf32>
    %cst_109 = arith.constant 0.000000e+00 : f32
    %286 = vector.broadcast %cst_109 : f32 to vector<32x16xf32>
    %287 = arith.subf %286, %283 : vector<32x16xf32>
    %288 = arith.select %285, %287, %283 : vector<32x16xi1>, vector<32x16xf32>
    %c0_110 = arith.constant 0 : index
    %c64 = arith.constant 64 : index
    %289 = vector.load %arg2[%c0_110, %c64] : memref<16x128xbf16, #tpu.memory_space<vmem>>, vector<16x16xbf16>
    %c0_111 = arith.constant 0 : index
    %c48_112 = arith.constant 48 : index
    %290 = vector.load %arg3[%c0_111, %c48_112] : memref<1x128xf32, #tpu.memory_space<vmem>>, vector<1x16xf32>
    %291 = arith.truncf %288 : vector<32x16xf32> to vector<32x16xbf16>
    %cst_113 = arith.constant -1.56079638 : f32
    %cst_114 = arith.constant 1.56079638 : f32
    %292 = vector.broadcast %cst_113 : f32 to vector<32x16xf32>
    %293 = arith.maximumf %292, %288 : vector<32x16xf32>
    %294 = vector.broadcast %cst_114 : f32 to vector<32x16xf32>
    %295 = arith.minimumf %294, %293 : vector<32x16xf32>
    %296 = arith.mulf %295, %295 : vector<32x16xf32>
    %cst_115 = arith.constant -2.50521079E-8 : f32
    %297 = vector.broadcast %cst_115 : f32 to vector<32x16xf32>
    %298 = arith.mulf %296, %297 : vector<32x16xf32>
    %cst_116 = arith.constant 2.75573188E-6 : f32
    %299 = vector.broadcast %cst_116 : f32 to vector<32x16xf32>
    %300 = arith.addf %299, %298 : vector<32x16xf32>
    %301 = arith.mulf %296, %300 : vector<32x16xf32>
    %cst_117 = arith.constant -1.98412701E-4 : f32
    %302 = vector.broadcast %cst_117 : f32 to vector<32x16xf32>
    %303 = arith.addf %302, %301 : vector<32x16xf32>
    %304 = arith.mulf %296, %303 : vector<32x16xf32>
    %cst_118 = arith.constant 0.00833333377 : f32
    %305 = vector.broadcast %cst_118 : f32 to vector<32x16xf32>
    %306 = arith.addf %305, %304 : vector<32x16xf32>
    %307 = arith.mulf %296, %306 : vector<32x16xf32>
    %cst_119 = arith.constant -0.166666672 : f32
    %308 = vector.broadcast %cst_119 : f32 to vector<32x16xf32>
    %309 = arith.addf %308, %307 : vector<32x16xf32>
    %310 = arith.mulf %296, %309 : vector<32x16xf32>
    %cst_120 = arith.constant 1.000000e+00 : f32
    %311 = vector.broadcast %cst_120 : f32 to vector<32x16xf32>
    %312 = arith.addf %311, %310 : vector<32x16xf32>
    %313 = arith.mulf %295, %312 : vector<32x16xf32>
    %cst_121 = arith.constant 2.08767559E-9 : f32
    %314 = vector.broadcast %cst_121 : f32 to vector<32x16xf32>
    %315 = arith.mulf %296, %314 : vector<32x16xf32>
    %cst_122 = arith.constant -2.755732E-7 : f32
    %316 = vector.broadcast %cst_122 : f32 to vector<32x16xf32>
    %317 = arith.addf %316, %315 : vector<32x16xf32>
    %318 = arith.mulf %296, %317 : vector<32x16xf32>
    %cst_123 = arith.constant 2.48015876E-5 : f32
    %319 = vector.broadcast %cst_123 : f32 to vector<32x16xf32>
    %320 = arith.addf %319, %318 : vector<32x16xf32>
    %321 = arith.mulf %296, %320 : vector<32x16xf32>
    %cst_124 = arith.constant -0.00138888892 : f32
    %322 = vector.broadcast %cst_124 : f32 to vector<32x16xf32>
    %323 = arith.addf %322, %321 : vector<32x16xf32>
    %324 = arith.mulf %296, %323 : vector<32x16xf32>
    %cst_125 = arith.constant 0.0416666679 : f32
    %325 = vector.broadcast %cst_125 : f32 to vector<32x16xf32>
    %326 = arith.addf %325, %324 : vector<32x16xf32>
    %327 = arith.mulf %296, %326 : vector<32x16xf32>
    %cst_126 = arith.constant -5.000000e-01 : f32
    %328 = vector.broadcast %cst_126 : f32 to vector<32x16xf32>
    %329 = arith.addf %328, %327 : vector<32x16xf32>
    %330 = arith.mulf %296, %329 : vector<32x16xf32>
    %cst_127 = arith.constant 1.000000e+00 : f32
    %331 = vector.broadcast %cst_127 : f32 to vector<32x16xf32>
    %332 = arith.addf %331, %330 : vector<32x16xf32>
    %333 = tpu.reciprocal %332 {approx = true} : vector<32x16xf32> -> vector<32x16xf32>
    %334 = arith.mulf %313, %333 : vector<32x16xf32>
    %cst_128 = arith.constant dense<0.000000e+00> : vector<32x16xf32>
    %335 = tpu.matmul %291, %289, %cst_128 {dimension_numbers = #tpu.dot_dimension_numbers<[1], [0], [0], [1], [0, 0, 1, 1], [], []>} : vector<32x16xbf16>, vector<16x16xbf16>, vector<32x16xf32> -> vector<32x16xf32>
    %336 = arith.truncf %335 : vector<32x16xf32> to vector<32x16xbf16>
    %cst_129 = arith.constant dense<0.000000e+00> : vector<32x16xf32>
    %337 = tpu.matmul %0, %336, %cst_129 {dimension_numbers = #tpu.dot_dimension_numbers<[1], [0], [0], [1], [0, 0, 1, 1], [], []>} : vector<32x32xbf16>, vector<32x16xbf16>, vector<32x16xf32> -> vector<32x16xf32>
    %338 = vector.broadcast %290 : vector<1x16xf32> to vector<32x16xf32>
    %339 = arith.addf %337, %338 : vector<32x16xf32>
    %340 = arith.addf %334, %339 : vector<32x16xf32>
    %341 = math.absf %340 : vector<32x16xf32>
    %cst_130 = arith.constant 2.41421366 : f32
    %342 = vector.broadcast %cst_130 : f32 to vector<32x16xf32>
    %343 = arith.cmpf ogt, %341, %342 : vector<32x16xf32>
    %cst_131 = arith.constant 0.414213568 : f32
    %344 = vector.broadcast %cst_131 : f32 to vector<32x16xf32>
    %345 = arith.cmpf ogt, %341, %344 : vector<32x16xf32>
    %cst_132 = arith.constant 1.000000e+00 : f32
    %346 = vector.broadcast %cst_132 : f32 to vector<32x16xf32>
    %347 = arith.maximumf %341, %346 : vector<32x16xf32>
    %348 = tpu.reciprocal %347 {approx = true} : vector<32x16xf32> -> vector<32x16xf32>
    %cst_133 = arith.constant 0.000000e+00 : f32
    %349 = vector.broadcast %cst_133 : f32 to vector<32x16xf32>
    %350 = arith.subf %349, %348 : vector<32x16xf32>
    %cst_134 = arith.constant 1.000000e+00 : f32
    %351 = vector.broadcast %cst_134 : f32 to vector<32x16xf32>
    %352 = arith.subf %341, %351 : vector<32x16xf32>
    %cst_135 = arith.constant 1.000000e+00 : f32
    %353 = vector.broadcast %cst_135 : f32 to vector<32x16xf32>
    %354 = arith.addf %341, %353 : vector<32x16xf32>
    %355 = tpu.reciprocal %354 {approx = true} : vector<32x16xf32> -> vector<32x16xf32>
    %356 = arith.mulf %352, %355 : vector<32x16xf32>
    %357 = arith.select %345, %356, %341 : vector<32x16xi1>, vector<32x16xf32>
    %358 = arith.select %343, %350, %357 : vector<32x16xi1>, vector<32x16xf32>
    %cst_136 = arith.constant 0.785398185 : f32
    %cst_137 = arith.constant 0.000000e+00 : f32
    %359 = vector.broadcast %cst_136 : f32 to vector<32x16xf32>
    %360 = vector.broadcast %cst_137 : f32 to vector<32x16xf32>
    %361 = arith.select %345, %359, %360 : vector<32x16xi1>, vector<32x16xf32>
    %cst_138 = arith.constant 1.57079637 : f32
    %362 = vector.broadcast %cst_138 : f32 to vector<32x16xf32>
    %363 = arith.select %343, %362, %361 : vector<32x16xi1>, vector<32x16xf32>
    %364 = arith.mulf %358, %358 : vector<32x16xf32>
    %cst_139 = arith.constant 0.0805374458 : f32
    %365 = vector.broadcast %cst_139 : f32 to vector<32x16xf32>
    %366 = arith.mulf %365, %364 : vector<32x16xf32>
    %cst_140 = arith.constant 0.138776854 : f32
    %367 = vector.broadcast %cst_140 : f32 to vector<32x16xf32>
    %368 = arith.subf %366, %367 : vector<32x16xf32>
    %369 = arith.mulf %368, %364 : vector<32x16xf32>
    %cst_141 = arith.constant 0.199777111 : f32
    %370 = vector.broadcast %cst_141 : f32 to vector<32x16xf32>
    %371 = arith.addf %369, %370 : vector<32x16xf32>
    %372 = arith.mulf %371, %364 : vector<32x16xf32>
    %cst_142 = arith.constant 0.333329499 : f32
    %373 = vector.broadcast %cst_142 : f32 to vector<32x16xf32>
    %374 = arith.subf %372, %373 : vector<32x16xf32>
    %375 = arith.addf %363, %358 : vector<32x16xf32>
    %376 = arith.mulf %358, %364 : vector<32x16xf32>
    %377 = arith.mulf %376, %374 : vector<32x16xf32>
    %378 = arith.addf %375, %377 : vector<32x16xf32>
    %cst_143 = arith.constant 0.000000e+00 : f32
    %379 = vector.broadcast %cst_143 : f32 to vector<32x16xf32>
    %380 = arith.cmpf olt, %340, %379 : vector<32x16xf32>
    %cst_144 = arith.constant 0.000000e+00 : f32
    %381 = vector.broadcast %cst_144 : f32 to vector<32x16xf32>
    %382 = arith.subf %381, %378 : vector<32x16xf32>
    %383 = arith.select %380, %382, %378 : vector<32x16xi1>, vector<32x16xf32>
    %c0_145 = arith.constant 0 : index
    %c80 = arith.constant 80 : index
    %384 = vector.load %arg2[%c0_145, %c80] : memref<16x128xbf16, #tpu.memory_space<vmem>>, vector<16x16xbf16>
    %c0_146 = arith.constant 0 : index
    %c64_147 = arith.constant 64 : index
    %385 = vector.load %arg3[%c0_146, %c64_147] : memref<1x128xf32, #tpu.memory_space<vmem>>, vector<1x16xf32>
    %386 = arith.truncf %383 : vector<32x16xf32> to vector<32x16xbf16>
    %cst_148 = arith.constant -1.56079638 : f32
    %cst_149 = arith.constant 1.56079638 : f32
    %387 = vector.broadcast %cst_148 : f32 to vector<32x16xf32>
    %388 = arith.maximumf %387, %383 : vector<32x16xf32>
    %389 = vector.broadcast %cst_149 : f32 to vector<32x16xf32>
    %390 = arith.minimumf %389, %388 : vector<32x16xf32>
    %391 = arith.mulf %390, %390 : vector<32x16xf32>
    %cst_150 = arith.constant -2.50521079E-8 : f32
    %392 = vector.broadcast %cst_150 : f32 to vector<32x16xf32>
    %393 = arith.mulf %391, %392 : vector<32x16xf32>
    %cst_151 = arith.constant 2.75573188E-6 : f32
    %394 = vector.broadcast %cst_151 : f32 to vector<32x16xf32>
    %395 = arith.addf %394, %393 : vector<32x16xf32>
    %396 = arith.mulf %391, %395 : vector<32x16xf32>
    %cst_152 = arith.constant -1.98412701E-4 : f32
    %397 = vector.broadcast %cst_152 : f32 to vector<32x16xf32>
    %398 = arith.addf %397, %396 : vector<32x16xf32>
    %399 = arith.mulf %391, %398 : vector<32x16xf32>
    %cst_153 = arith.constant 0.00833333377 : f32
    %400 = vector.broadcast %cst_153 : f32 to vector<32x16xf32>
    %401 = arith.addf %400, %399 : vector<32x16xf32>
    %402 = arith.mulf %391, %401 : vector<32x16xf32>
    %cst_154 = arith.constant -0.166666672 : f32
    %403 = vector.broadcast %cst_154 : f32 to vector<32x16xf32>
    %404 = arith.addf %403, %402 : vector<32x16xf32>
    %405 = arith.mulf %391, %404 : vector<32x16xf32>
    %cst_155 = arith.constant 1.000000e+00 : f32
    %406 = vector.broadcast %cst_155 : f32 to vector<32x16xf32>
    %407 = arith.addf %406, %405 : vector<32x16xf32>
    %408 = arith.mulf %390, %407 : vector<32x16xf32>
    %cst_156 = arith.constant 2.08767559E-9 : f32
    %409 = vector.broadcast %cst_156 : f32 to vector<32x16xf32>
    %410 = arith.mulf %391, %409 : vector<32x16xf32>
    %cst_157 = arith.constant -2.755732E-7 : f32
    %411 = vector.broadcast %cst_157 : f32 to vector<32x16xf32>
    %412 = arith.addf %411, %410 : vector<32x16xf32>
    %413 = arith.mulf %391, %412 : vector<32x16xf32>
    %cst_158 = arith.constant 2.48015876E-5 : f32
    %414 = vector.broadcast %cst_158 : f32 to vector<32x16xf32>
    %415 = arith.addf %414, %413 : vector<32x16xf32>
    %416 = arith.mulf %391, %415 : vector<32x16xf32>
    %cst_159 = arith.constant -0.00138888892 : f32
    %417 = vector.broadcast %cst_159 : f32 to vector<32x16xf32>
    %418 = arith.addf %417, %416 : vector<32x16xf32>
    %419 = arith.mulf %391, %418 : vector<32x16xf32>
    %cst_160 = arith.constant 0.0416666679 : f32
    %420 = vector.broadcast %cst_160 : f32 to vector<32x16xf32>
    %421 = arith.addf %420, %419 : vector<32x16xf32>
    %422 = arith.mulf %391, %421 : vector<32x16xf32>
    %cst_161 = arith.constant -5.000000e-01 : f32
    %423 = vector.broadcast %cst_161 : f32 to vector<32x16xf32>
    %424 = arith.addf %423, %422 : vector<32x16xf32>
    %425 = arith.mulf %391, %424 : vector<32x16xf32>
    %cst_162 = arith.constant 1.000000e+00 : f32
    %426 = vector.broadcast %cst_162 : f32 to vector<32x16xf32>
    %427 = arith.addf %426, %425 : vector<32x16xf32>
    %428 = tpu.reciprocal %427 {approx = true} : vector<32x16xf32> -> vector<32x16xf32>
    %429 = arith.mulf %408, %428 : vector<32x16xf32>
    %cst_163 = arith.constant dense<0.000000e+00> : vector<32x16xf32>
    %430 = tpu.matmul %386, %384, %cst_163 {dimension_numbers = #tpu.dot_dimension_numbers<[1], [0], [0], [1], [0, 0, 1, 1], [], []>} : vector<32x16xbf16>, vector<16x16xbf16>, vector<32x16xf32> -> vector<32x16xf32>
    %431 = arith.truncf %430 : vector<32x16xf32> to vector<32x16xbf16>
    %cst_164 = arith.constant dense<0.000000e+00> : vector<32x16xf32>
    %432 = tpu.matmul %0, %431, %cst_164 {dimension_numbers = #tpu.dot_dimension_numbers<[1], [0], [0], [1], [0, 0, 1, 1], [], []>} : vector<32x32xbf16>, vector<32x16xbf16>, vector<32x16xf32> -> vector<32x16xf32>
    %433 = vector.broadcast %385 : vector<1x16xf32> to vector<32x16xf32>
    %434 = arith.addf %432, %433 : vector<32x16xf32>
    %435 = arith.addf %429, %434 : vector<32x16xf32>
    %436 = math.absf %435 : vector<32x16xf32>
    %cst_165 = arith.constant 2.41421366 : f32
    %437 = vector.broadcast %cst_165 : f32 to vector<32x16xf32>
    %438 = arith.cmpf ogt, %436, %437 : vector<32x16xf32>
    %cst_166 = arith.constant 0.414213568 : f32
    %439 = vector.broadcast %cst_166 : f32 to vector<32x16xf32>
    %440 = arith.cmpf ogt, %436, %439 : vector<32x16xf32>
    %cst_167 = arith.constant 1.000000e+00 : f32
    %441 = vector.broadcast %cst_167 : f32 to vector<32x16xf32>
    %442 = arith.maximumf %436, %441 : vector<32x16xf32>
    %443 = tpu.reciprocal %442 {approx = true} : vector<32x16xf32> -> vector<32x16xf32>
    %cst_168 = arith.constant 0.000000e+00 : f32
    %444 = vector.broadcast %cst_168 : f32 to vector<32x16xf32>
    %445 = arith.subf %444, %443 : vector<32x16xf32>
    %cst_169 = arith.constant 1.000000e+00 : f32
    %446 = vector.broadcast %cst_169 : f32 to vector<32x16xf32>
    %447 = arith.subf %436, %446 : vector<32x16xf32>
    %cst_170 = arith.constant 1.000000e+00 : f32
    %448 = vector.broadcast %cst_170 : f32 to vector<32x16xf32>
    %449 = arith.addf %436, %448 : vector<32x16xf32>
    %450 = tpu.reciprocal %449 {approx = true} : vector<32x16xf32> -> vector<32x16xf32>
    %451 = arith.mulf %447, %450 : vector<32x16xf32>
    %452 = arith.select %440, %451, %436 : vector<32x16xi1>, vector<32x16xf32>
    %453 = arith.select %438, %445, %452 : vector<32x16xi1>, vector<32x16xf32>
    %cst_171 = arith.constant 0.785398185 : f32
    %cst_172 = arith.constant 0.000000e+00 : f32
    %454 = vector.broadcast %cst_171 : f32 to vector<32x16xf32>
    %455 = vector.broadcast %cst_172 : f32 to vector<32x16xf32>
    %456 = arith.select %440, %454, %455 : vector<32x16xi1>, vector<32x16xf32>
    %cst_173 = arith.constant 1.57079637 : f32
    %457 = vector.broadcast %cst_173 : f32 to vector<32x16xf32>
    %458 = arith.select %438, %457, %456 : vector<32x16xi1>, vector<32x16xf32>
    %459 = arith.mulf %453, %453 : vector<32x16xf32>
    %cst_174 = arith.constant 0.0805374458 : f32
    %460 = vector.broadcast %cst_174 : f32 to vector<32x16xf32>
    %461 = arith.mulf %460, %459 : vector<32x16xf32>
    %cst_175 = arith.constant 0.138776854 : f32
    %462 = vector.broadcast %cst_175 : f32 to vector<32x16xf32>
    %463 = arith.subf %461, %462 : vector<32x16xf32>
    %464 = arith.mulf %463, %459 : vector<32x16xf32>
    %cst_176 = arith.constant 0.199777111 : f32
    %465 = vector.broadcast %cst_176 : f32 to vector<32x16xf32>
    %466 = arith.addf %464, %465 : vector<32x16xf32>
    %467 = arith.mulf %466, %459 : vector<32x16xf32>
    %cst_177 = arith.constant 0.333329499 : f32
    %468 = vector.broadcast %cst_177 : f32 to vector<32x16xf32>
    %469 = arith.subf %467, %468 : vector<32x16xf32>
    %470 = arith.addf %458, %453 : vector<32x16xf32>
    %471 = arith.mulf %453, %459 : vector<32x16xf32>
    %472 = arith.mulf %471, %469 : vector<32x16xf32>
    %473 = arith.addf %470, %472 : vector<32x16xf32>
    %cst_178 = arith.constant 0.000000e+00 : f32
    %474 = vector.broadcast %cst_178 : f32 to vector<32x16xf32>
    %475 = arith.cmpf olt, %435, %474 : vector<32x16xf32>
    %cst_179 = arith.constant 0.000000e+00 : f32
    %476 = vector.broadcast %cst_179 : f32 to vector<32x16xf32>
    %477 = arith.subf %476, %473 : vector<32x16xf32>
    %478 = arith.select %475, %477, %473 : vector<32x16xi1>, vector<32x16xf32>
    %c0_180 = arith.constant 0 : index
    %c96 = arith.constant 96 : index
    %479 = vector.load %arg2[%c0_180, %c96] : memref<16x128xbf16, #tpu.memory_space<vmem>>, vector<16x16xbf16>
    %c0_181 = arith.constant 0 : index
    %c80_182 = arith.constant 80 : index
    %480 = vector.load %arg3[%c0_181, %c80_182] : memref<1x128xf32, #tpu.memory_space<vmem>>, vector<1x16xf32>
    %481 = arith.truncf %478 : vector<32x16xf32> to vector<32x16xbf16>
    %cst_183 = arith.constant -1.56079638 : f32
    %cst_184 = arith.constant 1.56079638 : f32
    %482 = vector.broadcast %cst_183 : f32 to vector<32x16xf32>
    %483 = arith.maximumf %482, %478 : vector<32x16xf32>
    %484 = vector.broadcast %cst_184 : f32 to vector<32x16xf32>
    %485 = arith.minimumf %484, %483 : vector<32x16xf32>
    %486 = arith.mulf %485, %485 : vector<32x16xf32>
    %cst_185 = arith.constant -2.50521079E-8 : f32
    %487 = vector.broadcast %cst_185 : f32 to vector<32x16xf32>
    %488 = arith.mulf %486, %487 : vector<32x16xf32>
    %cst_186 = arith.constant 2.75573188E-6 : f32
    %489 = vector.broadcast %cst_186 : f32 to vector<32x16xf32>
    %490 = arith.addf %489, %488 : vector<32x16xf32>
    %491 = arith.mulf %486, %490 : vector<32x16xf32>
    %cst_187 = arith.constant -1.98412701E-4 : f32
    %492 = vector.broadcast %cst_187 : f32 to vector<32x16xf32>
    %493 = arith.addf %492, %491 : vector<32x16xf32>
    %494 = arith.mulf %486, %493 : vector<32x16xf32>
    %cst_188 = arith.constant 0.00833333377 : f32
    %495 = vector.broadcast %cst_188 : f32 to vector<32x16xf32>
    %496 = arith.addf %495, %494 : vector<32x16xf32>
    %497 = arith.mulf %486, %496 : vector<32x16xf32>
    %cst_189 = arith.constant -0.166666672 : f32
    %498 = vector.broadcast %cst_189 : f32 to vector<32x16xf32>
    %499 = arith.addf %498, %497 : vector<32x16xf32>
    %500 = arith.mulf %486, %499 : vector<32x16xf32>
    %cst_190 = arith.constant 1.000000e+00 : f32
    %501 = vector.broadcast %cst_190 : f32 to vector<32x16xf32>
    %502 = arith.addf %501, %500 : vector<32x16xf32>
    %503 = arith.mulf %485, %502 : vector<32x16xf32>
    %cst_191 = arith.constant 2.08767559E-9 : f32
    %504 = vector.broadcast %cst_191 : f32 to vector<32x16xf32>
    %505 = arith.mulf %486, %504 : vector<32x16xf32>
    %cst_192 = arith.constant -2.755732E-7 : f32
    %506 = vector.broadcast %cst_192 : f32 to vector<32x16xf32>
    %507 = arith.addf %506, %505 : vector<32x16xf32>
    %508 = arith.mulf %486, %507 : vector<32x16xf32>
    %cst_193 = arith.constant 2.48015876E-5 : f32
    %509 = vector.broadcast %cst_193 : f32 to vector<32x16xf32>
    %510 = arith.addf %509, %508 : vector<32x16xf32>
    %511 = arith.mulf %486, %510 : vector<32x16xf32>
    %cst_194 = arith.constant -0.00138888892 : f32
    %512 = vector.broadcast %cst_194 : f32 to vector<32x16xf32>
    %513 = arith.addf %512, %511 : vector<32x16xf32>
    %514 = arith.mulf %486, %513 : vector<32x16xf32>
    %cst_195 = arith.constant 0.0416666679 : f32
    %515 = vector.broadcast %cst_195 : f32 to vector<32x16xf32>
    %516 = arith.addf %515, %514 : vector<32x16xf32>
    %517 = arith.mulf %486, %516 : vector<32x16xf32>
    %cst_196 = arith.constant -5.000000e-01 : f32
    %518 = vector.broadcast %cst_196 : f32 to vector<32x16xf32>
    %519 = arith.addf %518, %517 : vector<32x16xf32>
    %520 = arith.mulf %486, %519 : vector<32x16xf32>
    %cst_197 = arith.constant 1.000000e+00 : f32
    %521 = vector.broadcast %cst_197 : f32 to vector<32x16xf32>
    %522 = arith.addf %521, %520 : vector<32x16xf32>
    %523 = tpu.reciprocal %522 {approx = true} : vector<32x16xf32> -> vector<32x16xf32>
    %524 = arith.mulf %503, %523 : vector<32x16xf32>
    %cst_198 = arith.constant dense<0.000000e+00> : vector<32x16xf32>
    %525 = tpu.matmul %481, %479, %cst_198 {dimension_numbers = #tpu.dot_dimension_numbers<[1], [0], [0], [1], [0, 0, 1, 1], [], []>} : vector<32x16xbf16>, vector<16x16xbf16>, vector<32x16xf32> -> vector<32x16xf32>
    %526 = arith.truncf %525 : vector<32x16xf32> to vector<32x16xbf16>
    %cst_199 = arith.constant dense<0.000000e+00> : vector<32x16xf32>
    %527 = tpu.matmul %0, %526, %cst_199 {dimension_numbers = #tpu.dot_dimension_numbers<[1], [0], [0], [1], [0, 0, 1, 1], [], []>} : vector<32x32xbf16>, vector<32x16xbf16>, vector<32x16xf32> -> vector<32x16xf32>
    %528 = vector.broadcast %480 : vector<1x16xf32> to vector<32x16xf32>
    %529 = arith.addf %527, %528 : vector<32x16xf32>
    %530 = arith.addf %524, %529 : vector<32x16xf32>
    %531 = math.absf %530 : vector<32x16xf32>
    %cst_200 = arith.constant 2.41421366 : f32
    %532 = vector.broadcast %cst_200 : f32 to vector<32x16xf32>
    %533 = arith.cmpf ogt, %531, %532 : vector<32x16xf32>
    %cst_201 = arith.constant 0.414213568 : f32
    %534 = vector.broadcast %cst_201 : f32 to vector<32x16xf32>
    %535 = arith.cmpf ogt, %531, %534 : vector<32x16xf32>
    %cst_202 = arith.constant 1.000000e+00 : f32
    %536 = vector.broadcast %cst_202 : f32 to vector<32x16xf32>
    %537 = arith.maximumf %531, %536 : vector<32x16xf32>
    %538 = tpu.reciprocal %537 {approx = true} : vector<32x16xf32> -> vector<32x16xf32>
    %cst_203 = arith.constant 0.000000e+00 : f32
    %539 = vector.broadcast %cst_203 : f32 to vector<32x16xf32>
    %540 = arith.subf %539, %538 : vector<32x16xf32>
    %cst_204 = arith.constant 1.000000e+00 : f32
    %541 = vector.broadcast %cst_204 : f32 to vector<32x16xf32>
    %542 = arith.subf %531, %541 : vector<32x16xf32>
    %cst_205 = arith.constant 1.000000e+00 : f32
    %543 = vector.broadcast %cst_205 : f32 to vector<32x16xf32>
    %544 = arith.addf %531, %543 : vector<32x16xf32>
    %545 = tpu.reciprocal %544 {approx = true} : vector<32x16xf32> -> vector<32x16xf32>
    %546 = arith.mulf %542, %545 : vector<32x16xf32>
    %547 = arith.select %535, %546, %531 : vector<32x16xi1>, vector<32x16xf32>
    %548 = arith.select %533, %540, %547 : vector<32x16xi1>, vector<32x16xf32>
    %cst_206 = arith.constant 0.785398185 : f32
    %cst_207 = arith.constant 0.000000e+00 : f32
    %549 = vector.broadcast %cst_206 : f32 to vector<32x16xf32>
    %550 = vector.broadcast %cst_207 : f32 to vector<32x16xf32>
    %551 = arith.select %535, %549, %550 : vector<32x16xi1>, vector<32x16xf32>
    %cst_208 = arith.constant 1.57079637 : f32
    %552 = vector.broadcast %cst_208 : f32 to vector<32x16xf32>
    %553 = arith.select %533, %552, %551 : vector<32x16xi1>, vector<32x16xf32>
    %554 = arith.mulf %548, %548 : vector<32x16xf32>
    %cst_209 = arith.constant 0.0805374458 : f32
    %555 = vector.broadcast %cst_209 : f32 to vector<32x16xf32>
    %556 = arith.mulf %555, %554 : vector<32x16xf32>
    %cst_210 = arith.constant 0.138776854 : f32
    %557 = vector.broadcast %cst_210 : f32 to vector<32x16xf32>
    %558 = arith.subf %556, %557 : vector<32x16xf32>
    %559 = arith.mulf %558, %554 : vector<32x16xf32>
    %cst_211 = arith.constant 0.199777111 : f32
    %560 = vector.broadcast %cst_211 : f32 to vector<32x16xf32>
    %561 = arith.addf %559, %560 : vector<32x16xf32>
    %562 = arith.mulf %561, %554 : vector<32x16xf32>
    %cst_212 = arith.constant 0.333329499 : f32
    %563 = vector.broadcast %cst_212 : f32 to vector<32x16xf32>
    %564 = arith.subf %562, %563 : vector<32x16xf32>
    %565 = arith.addf %553, %548 : vector<32x16xf32>
    %566 = arith.mulf %548, %554 : vector<32x16xf32>
    %567 = arith.mulf %566, %564 : vector<32x16xf32>
    %568 = arith.addf %565, %567 : vector<32x16xf32>
    %cst_213 = arith.constant 0.000000e+00 : f32
    %569 = vector.broadcast %cst_213 : f32 to vector<32x16xf32>
    %570 = arith.cmpf olt, %530, %569 : vector<32x16xf32>
    %cst_214 = arith.constant 0.000000e+00 : f32
    %571 = vector.broadcast %cst_214 : f32 to vector<32x16xf32>
    %572 = arith.subf %571, %568 : vector<32x16xf32>
    %573 = arith.select %570, %572, %568 : vector<32x16xi1>, vector<32x16xf32>
    %c0_215 = arith.constant 0 : index
    %c120 = arith.constant 120 : index
    %574 = vector.load %arg2[%c0_215, %c120] : memref<16x128xbf16, #tpu.memory_space<vmem>>, vector<16x8xbf16>
    %c0_216 = arith.constant 0 : index
    %c112 = arith.constant 112 : index
    %575 = vector.load %arg2[%c0_216, %c112] : memref<16x128xbf16, #tpu.memory_space<vmem>>, vector<16x8xbf16>
    %c0_217 = arith.constant 0 : index
    %c96_218 = arith.constant 96 : index
    %576 = vector.load %arg3[%c0_217, %c96_218] : memref<1x128xf32, #tpu.memory_space<vmem>>, vector<1x8xf32>
    %577 = arith.truncf %573 : vector<32x16xf32> to vector<32x16xbf16>
    %cst_219 = arith.constant dense<0.000000e+00> : vector<32x8xf32>
    %578 = tpu.matmul %577, %574, %cst_219 {dimension_numbers = #tpu.dot_dimension_numbers<[1], [0], [0], [1], [0, 0, 1, 1], [], []>} : vector<32x16xbf16>, vector<16x8xbf16>, vector<32x8xf32> -> vector<32x8xf32>
    %cst_220 = arith.constant -1.56079638 : f32
    %cst_221 = arith.constant 1.56079638 : f32
    %579 = vector.broadcast %cst_220 : f32 to vector<32x8xf32>
    %580 = arith.maximumf %579, %578 : vector<32x8xf32>
    %581 = vector.broadcast %cst_221 : f32 to vector<32x8xf32>
    %582 = arith.minimumf %581, %580 : vector<32x8xf32>
    %583 = arith.mulf %582, %582 : vector<32x8xf32>
    %cst_222 = arith.constant -2.50521079E-8 : f32
    %584 = vector.broadcast %cst_222 : f32 to vector<32x8xf32>
    %585 = arith.mulf %583, %584 : vector<32x8xf32>
    %cst_223 = arith.constant 2.75573188E-6 : f32
    %586 = vector.broadcast %cst_223 : f32 to vector<32x8xf32>
    %587 = arith.addf %586, %585 : vector<32x8xf32>
    %588 = arith.mulf %583, %587 : vector<32x8xf32>
    %cst_224 = arith.constant -1.98412701E-4 : f32
    %589 = vector.broadcast %cst_224 : f32 to vector<32x8xf32>
    %590 = arith.addf %589, %588 : vector<32x8xf32>
    %591 = arith.mulf %583, %590 : vector<32x8xf32>
    %cst_225 = arith.constant 0.00833333377 : f32
    %592 = vector.broadcast %cst_225 : f32 to vector<32x8xf32>
    %593 = arith.addf %592, %591 : vector<32x8xf32>
    %594 = arith.mulf %583, %593 : vector<32x8xf32>
    %cst_226 = arith.constant -0.166666672 : f32
    %595 = vector.broadcast %cst_226 : f32 to vector<32x8xf32>
    %596 = arith.addf %595, %594 : vector<32x8xf32>
    %597 = arith.mulf %583, %596 : vector<32x8xf32>
    %cst_227 = arith.constant 1.000000e+00 : f32
    %598 = vector.broadcast %cst_227 : f32 to vector<32x8xf32>
    %599 = arith.addf %598, %597 : vector<32x8xf32>
    %600 = arith.mulf %582, %599 : vector<32x8xf32>
    %cst_228 = arith.constant 2.08767559E-9 : f32
    %601 = vector.broadcast %cst_228 : f32 to vector<32x8xf32>
    %602 = arith.mulf %583, %601 : vector<32x8xf32>
    %cst_229 = arith.constant -2.755732E-7 : f32
    %603 = vector.broadcast %cst_229 : f32 to vector<32x8xf32>
    %604 = arith.addf %603, %602 : vector<32x8xf32>
    %605 = arith.mulf %583, %604 : vector<32x8xf32>
    %cst_230 = arith.constant 2.48015876E-5 : f32
    %606 = vector.broadcast %cst_230 : f32 to vector<32x8xf32>
    %607 = arith.addf %606, %605 : vector<32x8xf32>
    %608 = arith.mulf %583, %607 : vector<32x8xf32>
    %cst_231 = arith.constant -0.00138888892 : f32
    %609 = vector.broadcast %cst_231 : f32 to vector<32x8xf32>
    %610 = arith.addf %609, %608 : vector<32x8xf32>
    %611 = arith.mulf %583, %610 : vector<32x8xf32>
    %cst_232 = arith.constant 0.0416666679 : f32
    %612 = vector.broadcast %cst_232 : f32 to vector<32x8xf32>
    %613 = arith.addf %612, %611 : vector<32x8xf32>
    %614 = arith.mulf %583, %613 : vector<32x8xf32>
    %cst_233 = arith.constant -5.000000e-01 : f32
    %615 = vector.broadcast %cst_233 : f32 to vector<32x8xf32>
    %616 = arith.addf %615, %614 : vector<32x8xf32>
    %617 = arith.mulf %583, %616 : vector<32x8xf32>
    %cst_234 = arith.constant 1.000000e+00 : f32
    %618 = vector.broadcast %cst_234 : f32 to vector<32x8xf32>
    %619 = arith.addf %618, %617 : vector<32x8xf32>
    %620 = tpu.reciprocal %619 {approx = true} : vector<32x8xf32> -> vector<32x8xf32>
    %621 = arith.mulf %600, %620 : vector<32x8xf32>
    %cst_235 = arith.constant dense<0.000000e+00> : vector<32x8xf32>
    %622 = tpu.matmul %577, %575, %cst_235 {dimension_numbers = #tpu.dot_dimension_numbers<[1], [0], [0], [1], [0, 0, 1, 1], [], []>} : vector<32x16xbf16>, vector<16x8xbf16>, vector<32x8xf32> -> vector<32x8xf32>
    %623 = arith.truncf %622 : vector<32x8xf32> to vector<32x8xbf16>
    %cst_236 = arith.constant dense<0.000000e+00> : vector<32x8xf32>
    %624 = tpu.matmul %0, %623, %cst_236 {dimension_numbers = #tpu.dot_dimension_numbers<[1], [0], [0], [1], [0, 0, 1, 1], [], []>} : vector<32x32xbf16>, vector<32x8xbf16>, vector<32x8xf32> -> vector<32x8xf32>
    %625 = vector.broadcast %576 : vector<1x8xf32> to vector<32x8xf32>
    %626 = arith.addf %624, %625 : vector<32x8xf32>
    %627 = arith.addf %621, %626 : vector<32x8xf32>
    %628 = math.absf %627 : vector<32x8xf32>
    %cst_237 = arith.constant 2.41421366 : f32
    %629 = vector.broadcast %cst_237 : f32 to vector<32x8xf32>
    %630 = arith.cmpf ogt, %628, %629 : vector<32x8xf32>
    %cst_238 = arith.constant 0.414213568 : f32
    %631 = vector.broadcast %cst_238 : f32 to vector<32x8xf32>
    %632 = arith.cmpf ogt, %628, %631 : vector<32x8xf32>
    %cst_239 = arith.constant 1.000000e+00 : f32
    %633 = vector.broadcast %cst_239 : f32 to vector<32x8xf32>
    %634 = arith.maximumf %628, %633 : vector<32x8xf32>
    %635 = tpu.reciprocal %634 {approx = true} : vector<32x8xf32> -> vector<32x8xf32>
    %cst_240 = arith.constant 0.000000e+00 : f32
    %636 = vector.broadcast %cst_240 : f32 to vector<32x8xf32>
    %637 = arith.subf %636, %635 : vector<32x8xf32>
    %cst_241 = arith.constant 1.000000e+00 : f32
    %638 = vector.broadcast %cst_241 : f32 to vector<32x8xf32>
    %639 = arith.subf %628, %638 : vector<32x8xf32>
    %cst_242 = arith.constant 1.000000e+00 : f32
    %640 = vector.broadcast %cst_242 : f32 to vector<32x8xf32>
    %641 = arith.addf %628, %640 : vector<32x8xf32>
    %642 = tpu.reciprocal %641 {approx = true} : vector<32x8xf32> -> vector<32x8xf32>
    %643 = arith.mulf %639, %642 : vector<32x8xf32>
    %644 = arith.select %632, %643, %628 : vector<32x8xi1>, vector<32x8xf32>
    %645 = arith.select %630, %637, %644 : vector<32x8xi1>, vector<32x8xf32>
    %cst_243 = arith.constant 0.785398185 : f32
    %cst_244 = arith.constant 0.000000e+00 : f32
    %646 = vector.broadcast %cst_243 : f32 to vector<32x8xf32>
    %647 = vector.broadcast %cst_244 : f32 to vector<32x8xf32>
    %648 = arith.select %632, %646, %647 : vector<32x8xi1>, vector<32x8xf32>
    %cst_245 = arith.constant 1.57079637 : f32
    %649 = vector.broadcast %cst_245 : f32 to vector<32x8xf32>
    %650 = arith.select %630, %649, %648 : vector<32x8xi1>, vector<32x8xf32>
    %651 = arith.mulf %645, %645 : vector<32x8xf32>
    %cst_246 = arith.constant 0.0805374458 : f32
    %652 = vector.broadcast %cst_246 : f32 to vector<32x8xf32>
    %653 = arith.mulf %652, %651 : vector<32x8xf32>
    %cst_247 = arith.constant 0.138776854 : f32
    %654 = vector.broadcast %cst_247 : f32 to vector<32x8xf32>
    %655 = arith.subf %653, %654 : vector<32x8xf32>
    %656 = arith.mulf %655, %651 : vector<32x8xf32>
    %cst_248 = arith.constant 0.199777111 : f32
    %657 = vector.broadcast %cst_248 : f32 to vector<32x8xf32>
    %658 = arith.addf %656, %657 : vector<32x8xf32>
    %659 = arith.mulf %658, %651 : vector<32x8xf32>
    %cst_249 = arith.constant 0.333329499 : f32
    %660 = vector.broadcast %cst_249 : f32 to vector<32x8xf32>
    %661 = arith.subf %659, %660 : vector<32x8xf32>
    %662 = arith.addf %650, %645 : vector<32x8xf32>
    %663 = arith.mulf %645, %651 : vector<32x8xf32>
    %664 = arith.mulf %663, %661 : vector<32x8xf32>
    %665 = arith.addf %662, %664 : vector<32x8xf32>
    %cst_250 = arith.constant 0.000000e+00 : f32
    %666 = vector.broadcast %cst_250 : f32 to vector<32x8xf32>
    %667 = arith.cmpf olt, %627, %666 : vector<32x8xf32>
    %cst_251 = arith.constant 0.000000e+00 : f32
    %668 = vector.broadcast %cst_251 : f32 to vector<32x8xf32>
    %669 = arith.subf %668, %665 : vector<32x8xf32>
    %670 = arith.select %667, %669, %665 : vector<32x8xi1>, vector<32x8xf32>
    %cst_252 = arith.constant dense<0xFF800000> : vector<32xf32>
    %671 = vector.multi_reduction <maximumf>, %670, %cst_252 [1] : vector<32x8xf32> to vector<32xf32>
    %672 = vector.shape_cast %671 : vector<32xf32> to vector<32x1xf32>
    %673 = vector.broadcast %672 : vector<32x1xf32> to vector<32x8xf32>
    %674 = arith.subf %670, %673 : vector<32x8xf32>
    %675 = math.exp %674 : vector<32x8xf32>
    %cst_253 = arith.constant dense<0.000000e+00> : vector<32xf32>
    %676 = vector.multi_reduction <add>, %675, %cst_253 [1] : vector<32x8xf32> to vector<32xf32>
    %677 = vector.shape_cast %676 : vector<32xf32> to vector<32x1xf32>
    %678 = math.log %677 : vector<32x1xf32>
    %679 = vector.broadcast %678 : vector<32x1xf32> to vector<32x8xf32>
    %680 = arith.subf %674, %679 : vector<32x8xf32>
    %cst_254 = arith.constant 0.000000e+00 : f32
    %681 = vector.broadcast %cst_254 : f32 to vector<32x120xf32>
    %682 = tpu.concatenate %680, %681 in 1 : vector<32x8xf32>, vector<32x120xf32> -> vector<32x128xf32>
    %c0_255 = arith.constant 0 : index
    %c0_256 = arith.constant 0 : index
    %683 = vector.load %arg4[%c0_255, %c0_256] : memref<32x128xf32, #tpu.memory_space<vmem>>, vector<32x128xf32>
    tpu.vector_store %arg4[%c0_255, %c0_256], %682 {strides = array<i32>} : memref<32x128xf32, #tpu.memory_space<vmem>>, vector<32x128xf32>,
    return
  }
}

</mosaic_0001>

<llo_original>
// kernel: forward.1
$region0: #{forward.1}
  #allocation0 [shape = 'u32[]', space=smem, size = 0x4, offset = 0x4, fixed_abs, tag = 'smem constant byte address 0x4 - core index']
  #allocation1 [shape = 'u32[144,128]{1,0:T(1,128)}', space=vmem, size = 0x12000, scoped, tag = 'internal scratch']
  %s0 = inlined_call_operand.vmem [shape: f32[32,16], index: 0, kind: input, shape index: {}]
  %s1 = inlined_call_operand.vmem [shape: bf16[32,32], index: 1, kind: input, shape index: {}]
  %s2 = inlined_call_operand.vmem [shape: bf16[16,128], index: 2, kind: input, shape index: {}]
  %s3 = inlined_call_operand.vmem [shape: f32[1,128], index: 3, kind: input, shape index: {}]
  %s4 = inlined_call_operand.vmem [shape: f32[32,128], index: 4, kind: output, shape index: {}]
  %s5 = sld [smem:[#allocation0]]
  $region26: #{forward.1} parent=0
    _
  %s7 = ssub.s32 1, %s5
  %s8 = scalar_select 0, %s7, %s5
  // Predicated region
  $region2: #{forward.1} parent=0 // pred_check
    _
  $region3: #{forward.1} parent=0 // pred_check_branch
    %10 = sbr.rel (0) target = $region5
  $region4: #{forward.1} parent=0 // pred_region
    _
  $region5: #{forward.1} parent=0 // pred_fallthru
    _
  // Predicated region
  $region6: #{forward.1} parent=0 // pred_check
    _
  $region7: #{forward.1} parent=0 // pred_check_branch
    %12 = sbr.rel (0) target = $region9
  $region8: #{forward.1} parent=0 // pred_region
    _
  $region9: #{forward.1} parent=0 // pred_fallthru
    _
  // Predicated region
  $region10: #{forward.1} parent=0 // pred_check
    _
  $region11: #{forward.1} parent=0 // pred_check_branch
    %14 = sbr.rel (0) target = $region13
  $region12: #{forward.1} parent=0 // pred_region
    _
  $region13: #{forward.1} parent=0 // pred_fallthru
    _
  // Predicated region
  $region14: #{forward.1} parent=0 // pred_check
    _
  $region15: #{forward.1} parent=0 // pred_check_branch
    %16 = sbr.rel (0) target = $region17
  $region16: #{forward.1} parent=0 // pred_region
    _
  $region17: #{forward.1} parent=0 // pred_fallthru
    _
  %v18 = vld [vmem:[%s1] sm:$0xf]
  %v19 = vld [vmem:[%s1 + $0x4] sm:$0xf]
  %v20 = vld [vmem:[%s1 + $0x8] sm:$0xf]
  %v21 = vld [vmem:[%s1 + $0xc] sm:$0xf]
  %v22 = vld [vmem:[%s0] sm:$0xff]
  %v23 = vld [vmem:[%s0 + $0x8] sm:$0xff]
  %v24 = vld [vmem:[%s0 + $0x10] sm:$0xff]
  %v25 = vld [vmem:[%s0 + $0x18] sm:$0xff]
  %v26 = vld [vmem:[%s2] sm:$0xf]
  %v27 = vld [vmem:[%s2 + $0x4] sm:$0xf]
  %v28 = vld [vmem:[%s3] sm:$0x1]
  %v29 = vpack.c.bf16 %v23, %v22
  %v30 = vpack.c.bf16 %v25, %v24
  %v33 = vunpack.c.l.b16 %v26
  %v34 = vunpack.c.l.b16 %v27
  %v35 = vpack.c.b16 %v34, %v33
  %vm37 = vcmask 130048
  %v39 = vsel %vm37, %v29, 0
  %v42 = vsel %vm37, %v30, 0
  %44 = vmatprep.subr.bf16.mxu0 0
  %45 = vmatpush1.bf16.msra.mxu0 %v35
  %46 = vmatprep.subr.bf16.mxu0 0
  %47 = vmatpush1.bf16.msra.mxu0 0
  %48 = vmatprep.subr.bf16.mxu0 0
  %49 = vmatpush1.bf16.msra.mxu0 0
  %50 = vmatprep.subr.bf16.mxu0 0
  %51 = vmatpush1.bf16.msra.mxu0 0
  %52 = vmatprep.subr.bf16.mxu0 0
  %53 = vmatpush1.bf16.msra.mxu0 0
  %54 = vmatprep.subr.bf16.mxu0 0
  %55 = vmatpush1.bf16.msra.mxu0 0
  %56 = vmatprep.subr.bf16.mxu0 0
  %57 = vmatpush1.bf16.msra.mxu0 0
  %58 = vmatprep.subr.bf16.mxu0 0
  %59 = vmatpush1.bf16.msra.mxu0 0
  %60 = vmatprep.subr.bf16.mxu0 0
  %61 = vmatpush1.bf16.msra.mxu0 0
  %62 = vmatprep.subr.bf16.mxu0 0
  %63 = vmatpush1.bf16.msra.mxu0 0
  %64 = vmatprep.subr.bf16.mxu0 0
  %65 = vmatpush1.bf16.msra.mxu0 0
  %66 = vmatprep.subr.bf16.mxu0 0
  %67 = vmatpush1.bf16.msra.mxu0 0
  %68 = vmatprep.subr.bf16.mxu0 0
  %69 = vmatpush1.bf16.msra.mxu0 0
  %70 = vmatprep.subr.bf16.mxu0 0
  %71 = vmatpush1.bf16.msra.mxu0 0
  %72 = vmatprep.subr.bf16.mxu0 0
  %73 = vmatpush1.bf16.msra.mxu0 0
  %74 = vmatprep.subr.bf16.mxu0 0
  %75 = vmatpush1.bf16.msra.mxu0 0
  %76 = vmatprep.mubr.bf16.mxu0 0
  %77 = vmatmul.mubr.bf16.gmra.mrb[0].mxu0 %v39
  %v78 = vpop.f32.mrb[0].mxu0
  %v79 = vadd.f32 0.0, %v78
  %v80 = vpop.f32.mrb[0].mxu0
  %v81 = vpop.f32.mrb[0].mxu0
  %v82 = vadd.f32 0.0, %v81
  %v83 = vpop.f32.mrb[0].mxu0
  %84 = vmatprep.mubr.bf16.mxu0 0
  %85 = vmatmul.mubr.bf16.gmra.mrb[0].mxu0 %v42
  %v86 = vpop.f32.mrb[0].mxu0
  %v87 = vadd.f32 0.0, %v86
  %v88 = vpop.f32.mrb[0].mxu0
  %v89 = vpop.f32.mrb[0].mxu0
  %v90 = vadd.f32 0.0, %v89
  %v91 = vpop.f32.mrb[0].mxu0
  %92 = vdwg.mxu0
  %v93 = vmax.f32 %v79, -1.5607964
  %v94 = vmax.f32 %v82, -1.5607964
  %v95 = vmax.f32 %v87, -1.5607964
  %v96 = vmax.f32 %v90, -1.5607964
  %v97 = vmin.f32 %v93, 1.5607964
  %v98 = vmin.f32 %v94, 1.5607964
  %v99 = vmin.f32 %v95, 1.5607964
  %v100 = vmin.f32 %v96, 1.5607964
  %v101 = vmul.f32 %v97, %v97
  %v102 = vmul.f32 %v98, %v98
  %v103 = vmul.f32 %v99, %v99
  %v104 = vmul.f32 %v100, %v100
  %v105 = vmul.f32 %v101, -2.5052108e-08
  %v106 = vmul.f32 %v102, -2.5052108e-08
  %v107 = vmul.f32 %v103, -2.5052108e-08
  %v108 = vmul.f32 %v104, -2.5052108e-08
  %v109 = vadd.f32 %v105, 2.7557319e-06
  %v110 = vadd.f32 %v106, 2.7557319e-06
  %v111 = vadd.f32 %v107, 2.7557319e-06
  %v112 = vadd.f32 %v108, 2.7557319e-06
  %v113 = vmul.f32 %v101, %v109
  %v114 = vmul.f32 %v102, %v110
  %v115 = vmul.f32 %v103, %v111
  %v116 = vmul.f32 %v104, %v112
  %v117 = vadd.f32 %v113, -0.0001984127
  %v118 = vadd.f32 %v114, -0.0001984127
  %v119 = vadd.f32 %v115, -0.0001984127
  %v120 = vadd.f32 %v116, -0.0001984127
  %v121 = vmul.f32 %v101, %v117
  %v122 = vmul.f32 %v102, %v118
  %v123 = vmul.f32 %v103, %v119
  %v124 = vmul.f32 %v104, %v120
  %v125 = vadd.f32 %v121, 0.008333334
  %v126 = vadd.f32 %v122, 0.008333334
  %v127 = vadd.f32 %v123, 0.008333334
  %v128 = vadd.f32 %v124, 0.008333334
  %v129 = vmul.f32 %v101, %v125
  %v130 = vmul.f32 %v102, %v126
  %v131 = vmul.f32 %v103, %v127
  %v132 = vmul.f32 %v104, %v128
  %v133 = vadd.f32 %v129, -0.16666667
  %v134 = vadd.f32 %v130, -0.16666667
  %v135 = vadd.f32 %v131, -0.16666667
  %v136 = vadd.f32 %v132, -0.16666667
  %v137 = vmul.f32 %v101, %v133
  %v138 = vmul.f32 %v102, %v134
  %v139 = vmul.f32 %v103, %v135
  %v140 = vmul.f32 %v104, %v136
  %v141 = vadd.f32 %v137, 1.0
  %v142 = vadd.f32 %v138, 1.0
  %v143 = vadd.f32 %v139, 1.0
  %v144 = vadd.f32 %v140, 1.0
  %v145 = vmul.f32 %v97, %v141
  %v146 = vmul.f32 %v98, %v142
  %v147 = vmul.f32 %v99, %v143
  %v148 = vmul.f32 %v100, %v144
  %v149 = vmul.f32 %v101, 2.0876756e-09
  %v150 = vmul.f32 %v102, 2.0876756e-09
  %v151 = vmul.f32 %v103, 2.0876756e-09
  %v152 = vmul.f32 %v104, 2.0876756e-09
  %v153 = vadd.f32 %v149, -2.755732e-07
  %v154 = vadd.f32 %v150, -2.755732e-07
  %v155 = vadd.f32 %v151, -2.755732e-07
  %v156 = vadd.f32 %v152, -2.755732e-07
  %v157 = vmul.f32 %v101, %v153
  %v158 = vmul.f32 %v102, %v154
  %v159 = vmul.f32 %v103, %v155
  %v160 = vmul.f32 %v104, %v156
  %v161 = vadd.f32 %v157, 2.4801588e-05
  %v162 = vadd.f32 %v158, 2.4801588e-05
  %v163 = vadd.f32 %v159, 2.4801588e-05
  %v164 = vadd.f32 %v160, 2.4801588e-05
  %v165 = vmul.f32 %v101, %v161
  %v166 = vmul.f32 %v102, %v162
  %v167 = vmul.f32 %v103, %v163
  %v168 = vmul.f32 %v104, %v164
  %v169 = vadd.f32 %v165, -0.0013888889
  %v170 = vadd.f32 %v166, -0.0013888889
  %v171 = vadd.f32 %v167, -0.0013888889
  %v172 = vadd.f32 %v168, -0.0013888889
  %v173 = vmul.f32 %v101, %v169
  %v174 = vmul.f32 %v102, %v170
  %v175 = vmul.f32 %v103, %v171
  %v176 = vmul.f32 %v104, %v172
  %v177 = vadd.f32 %v173, 0.041666668
  %v178 = vadd.f32 %v174, 0.041666668
  %v179 = vadd.f32 %v175, 0.041666668
  %v180 = vadd.f32 %v176, 0.041666668
  %v181 = vmul.f32 %v101, %v177
  %v182 = vmul.f32 %v102, %v178
  %v183 = vmul.f32 %v103, %v179
  %v184 = vmul.f32 %v104, %v180
  %v185 = vadd.f32 %v181, -0.5
  %v186 = vadd.f32 %v182, -0.5
  %v187 = vadd.f32 %v183, -0.5
  %v188 = vadd.f32 %v184, -0.5
  %v189 = vmul.f32 %v101, %v185
  %v190 = vmul.f32 %v102, %v186
  %v191 = vmul.f32 %v103, %v187
  %v192 = vmul.f32 %v104, %v188
  %v193 = vadd.f32 %v189, 1.0
  %v194 = vadd.f32 %v190, 1.0
  %v195 = vadd.f32 %v191, 1.0
  %v196 = vadd.f32 %v192, 1.0
  %v197 = vrcp.pop %v193
  %v198 = vrcp.pop %v194
  %v199 = vrcp.pop %v195
  %v200 = vrcp.pop %v196
  %v201 = vmul.f32 %v145, %v197
  %v202 = vmul.f32 %v146, %v198
  %v203 = vmul.f32 %v147, %v199
  %v204 = vmul.f32 %v148, %v200
  %205 = vrot.lane.b32.xlu0 %v35, 112
  %v206 = vpop.permute.xlu0 %205
  %208 = vmatprep.subr.bf16.mxu0 0
  %209 = vmatpush1.bf16.msra.mxu0 %v206
  %210 = vmatprep.subr.bf16.mxu0 0
  %211 = vmatpush1.bf16.msra.mxu0 0
  %212 = vmatprep.subr.bf16.mxu0 0
  %213 = vmatpush1.bf16.msra.mxu0 0
  %214 = vmatprep.subr.bf16.mxu0 0
  %215 = vmatpush1.bf16.msra.mxu0 0
  %216 = vmatprep.subr.bf16.mxu0 0
  %217 = vmatpush1.bf16.msra.mxu0 0
  %218 = vmatprep.subr.bf16.mxu0 0
  %219 = vmatpush1.bf16.msra.mxu0 0
  %220 = vmatprep.subr.bf16.mxu0 0
  %221 = vmatpush1.bf16.msra.mxu0 0
  %222 = vmatprep.subr.bf16.mxu0 0
  %223 = vmatpush1.bf16.msra.mxu0 0
  %224 = vmatprep.subr.bf16.mxu0 0
  %225 = vmatpush1.bf16.msra.mxu0 0
  %226 = vmatprep.subr.bf16.mxu0 0
  %227 = vmatpush1.bf16.msra.mxu0 0
  %228 = vmatprep.subr.bf16.mxu0 0
  %229 = vmatpush1.bf16.msra.mxu0 0
  %230 = vmatprep.subr.bf16.mxu0 0
  %231 = vmatpush1.bf16.msra.mxu0 0
  %232 = vmatprep.subr.bf16.mxu0 0
  %233 = vmatpush1.bf16.msra.mxu0 0
  %234 = vmatprep.subr.bf16.mxu0 0
  %235 = vmatpush1.bf16.msra.mxu0 0
  %236 = vmatprep.subr.bf16.mxu0 0
  %237 = vmatpush1.bf16.msra.mxu0 0
  %238 = vmatprep.subr.bf16.mxu0 0
  %239 = vmatpush1.bf16.msra.mxu0 0
  %240 = vmatprep.mubr.bf16.mxu0 0
  %241 = vmatmul.mubr.bf16.gmra.mrb[0].mxu0 %v39
  %v242 = vpop.f32.mrb[0].mxu0
  %v243 = vadd.f32 0.0, %v242
  %v244 = vpop.f32.mrb[0].mxu0
  %v245 = vpop.f32.mrb[0].mxu0
  %v246 = vadd.f32 0.0, %v245
  %v247 = vpop.f32.mrb[0].mxu0
  %248 = vmatprep.mubr.bf16.mxu0 0
  %249 = vmatmul.mubr.bf16.gmra.mrb[0].mxu0 %v42
  %v250 = vpop.f32.mrb[0].mxu0
  %v251 = vadd.f32 0.0, %v250
  %v252 = vpop.f32.mrb[0].mxu0
  %v253 = vpop.f32.mrb[0].mxu0
  %v254 = vadd.f32 0.0, %v253
  %v255 = vpop.f32.mrb[0].mxu0
  %256 = vdwg.mxu0
  %v257 = vpack.c.bf16 %v246, %v243
  %v258 = vpack.c.bf16 %v254, %v251
  %v260 = vlaneseq
  %v261 = vshrl.u32 %v260, 7
  %v262 = vsub.s32 0, %v261
  %v263 = vrot.slane %v28, %v262
  %v269 = vunpack.c.l.b16 %v18
  %v270 = vunpack.c.l.b16 %v19
  %v271 = vunpack.c.l.b16 %v20
  %v272 = vunpack.c.l.b16 %v21
  %v273 = vpack.c.b16 %v270, %v269
  %v274 = vpack.c.b16 %v272, %v271
  %vm275 = vcmask 261120
  %v277 = vsel %vm275, %v273, 0
  %v280 = vsel %vm275, %v274, 0
  %282 = vmatprep.subr.bf16.mxu0 0
  %283 = vmatpush1.bf16.msra.mxu0 %v257
  %284 = vmatprep.subr.bf16.mxu0 0
  %285 = vmatpush1.bf16.msra.mxu0 %v258
  %286 = vmatprep.subr.bf16.mxu0 0
  %287 = vmatpush1.bf16.msra.mxu0 0
  %288 = vmatprep.subr.bf16.mxu0 0
  %289 = vmatpush1.bf16.msra.mxu0 0
  %290 = vmatprep.subr.bf16.mxu0 0
  %291 = vmatpush1.bf16.msra.mxu0 0
  %292 = vmatprep.subr.bf16.mxu0 0
  %293 = vmatpush1.bf16.msra.mxu0 0
  %294 = vmatprep.subr.bf16.mxu0 0
  %295 = vmatpush1.bf16.msra.mxu0 0
  %296 = vmatprep.subr.bf16.mxu0 0
  %297 = vmatpush1.bf16.msra.mxu0 0
  %298 = vmatprep.subr.bf16.mxu0 0
  %299 = vmatpush1.bf16.msra.mxu0 0
  %300 = vmatprep.subr.bf16.mxu0 0
  %301 = vmatpush1.bf16.msra.mxu0 0
  %302 = vmatprep.subr.bf16.mxu0 0
  %303 = vmatpush1.bf16.msra.mxu0 0
  %304 = vmatprep.subr.bf16.mxu0 0
  %305 = vmatpush1.bf16.msra.mxu0 0
  %306 = vmatprep.subr.bf16.mxu0 0
  %307 = vmatpush1.bf16.msra.mxu0 0
  %308 = vmatprep.subr.bf16.mxu0 0
  %309 = vmatpush1.bf16.msra.mxu0 0
  %310 = vmatprep.subr.bf16.mxu0 0
  %311 = vmatpush1.bf16.msra.mxu0 0
  %312 = vmatprep.subr.bf16.mxu0 0
  %313 = vmatpush1.bf16.msra.mxu0 0
  %314 = vmatprep.mubr.bf16.mxu0 0
  %315 = vmatmul.mubr.bf16.gmra.mrb[0].mxu0 %v277
  %v316 = vpop.f32.mrb[0].mxu0
  %v317 = vadd.f32 %v263, %v316
  %v318 = vpop.f32.mrb[0].mxu0
  %v319 = vpop.f32.mrb[0].mxu0
  %v320 = vadd.f32 %v263, %v319
  %v321 = vpop.f32.mrb[0].mxu0
  %322 = vmatprep.mubr.bf16.mxu0 0
  %323 = vmatmul.mubr.bf16.gmra.mrb[0].mxu0 %v280
  %v324 = vpop.f32.mrb[0].mxu0
  %v325 = vadd.f32 %v263, %v324
  %v326 = vpop.f32.mrb[0].mxu0
  %v327 = vpop.f32.mrb[0].mxu0
  %v328 = vadd.f32 %v263, %v327
  %v329 = vpop.f32.mrb[0].mxu0
  %330 = vdwg.mxu0
  %v331 = vadd.f32 %v201, %v317
  %v332 = vadd.f32 %v202, %v320
  %v333 = vadd.f32 %v203, %v325
  %v334 = vadd.f32 %v204, %v328
  %v335 = vand.u32 2147483647, %v331
  %v336 = vand.u32 2147483647, %v332
  %v337 = vand.u32 2147483647, %v333
  %v338 = vand.u32 2147483647, %v334
  %vm339 = vcmp.gt.f32.partialorder %v335, 2.4142137
  %vm340 = vcmp.gt.f32.partialorder %v336, 2.4142137
  %vm341 = vcmp.gt.f32.partialorder %v337, 2.4142137
  %vm342 = vcmp.gt.f32.partialorder %v338, 2.4142137
  %vm343 = vcmp.gt.f32.partialorder %v335, 0.41421357
  %vm344 = vcmp.gt.f32.partialorder %v336, 0.41421357
  %vm345 = vcmp.gt.f32.partialorder %v337, 0.41421357
  %vm346 = vcmp.gt.f32.partialorder %v338, 0.41421357
  %v347 = vmax.f32 %v335, 1.0
  %v348 = vmax.f32 %v336, 1.0
  %v349 = vmax.f32 %v337, 1.0
  %v350 = vmax.f32 %v338, 1.0
  %v351 = vrcp.pop %v347
  %v352 = vrcp.pop %v348
  %v353 = vrcp.pop %v349
  %v354 = vrcp.pop %v350
  %v355 = vsub.f32 0.0, %v351
  %v356 = vsub.f32 0.0, %v352
  %v357 = vsub.f32 0.0, %v353
  %v358 = vsub.f32 0.0, %v354
  %v359 = vsub.f32 %v335, 1.0
  %v360 = vsub.f32 %v336, 1.0
  %v361 = vsub.f32 %v337, 1.0
  %v362 = vsub.f32 %v338, 1.0
  %v363 = vadd.f32 %v335, 1.0
  %v364 = vadd.f32 %v336, 1.0
  %v365 = vadd.f32 %v337, 1.0
  %v366 = vadd.f32 %v338, 1.0
  %v367 = vrcp.pop %v363
  %v368 = vrcp.pop %v364
  %v369 = vrcp.pop %v365
  %v370 = vrcp.pop %v366
  %v371 = vmul.f32 %v359, %v367
  %v372 = vmul.f32 %v360, %v368
  %v373 = vmul.f32 %v361, %v369
  %v374 = vmul.f32 %v362, %v370
  %v375 = vsel %vm343, %v371, %v335
  %v376 = vsel %vm344, %v372, %v336
  %v377 = vsel %vm345, %v373, %v337
  %v378 = vsel %vm346, %v374, %v338
  %v379 = vsel %vm339, %v355, %v375
  %v380 = vsel %vm340, %v356, %v376
  %v381 = vsel %vm341, %v357, %v377
  %v382 = vsel %vm342, %v358, %v378
  %v383 = vsel %vm343, 0.7853982, 0.0
  %v384 = vsel %vm344, 0.7853982, 0.0
  %v385 = vsel %vm345, 0.7853982, 0.0
  %v386 = vsel %vm346, 0.7853982, 0.0
  %v387 = vsel %vm339, 1.5707964, %v383
  %v388 = vsel %vm340, 1.5707964, %v384
  %v389 = vsel %vm341, 1.5707964, %v385
  %v390 = vsel %vm342, 1.5707964, %v386
  %v391 = vmul.f32 %v379, %v379
  %v392 = vmul.f32 %v380, %v380
  %v393 = vmul.f32 %v381, %v381
  %v394 = vmul.f32 %v382, %v382
  %v395 = vmul.f32 %v391, 0.080537446
  %v396 = vmul.f32 %v392, 0.080537446
  %v397 = vmul.f32 %v393, 0.080537446
  %v398 = vmul.f32 %v394, 0.080537446
  %v399 = vsub.f32 %v395, 0.13877685
  %v400 = vsub.f32 %v396, 0.13877685
  %v401 = vsub.f32 %v397, 0.13877685
  %v402 = vsub.f32 %v398, 0.13877685
  %v403 = vmul.f32 %v399, %v391
  %v404 = vmul.f32 %v400, %v392
  %v405 = vmul.f32 %v401, %v393
  %v406 = vmul.f32 %v402, %v394
  %v407 = vadd.f32 %v403, 0.19977711
  %v408 = vadd.f32 %v404, 0.19977711
  %v409 = vadd.f32 %v405, 0.19977711
  %v410 = vadd.f32 %v406, 0.19977711
  %v411 = vmul.f32 %v407, %v391
  %v412 = vmul.f32 %v408, %v392
  %v413 = vmul.f32 %v409, %v393
  %v414 = vmul.f32 %v410, %v394
  %v415 = vsub.f32 %v411, 0.3333295
  %v416 = vsub.f32 %v412, 0.3333295
  %v417 = vsub.f32 %v413, 0.3333295
  %v418 = vsub.f32 %v414, 0.3333295
  %v419 = vadd.f32 %v387, %v379
  %v420 = vadd.f32 %v388, %v380
  %v421 = vadd.f32 %v389, %v381
  %v422 = vadd.f32 %v390, %v382
  %v423 = vmul.f32 %v379, %v391
  %v424 = vmul.f32 %v380, %v392
  %v425 = vmul.f32 %v381, %v393
  %v426 = vmul.f32 %v382, %v394
  %v427 = vmul.f32 %v423, %v415
  %v428 = vmul.f32 %v424, %v416
  %v429 = vmul.f32 %v425, %v417
  %v430 = vmul.f32 %v426, %v418
  %v431 = vadd.f32 %v419, %v427
  %v432 = vadd.f32 %v420, %v428
  %v433 = vadd.f32 %v421, %v429
  %v434 = vadd.f32 %v422, %v430
  %vm435 = vcmp.lt.f32.partialorder %v331, 0.0
  %vm436 = vcmp.lt.f32.partialorder %v332, 0.0
  %vm437 = vcmp.lt.f32.partialorder %v333, 0.0
  %vm438 = vcmp.lt.f32.partialorder %v334, 0.0
  %v439 = vsub.f32 0.0, %v431
  %v440 = vsub.f32 0.0, %v432
  %v441 = vsub.f32 0.0, %v433
  %v442 = vsub.f32 0.0, %v434
  %v443 = vsel %vm435, %v439, %v431
  %v444 = vsel %vm436, %v440, %v432
  %v445 = vsel %vm437, %v441, %v433
  %v446 = vsel %vm438, %v442, %v434
  %v447 = vpack.c.bf16 %v444, %v443
  %v448 = vpack.c.bf16 %v446, %v445
  %v449 = vmax.f32 %v443, -1.5607964
  %v450 = vmax.f32 %v444, -1.5607964
  %v451 = vmax.f32 %v445, -1.5607964
  %v452 = vmax.f32 %v446, -1.5607964
  %v453 = vmin.f32 %v449, 1.5607964
  %v454 = vmin.f32 %v450, 1.5607964
  %v455 = vmin.f32 %v451, 1.5607964
  %v456 = vmin.f32 %v452, 1.5607964
  %v457 = vmul.f32 %v453, %v453
  %v458 = vmul.f32 %v454, %v454
  %v459 = vmul.f32 %v455, %v455
  %v460 = vmul.f32 %v456, %v456
  %v461 = vmul.f32 %v457, -2.5052108e-08
  %v462 = vmul.f32 %v458, -2.5052108e-08
  %v463 = vmul.f32 %v459, -2.5052108e-08
  %v464 = vmul.f32 %v460, -2.5052108e-08
  %v465 = vadd.f32 %v461, 2.7557319e-06
  %v466 = vadd.f32 %v462, 2.7557319e-06
  %v467 = vadd.f32 %v463, 2.7557319e-06
  %v468 = vadd.f32 %v464, 2.7557319e-06
  %v469 = vmul.f32 %v457, %v465
  %v470 = vmul.f32 %v458, %v466
  %v471 = vmul.f32 %v459, %v467
  %v472 = vmul.f32 %v460, %v468
  %v473 = vadd.f32 %v469, -0.0001984127
  %v474 = vadd.f32 %v470, -0.0001984127
  %v475 = vadd.f32 %v471, -0.0001984127
  %v476 = vadd.f32 %v472, -0.0001984127
  %v477 = vmul.f32 %v457, %v473
  %v478 = vmul.f32 %v458, %v474
  %v479 = vmul.f32 %v459, %v475
  %v480 = vmul.f32 %v460, %v476
  %v481 = vadd.f32 %v477, 0.008333334
  %v482 = vadd.f32 %v478, 0.008333334
  %v483 = vadd.f32 %v479, 0.008333334
  %v484 = vadd.f32 %v480, 0.008333334
  %v485 = vmul.f32 %v457, %v481
  %v486 = vmul.f32 %v458, %v482
  %v487 = vmul.f32 %v459, %v483
  %v488 = vmul.f32 %v460, %v484
  %v489 = vadd.f32 %v485, -0.16666667
  %v490 = vadd.f32 %v486, -0.16666667
  %v491 = vadd.f32 %v487, -0.16666667
  %v492 = vadd.f32 %v488, -0.16666667
  %v493 = vmul.f32 %v457, %v489
  %v494 = vmul.f32 %v458, %v490
  %v495 = vmul.f32 %v459, %v491
  %v496 = vmul.f32 %v460, %v492
  %v497 = vadd.f32 %v493, 1.0
  %v498 = vadd.f32 %v494, 1.0
  %v499 = vadd.f32 %v495, 1.0
  %v500 = vadd.f32 %v496, 1.0
  %v501 = vmul.f32 %v453, %v497
  %v502 = vmul.f32 %v454, %v498
  %v503 = vmul.f32 %v455, %v499
  %v504 = vmul.f32 %v456, %v500
  %v505 = vmul.f32 %v457, 2.0876756e-09
  %v506 = vmul.f32 %v458, 2.0876756e-09
  %v507 = vmul.f32 %v459, 2.0876756e-09
  %v508 = vmul.f32 %v460, 2.0876756e-09
  %v509 = vadd.f32 %v505, -2.755732e-07
  %v510 = vadd.f32 %v506, -2.755732e-07
  %v511 = vadd.f32 %v507, -2.755732e-07
  %v512 = vadd.f32 %v508, -2.755732e-07
  %v513 = vmul.f32 %v457, %v509
  %v514 = vmul.f32 %v458, %v510
  %v515 = vmul.f32 %v459, %v511
  %v516 = vmul.f32 %v460, %v512
  %v517 = vadd.f32 %v513, 2.4801588e-05
  %v518 = vadd.f32 %v514, 2.4801588e-05
  %v519 = vadd.f32 %v515, 2.4801588e-05
  %v520 = vadd.f32 %v516, 2.4801588e-05
  %v521 = vmul.f32 %v457, %v517
  %v522 = vmul.f32 %v458, %v518
  %v523 = vmul.f32 %v459, %v519
  %v524 = vmul.f32 %v460, %v520
  %v525 = vadd.f32 %v521, -0.0013888889
  %v526 = vadd.f32 %v522, -0.0013888889
  %v527 = vadd.f32 %v523, -0.0013888889
  %v528 = vadd.f32 %v524, -0.0013888889
  %v529 = vmul.f32 %v457, %v525
  %v530 = vmul.f32 %v458, %v526
  %v531 = vmul.f32 %v459, %v527
  %v532 = vmul.f32 %v460, %v528
  %v533 = vadd.f32 %v529, 0.041666668
  %v534 = vadd.f32 %v530, 0.041666668
  %v535 = vadd.f32 %v531, 0.041666668
  %v536 = vadd.f32 %v532, 0.041666668
  %v537 = vmul.f32 %v457, %v533
  %v538 = vmul.f32 %v458, %v534
  %v539 = vmul.f32 %v459, %v535
  %v540 = vmul.f32 %v460, %v536
  %v541 = vadd.f32 %v537, -0.5
  %v542 = vadd.f32 %v538, -0.5
  %v543 = vadd.f32 %v539, -0.5
  %v544 = vadd.f32 %v540, -0.5
  %v545 = vmul.f32 %v457, %v541
  %v546 = vmul.f32 %v458, %v542
  %v547 = vmul.f32 %v459, %v543
  %v548 = vmul.f32 %v460, %v544
  %v549 = vadd.f32 %v545, 1.0
  %v550 = vadd.f32 %v546, 1.0
  %v551 = vadd.f32 %v547, 1.0
  %v552 = vadd.f32 %v548, 1.0
  %v553 = vrcp.pop %v549
  %v554 = vrcp.pop %v550
  %v555 = vrcp.pop %v551
  %v556 = vrcp.pop %v552
  %v557 = vmul.f32 %v501, %v553
  %v558 = vmul.f32 %v502, %v554
  %v559 = vmul.f32 %v503, %v555
  %v560 = vmul.f32 %v504, %v556
  %561 = vrot.lane.b32.xlu0 %v35, 96
  %v562 = vpop.permute.xlu0 %561
  %v565 = vsel %vm37, %v447, 0
  %v568 = vsel %vm37, %v448, 0
  %570 = vmatprep.subr.bf16.mxu0 0
  %571 = vmatpush1.bf16.msra.mxu0 %v562
  %572 = vmatprep.subr.bf16.mxu0 0
  %573 = vmatpush1.bf16.msra.mxu0 0
  %574 = vmatprep.subr.bf16.mxu0 0
  %575 = vmatpush1.bf16.msra.mxu0 0
  %576 = vmatprep.subr.bf16.mxu0 0
  %577 = vmatpush1.bf16.msra.mxu0 0
  %578 = vmatprep.subr.bf16.mxu0 0
  %579 = vmatpush1.bf16.msra.mxu0 0
  %580 = vmatprep.subr.bf16.mxu0 0
  %581 = vmatpush1.bf16.msra.mxu0 0
  %582 = vmatprep.subr.bf16.mxu0 0
  %583 = vmatpush1.bf16.msra.mxu0 0
  %584 = vmatprep.subr.bf16.mxu0 0
  %585 = vmatpush1.bf16.msra.mxu0 0
  %586 = vmatprep.subr.bf16.mxu0 0
  %587 = vmatpush1.bf16.msra.mxu0 0
  %588 = vmatprep.subr.bf16.mxu0 0
  %589 = vmatpush1.bf16.msra.mxu0 0
  %590 = vmatprep.subr.bf16.mxu0 0
  %591 = vmatpush1.bf16.msra.mxu0 0
  %592 = vmatprep.subr.bf16.mxu0 0
  %593 = vmatpush1.bf16.msra.mxu0 0
  %594 = vmatprep.subr.bf16.mxu0 0
  %595 = vmatpush1.bf16.msra.mxu0 0
  %596 = vmatprep.subr.bf16.mxu0 0
  %597 = vmatpush1.bf16.msra.mxu0 0
  %598 = vmatprep.subr.bf16.mxu0 0
  %599 = vmatpush1.bf16.msra.mxu0 0
  %600 = vmatprep.subr.bf16.mxu0 0
  %601 = vmatpush1.bf16.msra.mxu0 0
  %602 = vmatprep.mubr.bf16.mxu0 0
  %603 = vmatmul.mubr.bf16.gmra.mrb[0].mxu0 %v565
  %v604 = vpop.f32.mrb[0].mxu0
  %v605 = vadd.f32 0.0, %v604
  %v606 = vpop.f32.mrb[0].mxu0
  %v607 = vpop.f32.mrb[0].mxu0
  %v608 = vadd.f32 0.0, %v607
  %v609 = vpop.f32.mrb[0].mxu0
  %610 = vmatprep.mubr.bf16.mxu0 0
  %611 = vmatmul.mubr.bf16.gmra.mrb[0].mxu0 %v568
  %v612 = vpop.f32.mrb[0].mxu0
  %v613 = vadd.f32 0.0, %v612
  %v614 = vpop.f32.mrb[0].mxu0
  %v615 = vpop.f32.mrb[0].mxu0
  %v616 = vadd.f32 0.0, %v615
  %v617 = vpop.f32.mrb[0].mxu0
  %618 = vdwg.mxu0
  %v619 = vpack.c.bf16 %v608, %v605
  %v620 = vpack.c.bf16 %v616, %v613
  %621 = vrot.lane.b32.xlu0 %v263, 112
  %v622 = vpop.permute.xlu0 %621
  %624 = vmatprep.subr.bf16.mxu0 0
  %625 = vmatpush1.bf16.msra.mxu0 %v619
  %626 = vmatprep.subr.bf16.mxu0 0
  %627 = vmatpush1.bf16.msra.mxu0 %v620
  %628 = vmatprep.subr.bf16.mxu0 0
  %629 = vmatpush1.bf16.msra.mxu0 0
  %630 = vmatprep.subr.bf16.mxu0 0
  %631 = vmatpush1.bf16.msra.mxu0 0
  %632 = vmatprep.subr.bf16.mxu0 0
  %633 = vmatpush1.bf16.msra.mxu0 0
  %634 = vmatprep.subr.bf16.mxu0 0
  %635 = vmatpush1.bf16.msra.mxu0 0
  %636 = vmatprep.subr.bf16.mxu0 0
  %637 = vmatpush1.bf16.msra.mxu0 0
  %638 = vmatprep.subr.bf16.mxu0 0
  %639 = vmatpush1.bf16.msra.mxu0 0
  %640 = vmatprep.subr.bf16.mxu0 0
  %641 = vmatpush1.bf16.msra.mxu0 0
  %642 = vmatprep.subr.bf16.mxu0 0
  %643 = vmatpush1.bf16.msra.mxu0 0
  %644 = vmatprep.subr.bf16.mxu0 0
  %645 = vmatpush1.bf16.msra.mxu0 0
  %646 = vmatprep.subr.bf16.mxu0 0
  %647 = vmatpush1.bf16.msra.mxu0 0
  %648 = vmatprep.subr.bf16.mxu0 0
  %649 = vmatpush1.bf16.msra.mxu0 0
  %650 = vmatprep.subr.bf16.mxu0 0
  %651 = vmatpush1.bf16.msra.mxu0 0
  %652 = vmatprep.subr.bf16.mxu0 0
  %653 = vmatpush1.bf16.msra.mxu0 0
  %654 = vmatprep.subr.bf16.mxu0 0
  %655 = vmatpush1.bf16.msra.mxu0 0
  %656 = vmatprep.mubr.bf16.mxu0 0
  %657 = vmatmul.mubr.bf16.gmra.mrb[0].mxu0 %v277
  %v658 = vpop.f32.mrb[0].mxu0
  %v659 = vadd.f32 %v622, %v658
  %v660 = vpop.f32.mrb[0].mxu0
  %v661 = vpop.f32.mrb[0].mxu0
  %v662 = vadd.f32 %v622, %v661
  %v663 = vpop.f32.mrb[0].mxu0
  %664 = vmatprep.mubr.bf16.mxu0 0
  %665 = vmatmul.mubr.bf16.gmra.mrb[0].mxu0 %v280
  %v666 = vpop.f32.mrb[0].mxu0
  %v667 = vadd.f32 %v622, %v666
  %v668 = vpop.f32.mrb[0].mxu0
  %v669 = vpop.f32.mrb[0].mxu0
  %v670 = vadd.f32 %v622, %v669
  %v671 = vpop.f32.mrb[0].mxu0
  %672 = vdwg.mxu0
  %v673 = vadd.f32 %v557, %v659
  %v674 = vadd.f32 %v558, %v662
  %v675 = vadd.f32 %v559, %v667
  %v676 = vadd.f32 %v560, %v670
  %v677 = vand.u32 2147483647, %v673
  %v678 = vand.u32 2147483647, %v674
  %v679 = vand.u32 2147483647, %v675
  %v680 = vand.u32 2147483647, %v676
  %vm681 = vcmp.gt.f32.partialorder %v677, 2.4142137
  %vm682 = vcmp.gt.f32.partialorder %v678, 2.4142137
  %vm683 = vcmp.gt.f32.partialorder %v679, 2.4142137
  %vm684 = vcmp.gt.f32.partialorder %v680, 2.4142137
  %vm685 = vcmp.gt.f32.partialorder %v677, 0.41421357
  %vm686 = vcmp.gt.f32.partialorder %v678, 0.41421357
  %vm687 = vcmp.gt.f32.partialorder %v679, 0.41421357
  %vm688 = vcmp.gt.f32.partialorder %v680, 0.41421357
  %v689 = vmax.f32 %v677, 1.0
  %v690 = vmax.f32 %v678, 1.0
  %v691 = vmax.f32 %v679, 1.0
  %v692 = vmax.f32 %v680, 1.0
  %v693 = vrcp.pop %v689
  %v694 = vrcp.pop %v690
  %v695 = vrcp.pop %v691
  %v696 = vrcp.pop %v692
  %v697 = vsub.f32 0.0, %v693
  %v698 = vsub.f32 0.0, %v694
  %v699 = vsub.f32 0.0, %v695
  %v700 = vsub.f32 0.0, %v696
  %v701 = vsub.f32 %v677, 1.0
  %v702 = vsub.f32 %v678, 1.0
  %v703 = vsub.f32 %v679, 1.0
  %v704 = vsub.f32 %v680, 1.0
  %v705 = vadd.f32 %v677, 1.0
  %v706 = vadd.f32 %v678, 1.0
  %v707 = vadd.f32 %v679, 1.0
  %v708 = vadd.f32 %v680, 1.0
  %v709 = vrcp.pop %v705
  %v710 = vrcp.pop %v706
  %v711 = vrcp.pop %v707
  %v712 = vrcp.pop %v708
  %v713 = vmul.f32 %v701, %v709
  %v714 = vmul.f32 %v702, %v710
  %v715 = vmul.f32 %v703, %v711
  %v716 = vmul.f32 %v704, %v712
  %v717 = vsel %vm685, %v713, %v677
  %v718 = vsel %vm686, %v714, %v678
  %v719 = vsel %vm687, %v715, %v679
  %v720 = vsel %vm688, %v716, %v680
  %v721 = vsel %vm681, %v697, %v717
  %v722 = vsel %vm682, %v698, %v718
  %v723 = vsel %vm683, %v699, %v719
  %v724 = vsel %vm684, %v700, %v720
  %v725 = vsel %vm685, 0.7853982, 0.0
  %v726 = vsel %vm686, 0.7853982, 0.0
  %v727 = vsel %vm687, 0.7853982, 0.0
  %v728 = vsel %vm688, 0.7853982, 0.0
  %v729 = vsel %vm681, 1.5707964, %v725
  %v730 = vsel %vm682, 1.5707964, %v726
  %v731 = vsel %vm683, 1.5707964, %v727
  %v732 = vsel %vm684, 1.5707964, %v728
  %v733 = vmul.f32 %v721, %v721
  %v734 = vmul.f32 %v722, %v722
  %v735 = vmul.f32 %v723, %v723
  %v736 = vmul.f32 %v724, %v724
  %v737 = vmul.f32 %v733, 0.080537446
  %v738 = vmul.f32 %v734, 0.080537446
  %v739 = vmul.f32 %v735, 0.080537446
  %v740 = vmul.f32 %v736, 0.080537446
  %v741 = vsub.f32 %v737, 0.13877685
  %v742 = vsub.f32 %v738, 0.13877685
  %v743 = vsub.f32 %v739, 0.13877685
  %v744 = vsub.f32 %v740, 0.13877685
  %v745 = vmul.f32 %v741, %v733
  %v746 = vmul.f32 %v742, %v734
  %v747 = vmul.f32 %v743, %v735
  %v748 = vmul.f32 %v744, %v736
  %v749 = vadd.f32 %v745, 0.19977711
  %v750 = vadd.f32 %v746, 0.19977711
  %v751 = vadd.f32 %v747, 0.19977711
  %v752 = vadd.f32 %v748, 0.19977711
  %v753 = vmul.f32 %v749, %v733
  %v754 = vmul.f32 %v750, %v734
  %v755 = vmul.f32 %v751, %v735
  %v756 = vmul.f32 %v752, %v736
  %v757 = vsub.f32 %v753, 0.3333295
  %v758 = vsub.f32 %v754, 0.3333295
  %v759 = vsub.f32 %v755, 0.3333295
  %v760 = vsub.f32 %v756, 0.3333295
  %v761 = vadd.f32 %v729, %v721
  %v762 = vadd.f32 %v730, %v722
  %v763 = vadd.f32 %v731, %v723
  %v764 = vadd.f32 %v732, %v724
  %v765 = vmul.f32 %v721, %v733
  %v766 = vmul.f32 %v722, %v734
  %v767 = vmul.f32 %v723, %v735
  %v768 = vmul.f32 %v724, %v736
  %v769 = vmul.f32 %v765, %v757
  %v770 = vmul.f32 %v766, %v758
  %v771 = vmul.f32 %v767, %v759
  %v772 = vmul.f32 %v768, %v760
  %v773 = vadd.f32 %v761, %v769
  %v774 = vadd.f32 %v762, %v770
  %v775 = vadd.f32 %v763, %v771
  %v776 = vadd.f32 %v764, %v772
  %vm777 = vcmp.lt.f32.partialorder %v673, 0.0
  %vm778 = vcmp.lt.f32.partialorder %v674, 0.0
  %vm779 = vcmp.lt.f32.partialorder %v675, 0.0
  %vm780 = vcmp.lt.f32.partialorder %v676, 0.0
  %v781 = vsub.f32 0.0, %v773
  %v782 = vsub.f32 0.0, %v774
  %v783 = vsub.f32 0.0, %v775
  %v784 = vsub.f32 0.0, %v776
  %v785 = vsel %vm777, %v781, %v773
  %v786 = vsel %vm778, %v782, %v774
  %v787 = vsel %vm779, %v783, %v775
  %v788 = vsel %vm780, %v784, %v776
  %v789 = vpack.c.bf16 %v786, %v785
  %v790 = vpack.c.bf16 %v788, %v787
  %v791 = vmax.f32 %v785, -1.5607964
  %v792 = vmax.f32 %v786, -1.5607964
  %v793 = vmax.f32 %v787, -1.5607964
  %v794 = vmax.f32 %v788, -1.5607964
  %v795 = vmin.f32 %v791, 1.5607964
  %v796 = vmin.f32 %v792, 1.5607964
  %v797 = vmin.f32 %v793, 1.5607964
  %v798 = vmin.f32 %v794, 1.5607964
  %v799 = vmul.f32 %v795, %v795
  %v800 = vmul.f32 %v796, %v796
  %v801 = vmul.f32 %v797, %v797
  %v802 = vmul.f32 %v798, %v798
  %v803 = vmul.f32 %v799, -2.5052108e-08
  %v804 = vmul.f32 %v800, -2.5052108e-08
  %v805 = vmul.f32 %v801, -2.5052108e-08
  %v806 = vmul.f32 %v802, -2.5052108e-08
  %v807 = vadd.f32 %v803, 2.7557319e-06
  %v808 = vadd.f32 %v804, 2.7557319e-06
  %v809 = vadd.f32 %v805, 2.7557319e-06
  %v810 = vadd.f32 %v806, 2.7557319e-06
  %v811 = vmul.f32 %v799, %v807
  %v812 = vmul.f32 %v800, %v808
  %v813 = vmul.f32 %v801, %v809
  %v814 = vmul.f32 %v802, %v810
  %v815 = vadd.f32 %v811, -0.0001984127
  %v816 = vadd.f32 %v812, -0.0001984127
  %v817 = vadd.f32 %v813, -0.0001984127
  %v818 = vadd.f32 %v814, -0.0001984127
  %v819 = vmul.f32 %v799, %v815
  %v820 = vmul.f32 %v800, %v816
  %v821 = vmul.f32 %v801, %v817
  %v822 = vmul.f32 %v802, %v818
  %v823 = vadd.f32 %v819, 0.008333334
  %v824 = vadd.f32 %v820, 0.008333334
  %v825 = vadd.f32 %v821, 0.008333334
  %v826 = vadd.f32 %v822, 0.008333334
  %v827 = vmul.f32 %v799, %v823
  %v828 = vmul.f32 %v800, %v824
  %v829 = vmul.f32 %v801, %v825
  %v830 = vmul.f32 %v802, %v826
  %v831 = vadd.f32 %v827, -0.16666667
  %v832 = vadd.f32 %v828, -0.16666667
  %v833 = vadd.f32 %v829, -0.16666667
  %v834 = vadd.f32 %v830, -0.16666667
  %v835 = vmul.f32 %v799, %v831
  %v836 = vmul.f32 %v800, %v832
  %v837 = vmul.f32 %v801, %v833
  %v838 = vmul.f32 %v802, %v834
  %v839 = vadd.f32 %v835, 1.0
  %v840 = vadd.f32 %v836, 1.0
  %v841 = vadd.f32 %v837, 1.0
  %v842 = vadd.f32 %v838, 1.0
  %v843 = vmul.f32 %v795, %v839
  %v844 = vmul.f32 %v796, %v840
  %v845 = vmul.f32 %v797, %v841
  %v846 = vmul.f32 %v798, %v842
  %v847 = vmul.f32 %v799, 2.0876756e-09
  %v848 = vmul.f32 %v800, 2.0876756e-09
  %v849 = vmul.f32 %v801, 2.0876756e-09
  %v850 = vmul.f32 %v802, 2.0876756e-09
  %v851 = vadd.f32 %v847, -2.755732e-07
  %v852 = vadd.f32 %v848, -2.755732e-07
  %v853 = vadd.f32 %v849, -2.755732e-07
  %v854 = vadd.f32 %v850, -2.755732e-07
  %v855 = vmul.f32 %v799, %v851
  %v856 = vmul.f32 %v800, %v852
  %v857 = vmul.f32 %v801, %v853
  %v858 = vmul.f32 %v802, %v854
  %v859 = vadd.f32 %v855, 2.4801588e-05
  %v860 = vadd.f32 %v856, 2.4801588e-05
  %v861 = vadd.f32 %v857, 2.4801588e-05
  %v862 = vadd.f32 %v858, 2.4801588e-05
  %v863 = vmul.f32 %v799, %v859
  %v864 = vmul.f32 %v800, %v860
  %v865 = vmul.f32 %v801, %v861
  %v866 = vmul.f32 %v802, %v862
  %v867 = vadd.f32 %v863, -0.0013888889
  %v868 = vadd.f32 %v864, -0.0013888889
  %v869 = vadd.f32 %v865, -0.0013888889
  %v870 = vadd.f32 %v866, -0.0013888889
  %v871 = vmul.f32 %v799, %v867
  %v872 = vmul.f32 %v800, %v868
  %v873 = vmul.f32 %v801, %v869
  %v874 = vmul.f32 %v802, %v870
  %v875 = vadd.f32 %v871, 0.041666668
  %v876 = vadd.f32 %v872, 0.041666668
  %v877 = vadd.f32 %v873, 0.041666668
  %v878 = vadd.f32 %v874, 0.041666668
  %v879 = vmul.f32 %v799, %v875
  %v880 = vmul.f32 %v800, %v876
  %v881 = vmul.f32 %v801, %v877
  %v882 = vmul.f32 %v802, %v878
  %v883 = vadd.f32 %v879, -0.5
  %v884 = vadd.f32 %v880, -0.5
  %v885 = vadd.f32 %v881, -0.5
  %v886 = vadd.f32 %v882, -0.5
  %v887 = vmul.f32 %v799, %v883
  %v888 = vmul.f32 %v800, %v884
  %v889 = vmul.f32 %v801, %v885
  %v890 = vmul.f32 %v802, %v886
  %v891 = vadd.f32 %v887, 1.0
  %v892 = vadd.f32 %v888, 1.0
  %v893 = vadd.f32 %v889, 1.0
  %v894 = vadd.f32 %v890, 1.0
  %v895 = vrcp.pop %v891
  %v896 = vrcp.pop %v892
  %v897 = vrcp.pop %v893
  %v898 = vrcp.pop %v894
  %v899 = vmul.f32 %v843, %v895
  %v900 = vmul.f32 %v844, %v896
  %v901 = vmul.f32 %v845, %v897
  %v902 = vmul.f32 %v846, %v898
  %903 = vrot.lane.b32.xlu0 %v35, 80
  %v904 = vpop.permute.xlu0 %903
  %v907 = vsel %vm37, %v789, 0
  %v910 = vsel %vm37, %v790, 0
  %912 = vmatprep.subr.bf16.mxu0 0
  %913 = vmatpush1.bf16.msra.mxu0 %v904
  %914 = vmatprep.subr.bf16.mxu0 0
  %915 = vmatpush1.bf16.msra.mxu0 0
  %916 = vmatprep.subr.bf16.mxu0 0
  %917 = vmatpush1.bf16.msra.mxu0 0
  %918 = vmatprep.subr.bf16.mxu0 0
  %919 = vmatpush1.bf16.msra.mxu0 0
  %920 = vmatprep.subr.bf16.mxu0 0
  %921 = vmatpush1.bf16.msra.mxu0 0
  %922 = vmatprep.subr.bf16.mxu0 0
  %923 = vmatpush1.bf16.msra.mxu0 0
  %924 = vmatprep.subr.bf16.mxu0 0
  %925 = vmatpush1.bf16.msra.mxu0 0
  %926 = vmatprep.subr.bf16.mxu0 0
  %927 = vmatpush1.bf16.msra.mxu0 0
  %928 = vmatprep.subr.bf16.mxu0 0
  %929 = vmatpush1.bf16.msra.mxu0 0
  %930 = vmatprep.subr.bf16.mxu0 0
  %931 = vmatpush1.bf16.msra.mxu0 0
  %932 = vmatprep.subr.bf16.mxu0 0
  %933 = vmatpush1.bf16.msra.mxu0 0
  %934 = vmatprep.subr.bf16.mxu0 0
  %935 = vmatpush1.bf16.msra.mxu0 0
  %936 = vmatprep.subr.bf16.mxu0 0
  %937 = vmatpush1.bf16.msra.mxu0 0
  %938 = vmatprep.subr.bf16.mxu0 0
  %939 = vmatpush1.bf16.msra.mxu0 0
  %940 = vmatprep.subr.bf16.mxu0 0
  %941 = vmatpush1.bf16.msra.mxu0 0
  %942 = vmatprep.subr.bf16.mxu0 0
  %943 = vmatpush1.bf16.msra.mxu0 0
  %944 = vmatprep.mubr.bf16.mxu0 0
  %945 = vmatmul.mubr.bf16.gmra.mrb[0].mxu0 %v907
  %v946 = vpop.f32.mrb[0].mxu0
  %v947 = vadd.f32 0.0, %v946
  %v948 = vpop.f32.mrb[0].mxu0
  %v949 = vpop.f32.mrb[0].mxu0
  %v950 = vadd.f32 0.0, %v949
  %v951 = vpop.f32.mrb[0].mxu0
  %952 = vmatprep.mubr.bf16.mxu0 0
  %953 = vmatmul.mubr.bf16.gmra.mrb[0].mxu0 %v910
  %v954 = vpop.f32.mrb[0].mxu0
  %v955 = vadd.f32 0.0, %v954
  %v956 = vpop.f32.mrb[0].mxu0
  %v957 = vpop.f32.mrb[0].mxu0
  %v958 = vadd.f32 0.0, %v957
  %v959 = vpop.f32.mrb[0].mxu0
  %960 = vdwg.mxu0
  %v961 = vpack.c.bf16 %v950, %v947
  %v962 = vpack.c.bf16 %v958, %v955
  %963 = vrot.lane.b32.xlu0 %v263, 96
  %v964 = vpop.permute.xlu0 %963
  %966 = vmatprep.subr.bf16.mxu0 0
  %967 = vmatpush1.bf16.msra.mxu0 %v961
  %968 = vmatprep.subr.bf16.mxu0 0
  %969 = vmatpush1.bf16.msra.mxu0 %v962
  %970 = vmatprep.subr.bf16.mxu0 0
  %971 = vmatpush1.bf16.msra.mxu0 0
  %972 = vmatprep.subr.bf16.mxu0 0
  %973 = vmatpush1.bf16.msra.mxu0 0
  %974 = vmatprep.subr.bf16.mxu0 0
  %975 = vmatpush1.bf16.msra.mxu0 0
  %976 = vmatprep.subr.bf16.mxu0 0
  %977 = vmatpush1.bf16.msra.mxu0 0
  %978 = vmatprep.subr.bf16.mxu0 0
  %979 = vmatpush1.bf16.msra.mxu0 0
  %980 = vmatprep.subr.bf16.mxu0 0
  %981 = vmatpush1.bf16.msra.mxu0 0
  %982 = vmatprep.subr.bf16.mxu0 0
  %983 = vmatpush1.bf16.msra.mxu0 0
  %984 = vmatprep.subr.bf16.mxu0 0
  %985 = vmatpush1.bf16.msra.mxu0 0
  %986 = vmatprep.subr.bf16.mxu0 0
  %987 = vmatpush1.bf16.msra.mxu0 0
  %988 = vmatprep.subr.bf16.mxu0 0
  %989 = vmatpush1.bf16.msra.mxu0 0
  %990 = vmatprep.subr.bf16.mxu0 0
  %991 = vmatpush1.bf16.msra.mxu0 0
  %992 = vmatprep.subr.bf16.mxu0 0
  %993 = vmatpush1.bf16.msra.mxu0 0
  %994 = vmatprep.subr.bf16.mxu0 0
  %995 = vmatpush1.bf16.msra.mxu0 0
  %996 = vmatprep.subr.bf16.mxu0 0
  %997 = vmatpush1.bf16.msra.mxu0 0
  %998 = vmatprep.mubr.bf16.mxu0 0
  %999 = vmatmul.mubr.bf16.gmra.mrb[0].mxu0 %v277
  %v1000 = vpop.f32.mrb[0].mxu0
  %v1001 = vadd.f32 %v964, %v1000
  %v1002 = vpop.f32.mrb[0].mxu0
  %v1003 = vpop.f32.mrb[0].mxu0
  %v1004 = vadd.f32 %v964, %v1003
  %v1005 = vpop.f32.mrb[0].mxu0
  %1006 = vmatprep.mubr.bf16.mxu0 0
  %1007 = vmatmul.mubr.bf16.gmra.mrb[0].mxu0 %v280
  %v1008 = vpop.f32.mrb[0].mxu0
  %v1009 = vadd.f32 %v964, %v1008
  %v1010 = vpop.f32.mrb[0].mxu0
  %v1011 = vpop.f32.mrb[0].mxu0
  %v1012 = vadd.f32 %v964, %v1011
  %v1013 = vpop.f32.mrb[0].mxu0
  %1014 = vdwg.mxu0
  %v1015 = vadd.f32 %v899, %v1001
  %v1016 = vadd.f32 %v900, %v1004
  %v1017 = vadd.f32 %v901, %v1009
  %v1018 = vadd.f32 %v902, %v1012
  %v1019 = vand.u32 2147483647, %v1015
  %v1020 = vand.u32 2147483647, %v1016
  %v1021 = vand.u32 2147483647, %v1017
  %v1022 = vand.u32 2147483647, %v1018
  %vm1023 = vcmp.gt.f32.partialorder %v1019, 2.4142137
  %vm1024 = vcmp.gt.f32.partialorder %v1020, 2.4142137
  %vm1025 = vcmp.gt.f32.partialorder %v1021, 2.4142137
  %vm1026 = vcmp.gt.f32.partialorder %v1022, 2.4142137
  %vm1027 = vcmp.gt.f32.partialorder %v1019, 0.41421357
  %vm1028 = vcmp.gt.f32.partialorder %v1020, 0.41421357
  %vm1029 = vcmp.gt.f32.partialorder %v1021, 0.41421357
  %vm1030 = vcmp.gt.f32.partialorder %v1022, 0.41421357
  %v1031 = vmax.f32 %v1019, 1.0
  %v1032 = vmax.f32 %v1020, 1.0
  %v1033 = vmax.f32 %v1021, 1.0
  %v1034 = vmax.f32 %v1022, 1.0
  %v1035 = vrcp.pop %v1031
  %v1036 = vrcp.pop %v1032
  %v1037 = vrcp.pop %v1033
  %v1038 = vrcp.pop %v1034
  %v1039 = vsub.f32 0.0, %v1035
  %v1040 = vsub.f32 0.0, %v1036
  %v1041 = vsub.f32 0.0, %v1037
  %v1042 = vsub.f32 0.0, %v1038
  %v1043 = vsub.f32 %v1019, 1.0
  %v1044 = vsub.f32 %v1020, 1.0
  %v1045 = vsub.f32 %v1021, 1.0
  %v1046 = vsub.f32 %v1022, 1.0
  %v1047 = vadd.f32 %v1019, 1.0
  %v1048 = vadd.f32 %v1020, 1.0
  %v1049 = vadd.f32 %v1021, 1.0
  %v1050 = vadd.f32 %v1022, 1.0
  %v1051 = vrcp.pop %v1047
  %v1052 = vrcp.pop %v1048
  %v1053 = vrcp.pop %v1049
  %v1054 = vrcp.pop %v1050
  %v1055 = vmul.f32 %v1043, %v1051
  %v1056 = vmul.f32 %v1044, %v1052
  %v1057 = vmul.f32 %v1045, %v1053
  %v1058 = vmul.f32 %v1046, %v1054
  %v1059 = vsel %vm1027, %v1055, %v1019
  %v1060 = vsel %vm1028, %v1056, %v1020
  %v1061 = vsel %vm1029, %v1057, %v1021
  %v1062 = vsel %vm1030, %v1058, %v1022
  %v1063 = vsel %vm1023, %v1039, %v1059
  %v1064 = vsel %vm1024, %v1040, %v1060
  %v1065 = vsel %vm1025, %v1041, %v1061
  %v1066 = vsel %vm1026, %v1042, %v1062
  %v1067 = vsel %vm1027, 0.7853982, 0.0
  %v1068 = vsel %vm1028, 0.7853982, 0.0
  %v1069 = vsel %vm1029, 0.7853982, 0.0
  %v1070 = vsel %vm1030, 0.7853982, 0.0
  %v1071 = vsel %vm1023, 1.5707964, %v1067
  %v1072 = vsel %vm1024, 1.5707964, %v1068
  %v1073 = vsel %vm1025, 1.5707964, %v1069
  %v1074 = vsel %vm1026, 1.5707964, %v1070
  %v1075 = vmul.f32 %v1063, %v1063
  %v1076 = vmul.f32 %v1064, %v1064
  %v1077 = vmul.f32 %v1065, %v1065
  %v1078 = vmul.f32 %v1066, %v1066
  %v1079 = vmul.f32 %v1075, 0.080537446
  %v1080 = vmul.f32 %v1076, 0.080537446
  %v1081 = vmul.f32 %v1077, 0.080537446
  %v1082 = vmul.f32 %v1078, 0.080537446
  %v1083 = vsub.f32 %v1079, 0.13877685
  %v1084 = vsub.f32 %v1080, 0.13877685
  %v1085 = vsub.f32 %v1081, 0.13877685
  %v1086 = vsub.f32 %v1082, 0.13877685
  %v1087 = vmul.f32 %v1083, %v1075
  %v1088 = vmul.f32 %v1084, %v1076
  %v1089 = vmul.f32 %v1085, %v1077
  %v1090 = vmul.f32 %v1086, %v1078
  %v1091 = vadd.f32 %v1087, 0.19977711
  %v1092 = vadd.f32 %v1088, 0.19977711
  %v1093 = vadd.f32 %v1089, 0.19977711
  %v1094 = vadd.f32 %v1090, 0.19977711
  %v1095 = vmul.f32 %v1091, %v1075
  %v1096 = vmul.f32 %v1092, %v1076
  %v1097 = vmul.f32 %v1093, %v1077
  %v1098 = vmul.f32 %v1094, %v1078
  %v1099 = vsub.f32 %v1095, 0.3333295
  %v1100 = vsub.f32 %v1096, 0.3333295
  %v1101 = vsub.f32 %v1097, 0.3333295
  %v1102 = vsub.f32 %v1098, 0.3333295
  %v1103 = vadd.f32 %v1071, %v1063
  %v1104 = vadd.f32 %v1072, %v1064
  %v1105 = vadd.f32 %v1073, %v1065
  %v1106 = vadd.f32 %v1074, %v1066
  %v1107 = vmul.f32 %v1063, %v1075
  %v1108 = vmul.f32 %v1064, %v1076
  %v1109 = vmul.f32 %v1065, %v1077
  %v1110 = vmul.f32 %v1066, %v1078
  %v1111 = vmul.f32 %v1107, %v1099
  %v1112 = vmul.f32 %v1108, %v1100
  %v1113 = vmul.f32 %v1109, %v1101
  %v1114 = vmul.f32 %v1110, %v1102
  %v1115 = vadd.f32 %v1103, %v1111
  %v1116 = vadd.f32 %v1104, %v1112
  %v1117 = vadd.f32 %v1105, %v1113
  %v1118 = vadd.f32 %v1106, %v1114
  %vm1119 = vcmp.lt.f32.partialorder %v1015, 0.0
  %vm1120 = vcmp.lt.f32.partialorder %v1016, 0.0
  %vm1121 = vcmp.lt.f32.partialorder %v1017, 0.0
  %vm1122 = vcmp.lt.f32.partialorder %v1018, 0.0
  %v1123 = vsub.f32 0.0, %v1115
  %v1124 = vsub.f32 0.0, %v1116
  %v1125 = vsub.f32 0.0, %v1117
  %v1126 = vsub.f32 0.0, %v1118
  %v1127 = vsel %vm1119, %v1123, %v1115
  %v1128 = vsel %vm1120, %v1124, %v1116
  %v1129 = vsel %vm1121, %v1125, %v1117
  %v1130 = vsel %vm1122, %v1126, %v1118
  %v1131 = vpack.c.bf16 %v1128, %v1127
  %v1132 = vpack.c.bf16 %v1130, %v1129
  %v1133 = vmax.f32 %v1127, -1.5607964
  %v1134 = vmax.f32 %v1128, -1.5607964
  %v1135 = vmax.f32 %v1129, -1.5607964
  %v1136 = vmax.f32 %v1130, -1.5607964
  %v1137 = vmin.f32 %v1133, 1.5607964
  %v1138 = vmin.f32 %v1134, 1.5607964
  %v1139 = vmin.f32 %v1135, 1.5607964
  %v1140 = vmin.f32 %v1136, 1.5607964
  %v1141 = vmul.f32 %v1137, %v1137
  %v1142 = vmul.f32 %v1138, %v1138
  %v1143 = vmul.f32 %v1139, %v1139
  %v1144 = vmul.f32 %v1140, %v1140
  %v1145 = vmul.f32 %v1141, -2.5052108e-08
  %v1146 = vmul.f32 %v1142, -2.5052108e-08
  %v1147 = vmul.f32 %v1143, -2.5052108e-08
  %v1148 = vmul.f32 %v1144, -2.5052108e-08
  %v1149 = vadd.f32 %v1145, 2.7557319e-06
  %v1150 = vadd.f32 %v1146, 2.7557319e-06
  %v1151 = vadd.f32 %v1147, 2.7557319e-06
  %v1152 = vadd.f32 %v1148, 2.7557319e-06
  %v1153 = vmul.f32 %v1141, %v1149
  %v1154 = vmul.f32 %v1142, %v1150
  %v1155 = vmul.f32 %v1143, %v1151
  %v1156 = vmul.f32 %v1144, %v1152
  %v1157 = vadd.f32 %v1153, -0.0001984127
  %v1158 = vadd.f32 %v1154, -0.0001984127
  %v1159 = vadd.f32 %v1155, -0.0001984127
  %v1160 = vadd.f32 %v1156, -0.0001984127
  %v1161 = vmul.f32 %v1141, %v1157
  %v1162 = vmul.f32 %v1142, %v1158
  %v1163 = vmul.f32 %v1143, %v1159
  %v1164 = vmul.f32 %v1144, %v1160
  %v1165 = vadd.f32 %v1161, 0.008333334
  %v1166 = vadd.f32 %v1162, 0.008333334
  %v1167 = vadd.f32 %v1163, 0.008333334
  %v1168 = vadd.f32 %v1164, 0.008333334
  %v1169 = vmul.f32 %v1141, %v1165
  %v1170 = vmul.f32 %v1142, %v1166
  %v1171 = vmul.f32 %v1143, %v1167
  %v1172 = vmul.f32 %v1144, %v1168
  %v1173 = vadd.f32 %v1169, -0.16666667
  %v1174 = vadd.f32 %v1170, -0.16666667
  %v1175 = vadd.f32 %v1171, -0.16666667
  %v1176 = vadd.f32 %v1172, -0.16666667
  %v1177 = vmul.f32 %v1141, %v1173
  %v1178 = vmul.f32 %v1142, %v1174
  %v1179 = vmul.f32 %v1143, %v1175
  %v1180 = vmul.f32 %v1144, %v1176
  %v1181 = vadd.f32 %v1177, 1.0
  %v1182 = vadd.f32 %v1178, 1.0
  %v1183 = vadd.f32 %v1179, 1.0
  %v1184 = vadd.f32 %v1180, 1.0
  %v1185 = vmul.f32 %v1137, %v1181
  %v1186 = vmul.f32 %v1138, %v1182
  %v1187 = vmul.f32 %v1139, %v1183
  %v1188 = vmul.f32 %v1140, %v1184
  %v1189 = vmul.f32 %v1141, 2.0876756e-09
  %v1190 = vmul.f32 %v1142, 2.0876756e-09
  %v1191 = vmul.f32 %v1143, 2.0876756e-09
  %v1192 = vmul.f32 %v1144, 2.0876756e-09
  %v1193 = vadd.f32 %v1189, -2.755732e-07
  %v1194 = vadd.f32 %v1190, -2.755732e-07
  %v1195 = vadd.f32 %v1191, -2.755732e-07
  %v1196 = vadd.f32 %v1192, -2.755732e-07
  %v1197 = vmul.f32 %v1141, %v1193
  %v1198 = vmul.f32 %v1142, %v1194
  %v1199 = vmul.f32 %v1143, %v1195
  %v1200 = vmul.f32 %v1144, %v1196
  %v1201 = vadd.f32 %v1197, 2.4801588e-05
  %v1202 = vadd.f32 %v1198, 2.4801588e-05
  %v1203 = vadd.f32 %v1199, 2.4801588e-05
  %v1204 = vadd.f32 %v1200, 2.4801588e-05
  %v1205 = vmul.f32 %v1141, %v1201
  %v1206 = vmul.f32 %v1142, %v1202
  %v1207 = vmul.f32 %v1143, %v1203
  %v1208 = vmul.f32 %v1144, %v1204
  %v1209 = vadd.f32 %v1205, -0.0013888889
  %v1210 = vadd.f32 %v1206, -0.0013888889
  %v1211 = vadd.f32 %v1207, -0.0013888889
  %v1212 = vadd.f32 %v1208, -0.0013888889
  %v1213 = vmul.f32 %v1141, %v1209
  %v1214 = vmul.f32 %v1142, %v1210
  %v1215 = vmul.f32 %v1143, %v1211
  %v1216 = vmul.f32 %v1144, %v1212
  %v1217 = vadd.f32 %v1213, 0.041666668
  %v1218 = vadd.f32 %v1214, 0.041666668
  %v1219 = vadd.f32 %v1215, 0.041666668
  %v1220 = vadd.f32 %v1216, 0.041666668
  %v1221 = vmul.f32 %v1141, %v1217
  %v1222 = vmul.f32 %v1142, %v1218
  %v1223 = vmul.f32 %v1143, %v1219
  %v1224 = vmul.f32 %v1144, %v1220
  %v1225 = vadd.f32 %v1221, -0.5
  %v1226 = vadd.f32 %v1222, -0.5
  %v1227 = vadd.f32 %v1223, -0.5
  %v1228 = vadd.f32 %v1224, -0.5
  %v1229 = vmul.f32 %v1141, %v1225
  %v1230 = vmul.f32 %v1142, %v1226
  %v1231 = vmul.f32 %v1143, %v1227
  %v1232 = vmul.f32 %v1144, %v1228
  %v1233 = vadd.f32 %v1229, 1.0
  %v1234 = vadd.f32 %v1230, 1.0
  %v1235 = vadd.f32 %v1231, 1.0
  %v1236 = vadd.f32 %v1232, 1.0
  %v1237 = vrcp.pop %v1233
  %v1238 = vrcp.pop %v1234
  %v1239 = vrcp.pop %v1235
  %v1240 = vrcp.pop %v1236
  %v1241 = vmul.f32 %v1185, %v1237
  %v1242 = vmul.f32 %v1186, %v1238
  %v1243 = vmul.f32 %v1187, %v1239
  %v1244 = vmul.f32 %v1188, %v1240
  %1245 = vrot.lane.b32.xlu0 %v35, 64
  %v1246 = vpop.permute.xlu0 %1245
  %v1249 = vsel %vm37, %v1131, 0
  %v1252 = vsel %vm37, %v1132, 0
  %1254 = vmatprep.subr.bf16.mxu0 0
  %1255 = vmatpush1.bf16.msra.mxu0 %v1246
  %1256 = vmatprep.subr.bf16.mxu0 0
  %1257 = vmatpush1.bf16.msra.mxu0 0
  %1258 = vmatprep.subr.bf16.mxu0 0
  %1259 = vmatpush1.bf16.msra.mxu0 0
  %1260 = vmatprep.subr.bf16.mxu0 0
  %1261 = vmatpush1.bf16.msra.mxu0 0
  %1262 = vmatprep.subr.bf16.mxu0 0
  %1263 = vmatpush1.bf16.msra.mxu0 0
  %1264 = vmatprep.subr.bf16.mxu0 0
  %1265 = vmatpush1.bf16.msra.mxu0 0
  %1266 = vmatprep.subr.bf16.mxu0 0
  %1267 = vmatpush1.bf16.msra.mxu0 0
  %1268 = vmatprep.subr.bf16.mxu0 0
  %1269 = vmatpush1.bf16.msra.mxu0 0
  %1270 = vmatprep.subr.bf16.mxu0 0
  %1271 = vmatpush1.bf16.msra.mxu0 0
  %1272 = vmatprep.subr.bf16.mxu0 0
  %1273 = vmatpush1.bf16.msra.mxu0 0
  %1274 = vmatprep.subr.bf16.mxu0 0
  %1275 = vmatpush1.bf16.msra.mxu0 0
  %1276 = vmatprep.subr.bf16.mxu0 0
  %1277 = vmatpush1.bf16.msra.mxu0 0
  %1278 = vmatprep.subr.bf16.mxu0 0
  %1279 = vmatpush1.bf16.msra.mxu0 0
  %1280 = vmatprep.subr.bf16.mxu0 0
  %1281 = vmatpush1.bf16.msra.mxu0 0
  %1282 = vmatprep.subr.bf16.mxu0 0
  %1283 = vmatpush1.bf16.msra.mxu0 0
  %1284 = vmatprep.subr.bf16.mxu0 0
  %1285 = vmatpush1.bf16.msra.mxu0 0
  %1286 = vmatprep.mubr.bf16.mxu0 0
  %1287 = vmatmul.mubr.bf16.gmra.mrb[0].mxu0 %v1249
  %v1288 = vpop.f32.mrb[0].mxu0
  %v1289 = vadd.f32 0.0, %v1288
  %v1290 = vpop.f32.mrb[0].mxu0
  %v1291 = vpop.f32.mrb[0].mxu0
  %v1292 = vadd.f32 0.0, %v1291
  %v1293 = vpop.f32.mrb[0].mxu0
  %1294 = vmatprep.mubr.bf16.mxu0 0
  %1295 = vmatmul.mubr.bf16.gmra.mrb[0].mxu0 %v1252
  %v1296 = vpop.f32.mrb[0].mxu0
  %v1297 = vadd.f32 0.0, %v1296
  %v1298 = vpop.f32.mrb[0].mxu0
  %v1299 = vpop.f32.mrb[0].mxu0
  %v1300 = vadd.f32 0.0, %v1299
  %v1301 = vpop.f32.mrb[0].mxu0
  %1302 = vdwg.mxu0
  %v1303 = vpack.c.bf16 %v1292, %v1289
  %v1304 = vpack.c.bf16 %v1300, %v1297
  %1305 = vrot.lane.b32.xlu0 %v263, 80
  %v1306 = vpop.permute.xlu0 %1305
  %1308 = vmatprep.subr.bf16.mxu0 0
  %1309 = vmatpush1.bf16.msra.mxu0 %v1303
  %1310 = vmatprep.subr.bf16.mxu0 0
  %1311 = vmatpush1.bf16.msra.mxu0 %v1304
  %1312 = vmatprep.subr.bf16.mxu0 0
  %1313 = vmatpush1.bf16.msra.mxu0 0
  %1314 = vmatprep.subr.bf16.mxu0 0
  %1315 = vmatpush1.bf16.msra.mxu0 0
  %1316 = vmatprep.subr.bf16.mxu0 0
  %1317 = vmatpush1.bf16.msra.mxu0 0
  %1318 = vmatprep.subr.bf16.mxu0 0
  %1319 = vmatpush1.bf16.msra.mxu0 0
  %1320 = vmatprep.subr.bf16.mxu0 0
  %1321 = vmatpush1.bf16.msra.mxu0 0
  %1322 = vmatprep.subr.bf16.mxu0 0
  %1323 = vmatpush1.bf16.msra.mxu0 0
  %1324 = vmatprep.subr.bf16.mxu0 0
  %1325 = vmatpush1.bf16.msra.mxu0 0
  %1326 = vmatprep.subr.bf16.mxu0 0
  %1327 = vmatpush1.bf16.msra.mxu0 0
  %1328 = vmatprep.subr.bf16.mxu0 0
  %1329 = vmatpush1.bf16.msra.mxu0 0
  %1330 = vmatprep.subr.bf16.mxu0 0
  %1331 = vmatpush1.bf16.msra.mxu0 0
  %1332 = vmatprep.subr.bf16.mxu0 0
  %1333 = vmatpush1.bf16.msra.mxu0 0
  %1334 = vmatprep.subr.bf16.mxu0 0
  %1335 = vmatpush1.bf16.msra.mxu0 0
  %1336 = vmatprep.subr.bf16.mxu0 0
  %1337 = vmatpush1.bf16.msra.mxu0 0
  %1338 = vmatprep.subr.bf16.mxu0 0
  %1339 = vmatpush1.bf16.msra.mxu0 0
  %1340 = vmatprep.mubr.bf16.mxu0 0
  %1341 = vmatmul.mubr.bf16.gmra.mrb[0].mxu0 %v277
  %v1342 = vpop.f32.mrb[0].mxu0
  %v1343 = vadd.f32 %v1306, %v1342
  %v1344 = vpop.f32.mrb[0].mxu0
  %v1345 = vpop.f32.mrb[0].mxu0
  %v1346 = vadd.f32 %v1306, %v1345
  %v1347 = vpop.f32.mrb[0].mxu0
  %1348 = vmatprep.mubr.bf16.mxu0 0
  %1349 = vmatmul.mubr.bf16.gmra.mrb[0].mxu0 %v280
  %v1350 = vpop.f32.mrb[0].mxu0
  %v1351 = vadd.f32 %v1306, %v1350
  %v1352 = vpop.f32.mrb[0].mxu0
  %v1353 = vpop.f32.mrb[0].mxu0
  %v1354 = vadd.f32 %v1306, %v1353
  %v1355 = vpop.f32.mrb[0].mxu0
  %1356 = vdwg.mxu0
  %v1357 = vadd.f32 %v1241, %v1343
  %v1358 = vadd.f32 %v1242, %v1346
  %v1359 = vadd.f32 %v1243, %v1351
  %v1360 = vadd.f32 %v1244, %v1354
  %v1361 = vand.u32 2147483647, %v1357
  %v1362 = vand.u32 2147483647, %v1358
  %v1363 = vand.u32 2147483647, %v1359
  %v1364 = vand.u32 2147483647, %v1360
  %vm1365 = vcmp.gt.f32.partialorder %v1361, 2.4142137
  %vm1366 = vcmp.gt.f32.partialorder %v1362, 2.4142137
  %vm1367 = vcmp.gt.f32.partialorder %v1363, 2.4142137
  %vm1368 = vcmp.gt.f32.partialorder %v1364, 2.4142137
  %vm1369 = vcmp.gt.f32.partialorder %v1361, 0.41421357
  %vm1370 = vcmp.gt.f32.partialorder %v1362, 0.41421357
  %vm1371 = vcmp.gt.f32.partialorder %v1363, 0.41421357
  %vm1372 = vcmp.gt.f32.partialorder %v1364, 0.41421357
  %v1373 = vmax.f32 %v1361, 1.0
  %v1374 = vmax.f32 %v1362, 1.0
  %v1375 = vmax.f32 %v1363, 1.0
  %v1376 = vmax.f32 %v1364, 1.0
  %v1377 = vrcp.pop %v1373
  %v1378 = vrcp.pop %v1374
  %v1379 = vrcp.pop %v1375
  %v1380 = vrcp.pop %v1376
  %v1381 = vsub.f32 0.0, %v1377
  %v1382 = vsub.f32 0.0, %v1378
  %v1383 = vsub.f32 0.0, %v1379
  %v1384 = vsub.f32 0.0, %v1380
  %v1385 = vsub.f32 %v1361, 1.0
  %v1386 = vsub.f32 %v1362, 1.0
  %v1387 = vsub.f32 %v1363, 1.0
  %v1388 = vsub.f32 %v1364, 1.0
  %v1389 = vadd.f32 %v1361, 1.0
  %v1390 = vadd.f32 %v1362, 1.0
  %v1391 = vadd.f32 %v1363, 1.0
  %v1392 = vadd.f32 %v1364, 1.0
  %v1393 = vrcp.pop %v1389
  %v1394 = vrcp.pop %v1390
  %v1395 = vrcp.pop %v1391
  %v1396 = vrcp.pop %v1392
  %v1397 = vmul.f32 %v1385, %v1393
  %v1398 = vmul.f32 %v1386, %v1394
  %v1399 = vmul.f32 %v1387, %v1395
  %v1400 = vmul.f32 %v1388, %v1396
  %v1401 = vsel %vm1369, %v1397, %v1361
  %v1402 = vsel %vm1370, %v1398, %v1362
  %v1403 = vsel %vm1371, %v1399, %v1363
  %v1404 = vsel %vm1372, %v1400, %v1364
  %v1405 = vsel %vm1365, %v1381, %v1401
  %v1406 = vsel %vm1366, %v1382, %v1402
  %v1407 = vsel %vm1367, %v1383, %v1403
  %v1408 = vsel %vm1368, %v1384, %v1404
  %v1409 = vsel %vm1369, 0.7853982, 0.0
  %v1410 = vsel %vm1370, 0.7853982, 0.0
  %v1411 = vsel %vm1371, 0.7853982, 0.0
  %v1412 = vsel %vm1372, 0.7853982, 0.0
  %v1413 = vsel %vm1365, 1.5707964, %v1409
  %v1414 = vsel %vm1366, 1.5707964, %v1410
  %v1415 = vsel %vm1367, 1.5707964, %v1411
  %v1416 = vsel %vm1368, 1.5707964, %v1412
  %v1417 = vmul.f32 %v1405, %v1405
  %v1418 = vmul.f32 %v1406, %v1406
  %v1419 = vmul.f32 %v1407, %v1407
  %v1420 = vmul.f32 %v1408, %v1408
  %v1421 = vmul.f32 %v1417, 0.080537446
  %v1422 = vmul.f32 %v1418, 0.080537446
  %v1423 = vmul.f32 %v1419, 0.080537446
  %v1424 = vmul.f32 %v1420, 0.080537446
  %v1425 = vsub.f32 %v1421, 0.13877685
  %v1426 = vsub.f32 %v1422, 0.13877685
  %v1427 = vsub.f32 %v1423, 0.13877685
  %v1428 = vsub.f32 %v1424, 0.13877685
  %v1429 = vmul.f32 %v1425, %v1417
  %v1430 = vmul.f32 %v1426, %v1418
  %v1431 = vmul.f32 %v1427, %v1419
  %v1432 = vmul.f32 %v1428, %v1420
  %v1433 = vadd.f32 %v1429, 0.19977711
  %v1434 = vadd.f32 %v1430, 0.19977711
  %v1435 = vadd.f32 %v1431, 0.19977711
  %v1436 = vadd.f32 %v1432, 0.19977711
  %v1437 = vmul.f32 %v1433, %v1417
  %v1438 = vmul.f32 %v1434, %v1418
  %v1439 = vmul.f32 %v1435, %v1419
  %v1440 = vmul.f32 %v1436, %v1420
  %v1441 = vsub.f32 %v1437, 0.3333295
  %v1442 = vsub.f32 %v1438, 0.3333295
  %v1443 = vsub.f32 %v1439, 0.3333295
  %v1444 = vsub.f32 %v1440, 0.3333295
  %v1445 = vadd.f32 %v1413, %v1405
  %v1446 = vadd.f32 %v1414, %v1406
  %v1447 = vadd.f32 %v1415, %v1407
  %v1448 = vadd.f32 %v1416, %v1408
  %v1449 = vmul.f32 %v1405, %v1417
  %v1450 = vmul.f32 %v1406, %v1418
  %v1451 = vmul.f32 %v1407, %v1419
  %v1452 = vmul.f32 %v1408, %v1420
  %v1453 = vmul.f32 %v1449, %v1441
  %v1454 = vmul.f32 %v1450, %v1442
  %v1455 = vmul.f32 %v1451, %v1443
  %v1456 = vmul.f32 %v1452, %v1444
  %v1457 = vadd.f32 %v1445, %v1453
  %v1458 = vadd.f32 %v1446, %v1454
  %v1459 = vadd.f32 %v1447, %v1455
  %v1460 = vadd.f32 %v1448, %v1456
  %vm1461 = vcmp.lt.f32.partialorder %v1357, 0.0
  %vm1462 = vcmp.lt.f32.partialorder %v1358, 0.0
  %vm1463 = vcmp.lt.f32.partialorder %v1359, 0.0
  %vm1464 = vcmp.lt.f32.partialorder %v1360, 0.0
  %v1465 = vsub.f32 0.0, %v1457
  %v1466 = vsub.f32 0.0, %v1458
  %v1467 = vsub.f32 0.0, %v1459
  %v1468 = vsub.f32 0.0, %v1460
  %v1469 = vsel %vm1461, %v1465, %v1457
  %v1470 = vsel %vm1462, %v1466, %v1458
  %v1471 = vsel %vm1463, %v1467, %v1459
  %v1472 = vsel %vm1464, %v1468, %v1460
  %v1473 = vpack.c.bf16 %v1470, %v1469
  %v1474 = vpack.c.bf16 %v1472, %v1471
  %v1475 = vmax.f32 %v1469, -1.5607964
  %v1476 = vmax.f32 %v1470, -1.5607964
  %v1477 = vmax.f32 %v1471, -1.5607964
  %v1478 = vmax.f32 %v1472, -1.5607964
  %v1479 = vmin.f32 %v1475, 1.5607964
  %v1480 = vmin.f32 %v1476, 1.5607964
  %v1481 = vmin.f32 %v1477, 1.5607964
  %v1482 = vmin.f32 %v1478, 1.5607964
  %v1483 = vmul.f32 %v1479, %v1479
  %v1484 = vmul.f32 %v1480, %v1480
  %v1485 = vmul.f32 %v1481, %v1481
  %v1486 = vmul.f32 %v1482, %v1482
  %v1487 = vmul.f32 %v1483, -2.5052108e-08
  %v1488 = vmul.f32 %v1484, -2.5052108e-08
  %v1489 = vmul.f32 %v1485, -2.5052108e-08
  %v1490 = vmul.f32 %v1486, -2.5052108e-08
  %v1491 = vadd.f32 %v1487, 2.7557319e-06
  %v1492 = vadd.f32 %v1488, 2.7557319e-06
  %v1493 = vadd.f32 %v1489, 2.7557319e-06
  %v1494 = vadd.f32 %v1490, 2.7557319e-06
  %v1495 = vmul.f32 %v1483, %v1491
  %v1496 = vmul.f32 %v1484, %v1492
  %v1497 = vmul.f32 %v1485, %v1493
  %v1498 = vmul.f32 %v1486, %v1494
  %v1499 = vadd.f32 %v1495, -0.0001984127
  %v1500 = vadd.f32 %v1496, -0.0001984127
  %v1501 = vadd.f32 %v1497, -0.0001984127
  %v1502 = vadd.f32 %v1498, -0.0001984127
  %v1503 = vmul.f32 %v1483, %v1499
  %v1504 = vmul.f32 %v1484, %v1500
  %v1505 = vmul.f32 %v1485, %v1501
  %v1506 = vmul.f32 %v1486, %v1502
  %v1507 = vadd.f32 %v1503, 0.008333334
  %v1508 = vadd.f32 %v1504, 0.008333334
  %v1509 = vadd.f32 %v1505, 0.008333334
  %v1510 = vadd.f32 %v1506, 0.008333334
  %v1511 = vmul.f32 %v1483, %v1507
  %v1512 = vmul.f32 %v1484, %v1508
  %v1513 = vmul.f32 %v1485, %v1509
  %v1514 = vmul.f32 %v1486, %v1510
  %v1515 = vadd.f32 %v1511, -0.16666667
  %v1516 = vadd.f32 %v1512, -0.16666667
  %v1517 = vadd.f32 %v1513, -0.16666667
  %v1518 = vadd.f32 %v1514, -0.16666667
  %v1519 = vmul.f32 %v1483, %v1515
  %v1520 = vmul.f32 %v1484, %v1516
  %v1521 = vmul.f32 %v1485, %v1517
  %v1522 = vmul.f32 %v1486, %v1518
  %v1523 = vadd.f32 %v1519, 1.0
  %v1524 = vadd.f32 %v1520, 1.0
  %v1525 = vadd.f32 %v1521, 1.0
  %v1526 = vadd.f32 %v1522, 1.0
  %v1527 = vmul.f32 %v1479, %v1523
  %v1528 = vmul.f32 %v1480, %v1524
  %v1529 = vmul.f32 %v1481, %v1525
  %v1530 = vmul.f32 %v1482, %v1526
  %v1531 = vmul.f32 %v1483, 2.0876756e-09
  %v1532 = vmul.f32 %v1484, 2.0876756e-09
  %v1533 = vmul.f32 %v1485, 2.0876756e-09
  %v1534 = vmul.f32 %v1486, 2.0876756e-09
  %v1535 = vadd.f32 %v1531, -2.755732e-07
  %v1536 = vadd.f32 %v1532, -2.755732e-07
  %v1537 = vadd.f32 %v1533, -2.755732e-07
  %v1538 = vadd.f32 %v1534, -2.755732e-07
  %v1539 = vmul.f32 %v1483, %v1535
  %v1540 = vmul.f32 %v1484, %v1536
  %v1541 = vmul.f32 %v1485, %v1537
  %v1542 = vmul.f32 %v1486, %v1538
  %v1543 = vadd.f32 %v1539, 2.4801588e-05
  %v1544 = vadd.f32 %v1540, 2.4801588e-05
  %v1545 = vadd.f32 %v1541, 2.4801588e-05
  %v1546 = vadd.f32 %v1542, 2.4801588e-05
  %v1547 = vmul.f32 %v1483, %v1543
  %v1548 = vmul.f32 %v1484, %v1544
  %v1549 = vmul.f32 %v1485, %v1545
  %v1550 = vmul.f32 %v1486, %v1546
  %v1551 = vadd.f32 %v1547, -0.0013888889
  %v1552 = vadd.f32 %v1548, -0.0013888889
  %v1553 = vadd.f32 %v1549, -0.0013888889
  %v1554 = vadd.f32 %v1550, -0.0013888889
  %v1555 = vmul.f32 %v1483, %v1551
  %v1556 = vmul.f32 %v1484, %v1552
  %v1557 = vmul.f32 %v1485, %v1553
  %v1558 = vmul.f32 %v1486, %v1554
  %v1559 = vadd.f32 %v1555, 0.041666668
  %v1560 = vadd.f32 %v1556, 0.041666668
  %v1561 = vadd.f32 %v1557, 0.041666668
  %v1562 = vadd.f32 %v1558, 0.041666668
  %v1563 = vmul.f32 %v1483, %v1559
  %v1564 = vmul.f32 %v1484, %v1560
  %v1565 = vmul.f32 %v1485, %v1561
  %v1566 = vmul.f32 %v1486, %v1562
  %v1567 = vadd.f32 %v1563, -0.5
  %v1568 = vadd.f32 %v1564, -0.5
  %v1569 = vadd.f32 %v1565, -0.5
  %v1570 = vadd.f32 %v1566, -0.5
  %v1571 = vmul.f32 %v1483, %v1567
  %v1572 = vmul.f32 %v1484, %v1568
  %v1573 = vmul.f32 %v1485, %v1569
  %v1574 = vmul.f32 %v1486, %v1570
  %v1575 = vadd.f32 %v1571, 1.0
  %v1576 = vadd.f32 %v1572, 1.0
  %v1577 = vadd.f32 %v1573, 1.0
  %v1578 = vadd.f32 %v1574, 1.0
  %v1579 = vrcp.pop %v1575
  %v1580 = vrcp.pop %v1576
  %v1581 = vrcp.pop %v1577
  %v1582 = vrcp.pop %v1578
  %v1583 = vmul.f32 %v1527, %v1579
  %v1584 = vmul.f32 %v1528, %v1580
  %v1585 = vmul.f32 %v1529, %v1581
  %v1586 = vmul.f32 %v1530, %v1582
  %1587 = vrot.lane.b32.xlu0 %v35, 48
  %v1588 = vpop.permute.xlu0 %1587
  %v1591 = vsel %vm37, %v1473, 0
  %v1594 = vsel %vm37, %v1474, 0
  %1596 = vmatprep.subr.bf16.mxu0 0
  %1597 = vmatpush1.bf16.msra.mxu0 %v1588
  %1598 = vmatprep.subr.bf16.mxu0 0
  %1599 = vmatpush1.bf16.msra.mxu0 0
  %1600 = vmatprep.subr.bf16.mxu0 0
  %1601 = vmatpush1.bf16.msra.mxu0 0
  %1602 = vmatprep.subr.bf16.mxu0 0
  %1603 = vmatpush1.bf16.msra.mxu0 0
  %1604 = vmatprep.subr.bf16.mxu0 0
  %1605 = vmatpush1.bf16.msra.mxu0 0
  %1606 = vmatprep.subr.bf16.mxu0 0
  %1607 = vmatpush1.bf16.msra.mxu0 0
  %1608 = vmatprep.subr.bf16.mxu0 0
  %1609 = vmatpush1.bf16.msra.mxu0 0
  %1610 = vmatprep.subr.bf16.mxu0 0
  %1611 = vmatpush1.bf16.msra.mxu0 0
  %1612 = vmatprep.subr.bf16.mxu0 0
  %1613 = vmatpush1.bf16.msra.mxu0 0
  %1614 = vmatprep.subr.bf16.mxu0 0
  %1615 = vmatpush1.bf16.msra.mxu0 0
  %1616 = vmatprep.subr.bf16.mxu0 0
  %1617 = vmatpush1.bf16.msra.mxu0 0
  %1618 = vmatprep.subr.bf16.mxu0 0
  %1619 = vmatpush1.bf16.msra.mxu0 0
  %1620 = vmatprep.subr.bf16.mxu0 0
  %1621 = vmatpush1.bf16.msra.mxu0 0
  %1622 = vmatprep.subr.bf16.mxu0 0
  %1623 = vmatpush1.bf16.msra.mxu0 0
  %1624 = vmatprep.subr.bf16.mxu0 0
  %1625 = vmatpush1.bf16.msra.mxu0 0
  %1626 = vmatprep.subr.bf16.mxu0 0
  %1627 = vmatpush1.bf16.msra.mxu0 0
  %1628 = vmatprep.mubr.bf16.mxu0 0
  %1629 = vmatmul.mubr.bf16.gmra.mrb[0].mxu0 %v1591
  %v1630 = vpop.f32.mrb[0].mxu0
  %v1631 = vadd.f32 0.0, %v1630
  %v1632 = vpop.f32.mrb[0].mxu0
  %v1633 = vpop.f32.mrb[0].mxu0
  %v1634 = vadd.f32 0.0, %v1633
  %v1635 = vpop.f32.mrb[0].mxu0
  %1636 = vmatprep.mubr.bf16.mxu0 0
  %1637 = vmatmul.mubr.bf16.gmra.mrb[0].mxu0 %v1594
  %v1638 = vpop.f32.mrb[0].mxu0
  %v1639 = vadd.f32 0.0, %v1638
  %v1640 = vpop.f32.mrb[0].mxu0
  %v1641 = vpop.f32.mrb[0].mxu0
  %v1642 = vadd.f32 0.0, %v1641
  %v1643 = vpop.f32.mrb[0].mxu0
  %1644 = vdwg.mxu0
  %v1645 = vpack.c.bf16 %v1634, %v1631
  %v1646 = vpack.c.bf16 %v1642, %v1639
  %1647 = vrot.lane.b32.xlu0 %v263, 64
  %v1648 = vpop.permute.xlu0 %1647
  %1650 = vmatprep.subr.bf16.mxu0 0
  %1651 = vmatpush1.bf16.msra.mxu0 %v1645
  %1652 = vmatprep.subr.bf16.mxu0 0
  %1653 = vmatpush1.bf16.msra.mxu0 %v1646
  %1654 = vmatprep.subr.bf16.mxu0 0
  %1655 = vmatpush1.bf16.msra.mxu0 0
  %1656 = vmatprep.subr.bf16.mxu0 0
  %1657 = vmatpush1.bf16.msra.mxu0 0
  %1658 = vmatprep.subr.bf16.mxu0 0
  %1659 = vmatpush1.bf16.msra.mxu0 0
  %1660 = vmatprep.subr.bf16.mxu0 0
  %1661 = vmatpush1.bf16.msra.mxu0 0
  %1662 = vmatprep.subr.bf16.mxu0 0
  %1663 = vmatpush1.bf16.msra.mxu0 0
  %1664 = vmatprep.subr.bf16.mxu0 0
  %1665 = vmatpush1.bf16.msra.mxu0 0
  %1666 = vmatprep.subr.bf16.mxu0 0
  %1667 = vmatpush1.bf16.msra.mxu0 0
  %1668 = vmatprep.subr.bf16.mxu0 0
  %1669 = vmatpush1.bf16.msra.mxu0 0
  %1670 = vmatprep.subr.bf16.mxu0 0
  %1671 = vmatpush1.bf16.msra.mxu0 0
  %1672 = vmatprep.subr.bf16.mxu0 0
  %1673 = vmatpush1.bf16.msra.mxu0 0
  %1674 = vmatprep.subr.bf16.mxu0 0
  %1675 = vmatpush1.bf16.msra.mxu0 0
  %1676 = vmatprep.subr.bf16.mxu0 0
  %1677 = vmatpush1.bf16.msra.mxu0 0
  %1678 = vmatprep.subr.bf16.mxu0 0
  %1679 = vmatpush1.bf16.msra.mxu0 0
  %1680 = vmatprep.subr.bf16.mxu0 0
  %1681 = vmatpush1.bf16.msra.mxu0 0
  %1682 = vmatprep.mubr.bf16.mxu0 0
  %1683 = vmatmul.mubr.bf16.gmra.mrb[0].mxu0 %v277
  %v1684 = vpop.f32.mrb[0].mxu0
  %v1685 = vadd.f32 %v1648, %v1684
  %v1686 = vpop.f32.mrb[0].mxu0
  %v1687 = vpop.f32.mrb[0].mxu0
  %v1688 = vadd.f32 %v1648, %v1687
  %v1689 = vpop.f32.mrb[0].mxu0
  %1690 = vmatprep.mubr.bf16.mxu0 0
  %1691 = vmatmul.mubr.bf16.gmra.mrb[0].mxu0 %v280
  %v1692 = vpop.f32.mrb[0].mxu0
  %v1693 = vadd.f32 %v1648, %v1692
  %v1694 = vpop.f32.mrb[0].mxu0
  %v1695 = vpop.f32.mrb[0].mxu0
  %v1696 = vadd.f32 %v1648, %v1695
  %v1697 = vpop.f32.mrb[0].mxu0
  %1698 = vdwg.mxu0
  %v1699 = vadd.f32 %v1583, %v1685
  %v1700 = vadd.f32 %v1584, %v1688
  %v1701 = vadd.f32 %v1585, %v1693
  %v1702 = vadd.f32 %v1586, %v1696
  %v1703 = vand.u32 2147483647, %v1699
  %v1704 = vand.u32 2147483647, %v1700
  %v1705 = vand.u32 2147483647, %v1701
  %v1706 = vand.u32 2147483647, %v1702
  %vm1707 = vcmp.gt.f32.partialorder %v1703, 2.4142137
  %vm1708 = vcmp.gt.f32.partialorder %v1704, 2.4142137
  %vm1709 = vcmp.gt.f32.partialorder %v1705, 2.4142137
  %vm1710 = vcmp.gt.f32.partialorder %v1706, 2.4142137
  %vm1711 = vcmp.gt.f32.partialorder %v1703, 0.41421357
  %vm1712 = vcmp.gt.f32.partialorder %v1704, 0.41421357
  %vm1713 = vcmp.gt.f32.partialorder %v1705, 0.41421357
  %vm1714 = vcmp.gt.f32.partialorder %v1706, 0.41421357
  %v1715 = vmax.f32 %v1703, 1.0
  %v1716 = vmax.f32 %v1704, 1.0
  %v1717 = vmax.f32 %v1705, 1.0
  %v1718 = vmax.f32 %v1706, 1.0
  %v1719 = vrcp.pop %v1715
  %v1720 = vrcp.pop %v1716
  %v1721 = vrcp.pop %v1717
  %v1722 = vrcp.pop %v1718
  %v1723 = vsub.f32 0.0, %v1719
  %v1724 = vsub.f32 0.0, %v1720
  %v1725 = vsub.f32 0.0, %v1721
  %v1726 = vsub.f32 0.0, %v1722
  %v1727 = vsub.f32 %v1703, 1.0
  %v1728 = vsub.f32 %v1704, 1.0
  %v1729 = vsub.f32 %v1705, 1.0
  %v1730 = vsub.f32 %v1706, 1.0
  %v1731 = vadd.f32 %v1703, 1.0
  %v1732 = vadd.f32 %v1704, 1.0
  %v1733 = vadd.f32 %v1705, 1.0
  %v1734 = vadd.f32 %v1706, 1.0
  %v1735 = vrcp.pop %v1731
  %v1736 = vrcp.pop %v1732
  %v1737 = vrcp.pop %v1733
  %v1738 = vrcp.pop %v1734
  %v1739 = vmul.f32 %v1727, %v1735
  %v1740 = vmul.f32 %v1728, %v1736
  %v1741 = vmul.f32 %v1729, %v1737
  %v1742 = vmul.f32 %v1730, %v1738
  %v1743 = vsel %vm1711, %v1739, %v1703
  %v1744 = vsel %vm1712, %v1740, %v1704
  %v1745 = vsel %vm1713, %v1741, %v1705
  %v1746 = vsel %vm1714, %v1742, %v1706
  %v1747 = vsel %vm1707, %v1723, %v1743
  %v1748 = vsel %vm1708, %v1724, %v1744
  %v1749 = vsel %vm1709, %v1725, %v1745
  %v1750 = vsel %vm1710, %v1726, %v1746
  %v1751 = vsel %vm1711, 0.7853982, 0.0
  %v1752 = vsel %vm1712, 0.7853982, 0.0
  %v1753 = vsel %vm1713, 0.7853982, 0.0
  %v1754 = vsel %vm1714, 0.7853982, 0.0
  %v1755 = vsel %vm1707, 1.5707964, %v1751
  %v1756 = vsel %vm1708, 1.5707964, %v1752
  %v1757 = vsel %vm1709, 1.5707964, %v1753
  %v1758 = vsel %vm1710, 1.5707964, %v1754
  %v1759 = vmul.f32 %v1747, %v1747
  %v1760 = vmul.f32 %v1748, %v1748
  %v1761 = vmul.f32 %v1749, %v1749
  %v1762 = vmul.f32 %v1750, %v1750
  %v1763 = vmul.f32 %v1759, 0.080537446
  %v1764 = vmul.f32 %v1760, 0.080537446
  %v1765 = vmul.f32 %v1761, 0.080537446
  %v1766 = vmul.f32 %v1762, 0.080537446
  %v1767 = vsub.f32 %v1763, 0.13877685
  %v1768 = vsub.f32 %v1764, 0.13877685
  %v1769 = vsub.f32 %v1765, 0.13877685
  %v1770 = vsub.f32 %v1766, 0.13877685
  %v1771 = vmul.f32 %v1767, %v1759
  %v1772 = vmul.f32 %v1768, %v1760
  %v1773 = vmul.f32 %v1769, %v1761
  %v1774 = vmul.f32 %v1770, %v1762
  %v1775 = vadd.f32 %v1771, 0.19977711
  %v1776 = vadd.f32 %v1772, 0.19977711
  %v1777 = vadd.f32 %v1773, 0.19977711
  %v1778 = vadd.f32 %v1774, 0.19977711
  %v1779 = vmul.f32 %v1775, %v1759
  %v1780 = vmul.f32 %v1776, %v1760
  %v1781 = vmul.f32 %v1777, %v1761
  %v1782 = vmul.f32 %v1778, %v1762
  %v1783 = vsub.f32 %v1779, 0.3333295
  %v1784 = vsub.f32 %v1780, 0.3333295
  %v1785 = vsub.f32 %v1781, 0.3333295
  %v1786 = vsub.f32 %v1782, 0.3333295
  %v1787 = vadd.f32 %v1755, %v1747
  %v1788 = vadd.f32 %v1756, %v1748
  %v1789 = vadd.f32 %v1757, %v1749
  %v1790 = vadd.f32 %v1758, %v1750
  %v1791 = vmul.f32 %v1747, %v1759
  %v1792 = vmul.f32 %v1748, %v1760
  %v1793 = vmul.f32 %v1749, %v1761
  %v1794 = vmul.f32 %v1750, %v1762
  %v1795 = vmul.f32 %v1791, %v1783
  %v1796 = vmul.f32 %v1792, %v1784
  %v1797 = vmul.f32 %v1793, %v1785
  %v1798 = vmul.f32 %v1794, %v1786
  %v1799 = vadd.f32 %v1787, %v1795
  %v1800 = vadd.f32 %v1788, %v1796
  %v1801 = vadd.f32 %v1789, %v1797
  %v1802 = vadd.f32 %v1790, %v1798
  %vm1803 = vcmp.lt.f32.partialorder %v1699, 0.0
  %vm1804 = vcmp.lt.f32.partialorder %v1700, 0.0
  %vm1805 = vcmp.lt.f32.partialorder %v1701, 0.0
  %vm1806 = vcmp.lt.f32.partialorder %v1702, 0.0
  %v1807 = vsub.f32 0.0, %v1799
  %v1808 = vsub.f32 0.0, %v1800
  %v1809 = vsub.f32 0.0, %v1801
  %v1810 = vsub.f32 0.0, %v1802
  %v1811 = vsel %vm1803, %v1807, %v1799
  %v1812 = vsel %vm1804, %v1808, %v1800
  %v1813 = vsel %vm1805, %v1809, %v1801
  %v1814 = vsel %vm1806, %v1810, %v1802
  %v1815 = vpack.c.bf16 %v1812, %v1811
  %v1816 = vpack.c.bf16 %v1814, %v1813
  %v1817 = vmax.f32 %v1811, -1.5607964
  %v1818 = vmax.f32 %v1812, -1.5607964
  %v1819 = vmax.f32 %v1813, -1.5607964
  %v1820 = vmax.f32 %v1814, -1.5607964
  %v1821 = vmin.f32 %v1817, 1.5607964
  %v1822 = vmin.f32 %v1818, 1.5607964
  %v1823 = vmin.f32 %v1819, 1.5607964
  %v1824 = vmin.f32 %v1820, 1.5607964
  %v1825 = vmul.f32 %v1821, %v1821
  %v1826 = vmul.f32 %v1822, %v1822
  %v1827 = vmul.f32 %v1823, %v1823
  %v1828 = vmul.f32 %v1824, %v1824
  %v1829 = vmul.f32 %v1825, -2.5052108e-08
  %v1830 = vmul.f32 %v1826, -2.5052108e-08
  %v1831 = vmul.f32 %v1827, -2.5052108e-08
  %v1832 = vmul.f32 %v1828, -2.5052108e-08
  %v1833 = vadd.f32 %v1829, 2.7557319e-06
  %v1834 = vadd.f32 %v1830, 2.7557319e-06
  %v1835 = vadd.f32 %v1831, 2.7557319e-06
  %v1836 = vadd.f32 %v1832, 2.7557319e-06
  %v1837 = vmul.f32 %v1825, %v1833
  %v1838 = vmul.f32 %v1826, %v1834
  %v1839 = vmul.f32 %v1827, %v1835
  %v1840 = vmul.f32 %v1828, %v1836
  %v1841 = vadd.f32 %v1837, -0.0001984127
  %v1842 = vadd.f32 %v1838, -0.0001984127
  %v1843 = vadd.f32 %v1839, -0.0001984127
  %v1844 = vadd.f32 %v1840, -0.0001984127
  %v1845 = vmul.f32 %v1825, %v1841
  %v1846 = vmul.f32 %v1826, %v1842
  %v1847 = vmul.f32 %v1827, %v1843
  %v1848 = vmul.f32 %v1828, %v1844
  %v1849 = vadd.f32 %v1845, 0.008333334
  %v1850 = vadd.f32 %v1846, 0.008333334
  %v1851 = vadd.f32 %v1847, 0.008333334
  %v1852 = vadd.f32 %v1848, 0.008333334
  %v1853 = vmul.f32 %v1825, %v1849
  %v1854 = vmul.f32 %v1826, %v1850
  %v1855 = vmul.f32 %v1827, %v1851
  %v1856 = vmul.f32 %v1828, %v1852
  %v1857 = vadd.f32 %v1853, -0.16666667
  %v1858 = vadd.f32 %v1854, -0.16666667
  %v1859 = vadd.f32 %v1855, -0.16666667
  %v1860 = vadd.f32 %v1856, -0.16666667
  %v1861 = vmul.f32 %v1825, %v1857
  %v1862 = vmul.f32 %v1826, %v1858
  %v1863 = vmul.f32 %v1827, %v1859
  %v1864 = vmul.f32 %v1828, %v1860
  %v1865 = vadd.f32 %v1861, 1.0
  %v1866 = vadd.f32 %v1862, 1.0
  %v1867 = vadd.f32 %v1863, 1.0
  %v1868 = vadd.f32 %v1864, 1.0
  %v1869 = vmul.f32 %v1821, %v1865
  %v1870 = vmul.f32 %v1822, %v1866
  %v1871 = vmul.f32 %v1823, %v1867
  %v1872 = vmul.f32 %v1824, %v1868
  %v1873 = vmul.f32 %v1825, 2.0876756e-09
  %v1874 = vmul.f32 %v1826, 2.0876756e-09
  %v1875 = vmul.f32 %v1827, 2.0876756e-09
  %v1876 = vmul.f32 %v1828, 2.0876756e-09
  %v1877 = vadd.f32 %v1873, -2.755732e-07
  %v1878 = vadd.f32 %v1874, -2.755732e-07
  %v1879 = vadd.f32 %v1875, -2.755732e-07
  %v1880 = vadd.f32 %v1876, -2.755732e-07
  %v1881 = vmul.f32 %v1825, %v1877
  %v1882 = vmul.f32 %v1826, %v1878
  %v1883 = vmul.f32 %v1827, %v1879
  %v1884 = vmul.f32 %v1828, %v1880
  %v1885 = vadd.f32 %v1881, 2.4801588e-05
  %v1886 = vadd.f32 %v1882, 2.4801588e-05
  %v1887 = vadd.f32 %v1883, 2.4801588e-05
  %v1888 = vadd.f32 %v1884, 2.4801588e-05
  %v1889 = vmul.f32 %v1825, %v1885
  %v1890 = vmul.f32 %v1826, %v1886
  %v1891 = vmul.f32 %v1827, %v1887
  %v1892 = vmul.f32 %v1828, %v1888
  %v1893 = vadd.f32 %v1889, -0.0013888889
  %v1894 = vadd.f32 %v1890, -0.0013888889
  %v1895 = vadd.f32 %v1891, -0.0013888889
  %v1896 = vadd.f32 %v1892, -0.0013888889
  %v1897 = vmul.f32 %v1825, %v1893
  %v1898 = vmul.f32 %v1826, %v1894
  %v1899 = vmul.f32 %v1827, %v1895
  %v1900 = vmul.f32 %v1828, %v1896
  %v1901 = vadd.f32 %v1897, 0.041666668
  %v1902 = vadd.f32 %v1898, 0.041666668
  %v1903 = vadd.f32 %v1899, 0.041666668
  %v1904 = vadd.f32 %v1900, 0.041666668
  %v1905 = vmul.f32 %v1825, %v1901
  %v1906 = vmul.f32 %v1826, %v1902
  %v1907 = vmul.f32 %v1827, %v1903
  %v1908 = vmul.f32 %v1828, %v1904
  %v1909 = vadd.f32 %v1905, -0.5
  %v1910 = vadd.f32 %v1906, -0.5
  %v1911 = vadd.f32 %v1907, -0.5
  %v1912 = vadd.f32 %v1908, -0.5
  %v1913 = vmul.f32 %v1825, %v1909
  %v1914 = vmul.f32 %v1826, %v1910
  %v1915 = vmul.f32 %v1827, %v1911
  %v1916 = vmul.f32 %v1828, %v1912
  %v1917 = vadd.f32 %v1913, 1.0
  %v1918 = vadd.f32 %v1914, 1.0
  %v1919 = vadd.f32 %v1915, 1.0
  %v1920 = vadd.f32 %v1916, 1.0
  %v1921 = vrcp.pop %v1917
  %v1922 = vrcp.pop %v1918
  %v1923 = vrcp.pop %v1919
  %v1924 = vrcp.pop %v1920
  %v1925 = vmul.f32 %v1869, %v1921
  %v1926 = vmul.f32 %v1870, %v1922
  %v1927 = vmul.f32 %v1871, %v1923
  %v1928 = vmul.f32 %v1872, %v1924
  %1929 = vrot.lane.b32.xlu0 %v35, 32
  %v1930 = vpop.permute.xlu0 %1929
  %v1933 = vsel %vm37, %v1815, 0
  %v1936 = vsel %vm37, %v1816, 0
  %1938 = vmatprep.subr.bf16.mxu0 0
  %1939 = vmatpush1.bf16.msra.mxu0 %v1930
  %1940 = vmatprep.subr.bf16.mxu0 0
  %1941 = vmatpush1.bf16.msra.mxu0 0
  %1942 = vmatprep.subr.bf16.mxu0 0
  %1943 = vmatpush1.bf16.msra.mxu0 0
  %1944 = vmatprep.subr.bf16.mxu0 0
  %1945 = vmatpush1.bf16.msra.mxu0 0
  %1946 = vmatprep.subr.bf16.mxu0 0
  %1947 = vmatpush1.bf16.msra.mxu0 0
  %1948 = vmatprep.subr.bf16.mxu0 0
  %1949 = vmatpush1.bf16.msra.mxu0 0
  %1950 = vmatprep.subr.bf16.mxu0 0
  %1951 = vmatpush1.bf16.msra.mxu0 0
  %1952 = vmatprep.subr.bf16.mxu0 0
  %1953 = vmatpush1.bf16.msra.mxu0 0
  %1954 = vmatprep.subr.bf16.mxu0 0
  %1955 = vmatpush1.bf16.msra.mxu0 0
  %1956 = vmatprep.subr.bf16.mxu0 0
  %1957 = vmatpush1.bf16.msra.mxu0 0
  %1958 = vmatprep.subr.bf16.mxu0 0
  %1959 = vmatpush1.bf16.msra.mxu0 0
  %1960 = vmatprep.subr.bf16.mxu0 0
  %1961 = vmatpush1.bf16.msra.mxu0 0
  %1962 = vmatprep.subr.bf16.mxu0 0
  %1963 = vmatpush1.bf16.msra.mxu0 0
  %1964 = vmatprep.subr.bf16.mxu0 0
  %1965 = vmatpush1.bf16.msra.mxu0 0
  %1966 = vmatprep.subr.bf16.mxu0 0
  %1967 = vmatpush1.bf16.msra.mxu0 0
  %1968 = vmatprep.subr.bf16.mxu0 0
  %1969 = vmatpush1.bf16.msra.mxu0 0
  %1970 = vmatprep.mubr.bf16.mxu0 0
  %1971 = vmatmul.mubr.bf16.gmra.mrb[0].mxu0 %v1933
  %v1972 = vpop.f32.mrb[0].mxu0
  %v1973 = vadd.f32 0.0, %v1972
  %v1974 = vpop.f32.mrb[0].mxu0
  %v1975 = vpop.f32.mrb[0].mxu0
  %v1976 = vadd.f32 0.0, %v1975
  %v1977 = vpop.f32.mrb[0].mxu0
  %1978 = vmatprep.mubr.bf16.mxu0 0
  %1979 = vmatmul.mubr.bf16.gmra.mrb[0].mxu0 %v1936
  %v1980 = vpop.f32.mrb[0].mxu0
  %v1981 = vadd.f32 0.0, %v1980
  %v1982 = vpop.f32.mrb[0].mxu0
  %v1983 = vpop.f32.mrb[0].mxu0
  %v1984 = vadd.f32 0.0, %v1983
  %v1985 = vpop.f32.mrb[0].mxu0
  %1986 = vdwg.mxu0
  %v1987 = vpack.c.bf16 %v1976, %v1973
  %v1988 = vpack.c.bf16 %v1984, %v1981
  %1989 = vrot.lane.b32.xlu0 %v263, 48
  %v1990 = vpop.permute.xlu0 %1989
  %1992 = vmatprep.subr.bf16.mxu0 0
  %1993 = vmatpush1.bf16.msra.mxu0 %v1987
  %1994 = vmatprep.subr.bf16.mxu0 0
  %1995 = vmatpush1.bf16.msra.mxu0 %v1988
  %1996 = vmatprep.subr.bf16.mxu0 0
  %1997 = vmatpush1.bf16.msra.mxu0 0
  %1998 = vmatprep.subr.bf16.mxu0 0
  %1999 = vmatpush1.bf16.msra.mxu0 0
  %2000 = vmatprep.subr.bf16.mxu0 0
  %2001 = vmatpush1.bf16.msra.mxu0 0
  %2002 = vmatprep.subr.bf16.mxu0 0
  %2003 = vmatpush1.bf16.msra.mxu0 0
  %2004 = vmatprep.subr.bf16.mxu0 0
  %2005 = vmatpush1.bf16.msra.mxu0 0
  %2006 = vmatprep.subr.bf16.mxu0 0
  %2007 = vmatpush1.bf16.msra.mxu0 0
  %2008 = vmatprep.subr.bf16.mxu0 0
  %2009 = vmatpush1.bf16.msra.mxu0 0
  %2010 = vmatprep.subr.bf16.mxu0 0
  %2011 = vmatpush1.bf16.msra.mxu0 0
  %2012 = vmatprep.subr.bf16.mxu0 0
  %2013 = vmatpush1.bf16.msra.mxu0 0
  %2014 = vmatprep.subr.bf16.mxu0 0
  %2015 = vmatpush1.bf16.msra.mxu0 0
  %2016 = vmatprep.subr.bf16.mxu0 0
  %2017 = vmatpush1.bf16.msra.mxu0 0
  %2018 = vmatprep.subr.bf16.mxu0 0
  %2019 = vmatpush1.bf16.msra.mxu0 0
  %2020 = vmatprep.subr.bf16.mxu0 0
  %2021 = vmatpush1.bf16.msra.mxu0 0
  %2022 = vmatprep.subr.bf16.mxu0 0
  %2023 = vmatpush1.bf16.msra.mxu0 0
  %2024 = vmatprep.mubr.bf16.mxu0 0
  %2025 = vmatmul.mubr.bf16.gmra.mrb[0].mxu0 %v277
  %v2026 = vpop.f32.mrb[0].mxu0
  %v2027 = vadd.f32 %v1990, %v2026
  %v2028 = vpop.f32.mrb[0].mxu0
  %v2029 = vpop.f32.mrb[0].mxu0
  %v2030 = vadd.f32 %v1990, %v2029
  %v2031 = vpop.f32.mrb[0].mxu0
  %2032 = vmatprep.mubr.bf16.mxu0 0
  %2033 = vmatmul.mubr.bf16.gmra.mrb[0].mxu0 %v280
  %v2034 = vpop.f32.mrb[0].mxu0
  %v2035 = vadd.f32 %v1990, %v2034
  %v2036 = vpop.f32.mrb[0].mxu0
  %v2037 = vpop.f32.mrb[0].mxu0
  %v2038 = vadd.f32 %v1990, %v2037
  %v2039 = vpop.f32.mrb[0].mxu0
  %2040 = vdwg.mxu0
  %v2041 = vadd.f32 %v1925, %v2027
  %v2042 = vadd.f32 %v1926, %v2030
  %v2043 = vadd.f32 %v1927, %v2035
  %v2044 = vadd.f32 %v1928, %v2038
  %v2045 = vand.u32 2147483647, %v2041
  %v2046 = vand.u32 2147483647, %v2042
  %v2047 = vand.u32 2147483647, %v2043
  %v2048 = vand.u32 2147483647, %v2044
  %vm2049 = vcmp.gt.f32.partialorder %v2045, 2.4142137
  %vm2050 = vcmp.gt.f32.partialorder %v2046, 2.4142137
  %vm2051 = vcmp.gt.f32.partialorder %v2047, 2.4142137
  %vm2052 = vcmp.gt.f32.partialorder %v2048, 2.4142137
  %vm2053 = vcmp.gt.f32.partialorder %v2045, 0.41421357
  %vm2054 = vcmp.gt.f32.partialorder %v2046, 0.41421357
  %vm2055 = vcmp.gt.f32.partialorder %v2047, 0.41421357
  %vm2056 = vcmp.gt.f32.partialorder %v2048, 0.41421357
  %v2057 = vmax.f32 %v2045, 1.0
  %v2058 = vmax.f32 %v2046, 1.0
  %v2059 = vmax.f32 %v2047, 1.0
  %v2060 = vmax.f32 %v2048, 1.0
  %v2061 = vrcp.pop %v2057
  %v2062 = vrcp.pop %v2058
  %v2063 = vrcp.pop %v2059
  %v2064 = vrcp.pop %v2060
  %v2065 = vsub.f32 0.0, %v2061
  %v2066 = vsub.f32 0.0, %v2062
  %v2067 = vsub.f32 0.0, %v2063
  %v2068 = vsub.f32 0.0, %v2064
  %v2069 = vsub.f32 %v2045, 1.0
  %v2070 = vsub.f32 %v2046, 1.0
  %v2071 = vsub.f32 %v2047, 1.0
  %v2072 = vsub.f32 %v2048, 1.0
  %v2073 = vadd.f32 %v2045, 1.0
  %v2074 = vadd.f32 %v2046, 1.0
  %v2075 = vadd.f32 %v2047, 1.0
  %v2076 = vadd.f32 %v2048, 1.0
  %v2077 = vrcp.pop %v2073
  %v2078 = vrcp.pop %v2074
  %v2079 = vrcp.pop %v2075
  %v2080 = vrcp.pop %v2076
  %v2081 = vmul.f32 %v2069, %v2077
  %v2082 = vmul.f32 %v2070, %v2078
  %v2083 = vmul.f32 %v2071, %v2079
  %v2084 = vmul.f32 %v2072, %v2080
  %v2085 = vsel %vm2053, %v2081, %v2045
  %v2086 = vsel %vm2054, %v2082, %v2046
  %v2087 = vsel %vm2055, %v2083, %v2047
  %v2088 = vsel %vm2056, %v2084, %v2048
  %v2089 = vsel %vm2049, %v2065, %v2085
  %v2090 = vsel %vm2050, %v2066, %v2086
  %v2091 = vsel %vm2051, %v2067, %v2087
  %v2092 = vsel %vm2052, %v2068, %v2088
  %v2093 = vsel %vm2053, 0.7853982, 0.0
  %v2094 = vsel %vm2054, 0.7853982, 0.0
  %v2095 = vsel %vm2055, 0.7853982, 0.0
  %v2096 = vsel %vm2056, 0.7853982, 0.0
  %v2097 = vsel %vm2049, 1.5707964, %v2093
  %v2098 = vsel %vm2050, 1.5707964, %v2094
  %v2099 = vsel %vm2051, 1.5707964, %v2095
  %v2100 = vsel %vm2052, 1.5707964, %v2096
  %v2101 = vmul.f32 %v2089, %v2089
  %v2102 = vmul.f32 %v2090, %v2090
  %v2103 = vmul.f32 %v2091, %v2091
  %v2104 = vmul.f32 %v2092, %v2092
  %v2105 = vmul.f32 %v2101, 0.080537446
  %v2106 = vmul.f32 %v2102, 0.080537446
  %v2107 = vmul.f32 %v2103, 0.080537446
  %v2108 = vmul.f32 %v2104, 0.080537446
  %v2109 = vsub.f32 %v2105, 0.13877685
  %v2110 = vsub.f32 %v2106, 0.13877685
  %v2111 = vsub.f32 %v2107, 0.13877685
  %v2112 = vsub.f32 %v2108, 0.13877685
  %v2113 = vmul.f32 %v2109, %v2101
  %v2114 = vmul.f32 %v2110, %v2102
  %v2115 = vmul.f32 %v2111, %v2103
  %v2116 = vmul.f32 %v2112, %v2104
  %v2117 = vadd.f32 %v2113, 0.19977711
  %v2118 = vadd.f32 %v2114, 0.19977711
  %v2119 = vadd.f32 %v2115, 0.19977711
  %v2120 = vadd.f32 %v2116, 0.19977711
  %v2121 = vmul.f32 %v2117, %v2101
  %v2122 = vmul.f32 %v2118, %v2102
  %v2123 = vmul.f32 %v2119, %v2103
  %v2124 = vmul.f32 %v2120, %v2104
  %v2125 = vsub.f32 %v2121, 0.3333295
  %v2126 = vsub.f32 %v2122, 0.3333295
  %v2127 = vsub.f32 %v2123, 0.3333295
  %v2128 = vsub.f32 %v2124, 0.3333295
  %v2129 = vadd.f32 %v2097, %v2089
  %v2130 = vadd.f32 %v2098, %v2090
  %v2131 = vadd.f32 %v2099, %v2091
  %v2132 = vadd.f32 %v2100, %v2092
  %v2133 = vmul.f32 %v2089, %v2101
  %v2134 = vmul.f32 %v2090, %v2102
  %v2135 = vmul.f32 %v2091, %v2103
  %v2136 = vmul.f32 %v2092, %v2104
  %v2137 = vmul.f32 %v2133, %v2125
  %v2138 = vmul.f32 %v2134, %v2126
  %v2139 = vmul.f32 %v2135, %v2127
  %v2140 = vmul.f32 %v2136, %v2128
  %v2141 = vadd.f32 %v2129, %v2137
  %v2142 = vadd.f32 %v2130, %v2138
  %v2143 = vadd.f32 %v2131, %v2139
  %v2144 = vadd.f32 %v2132, %v2140
  %vm2145 = vcmp.lt.f32.partialorder %v2041, 0.0
  %vm2146 = vcmp.lt.f32.partialorder %v2042, 0.0
  %vm2147 = vcmp.lt.f32.partialorder %v2043, 0.0
  %vm2148 = vcmp.lt.f32.partialorder %v2044, 0.0
  %v2149 = vsub.f32 0.0, %v2141
  %v2150 = vsub.f32 0.0, %v2142
  %v2151 = vsub.f32 0.0, %v2143
  %v2152 = vsub.f32 0.0, %v2144
  %v2153 = vsel %vm2145, %v2149, %v2141
  %v2154 = vsel %vm2146, %v2150, %v2142
  %v2155 = vsel %vm2147, %v2151, %v2143
  %v2156 = vsel %vm2148, %v2152, %v2144
  %v2157 = vpack.c.bf16 %v2154, %v2153
  %v2158 = vpack.c.bf16 %v2156, %v2155
  %2159 = vrot.lane.b32.xlu0 %v35, 8
  %v2160 = vpop.permute.xlu0 %2159
  %v2163 = vsel %vm37, %v2157, 0
  %v2166 = vsel %vm37, %v2158, 0
  %2168 = vmatprep.subr.bf16.mxu0 0
  %2169 = vmatpush1.bf16.msra.mxu0 %v2160
  %2170 = vmatprep.subr.bf16.mxu0 0
  %2171 = vmatpush1.bf16.msra.mxu0 0
  %2172 = vmatprep.subr.bf16.mxu0 0
  %2173 = vmatpush1.bf16.msra.mxu0 0
  %2174 = vmatprep.subr.bf16.mxu0 0
  %2175 = vmatpush1.bf16.msra.mxu0 0
  %2176 = vmatprep.subr.bf16.mxu0 0
  %2177 = vmatpush1.bf16.msra.mxu0 0
  %2178 = vmatprep.subr.bf16.mxu0 0
  %2179 = vmatpush1.bf16.msra.mxu0 0
  %2180 = vmatprep.subr.bf16.mxu0 0
  %2181 = vmatpush1.bf16.msra.mxu0 0
  %2182 = vmatprep.subr.bf16.mxu0 0
  %2183 = vmatpush1.bf16.msra.mxu0 0
  %2184 = vmatprep.subr.bf16.mxu0 0
  %2185 = vmatpush1.bf16.msra.mxu0 0
  %2186 = vmatprep.subr.bf16.mxu0 0
  %2187 = vmatpush1.bf16.msra.mxu0 0
  %2188 = vmatprep.subr.bf16.mxu0 0
  %2189 = vmatpush1.bf16.msra.mxu0 0
  %2190 = vmatprep.subr.bf16.mxu0 0
  %2191 = vmatpush1.bf16.msra.mxu0 0
  %2192 = vmatprep.subr.bf16.mxu0 0
  %2193 = vmatpush1.bf16.msra.mxu0 0
  %2194 = vmatprep.subr.bf16.mxu0 0
  %2195 = vmatpush1.bf16.msra.mxu0 0
  %2196 = vmatprep.subr.bf16.mxu0 0
  %2197 = vmatpush1.bf16.msra.mxu0 0
  %2198 = vmatprep.subr.bf16.mxu0 0
  %2199 = vmatpush1.bf16.msra.mxu0 0
  %2200 = vmatprep.mubr.bf16.mxu0 0
  %2201 = vmatmul.mubr.bf16.gmra.mrb[0].mxu0 %v2163
  %v2202 = vpop.f32.mrb[0].mxu0
  %v2203 = vadd.f32 0.0, %v2202
  %v2204 = vpop.f32.mrb[0].mxu0
  %v2205 = vpop.f32.mrb[0].mxu0
  %v2206 = vadd.f32 0.0, %v2205
  %v2207 = vpop.f32.mrb[0].mxu0
  %2208 = vmatprep.mubr.bf16.mxu0 0
  %2209 = vmatmul.mubr.bf16.gmra.mrb[0].mxu0 %v2166
  %v2210 = vpop.f32.mrb[0].mxu0
  %v2211 = vadd.f32 0.0, %v2210
  %v2212 = vpop.f32.mrb[0].mxu0
  %v2213 = vpop.f32.mrb[0].mxu0
  %v2214 = vadd.f32 0.0, %v2213
  %v2215 = vpop.f32.mrb[0].mxu0
  %2216 = vdwg.mxu0
  %v2217 = vmax.f32 %v2203, -1.5607964
  %v2218 = vmax.f32 %v2206, -1.5607964
  %v2219 = vmax.f32 %v2211, -1.5607964
  %v2220 = vmax.f32 %v2214, -1.5607964
  %v2221 = vmin.f32 %v2217, 1.5607964
  %v2222 = vmin.f32 %v2218, 1.5607964
  %v2223 = vmin.f32 %v2219, 1.5607964
  %v2224 = vmin.f32 %v2220, 1.5607964
  %v2225 = vmul.f32 %v2221, %v2221
  %v2226 = vmul.f32 %v2222, %v2222
  %v2227 = vmul.f32 %v2223, %v2223
  %v2228 = vmul.f32 %v2224, %v2224
  %v2229 = vmul.f32 %v2225, -2.5052108e-08
  %v2230 = vmul.f32 %v2226, -2.5052108e-08
  %v2231 = vmul.f32 %v2227, -2.5052108e-08
  %v2232 = vmul.f32 %v2228, -2.5052108e-08
  %v2233 = vadd.f32 %v2229, 2.7557319e-06
  %v2234 = vadd.f32 %v2230, 2.7557319e-06
  %v2235 = vadd.f32 %v2231, 2.7557319e-06
  %v2236 = vadd.f32 %v2232, 2.7557319e-06
  %v2237 = vmul.f32 %v2225, %v2233
  %v2238 = vmul.f32 %v2226, %v2234
  %v2239 = vmul.f32 %v2227, %v2235
  %v2240 = vmul.f32 %v2228, %v2236
  %v2241 = vadd.f32 %v2237, -0.0001984127
  %v2242 = vadd.f32 %v2238, -0.0001984127
  %v2243 = vadd.f32 %v2239, -0.0001984127
  %v2244 = vadd.f32 %v2240, -0.0001984127
  %v2245 = vmul.f32 %v2225, %v2241
  %v2246 = vmul.f32 %v2226, %v2242
  %v2247 = vmul.f32 %v2227, %v2243
  %v2248 = vmul.f32 %v2228, %v2244
  %v2249 = vadd.f32 %v2245, 0.008333334
  %v2250 = vadd.f32 %v2246, 0.008333334
  %v2251 = vadd.f32 %v2247, 0.008333334
  %v2252 = vadd.f32 %v2248, 0.008333334
  %v2253 = vmul.f32 %v2225, %v2249
  %v2254 = vmul.f32 %v2226, %v2250
  %v2255 = vmul.f32 %v2227, %v2251
  %v2256 = vmul.f32 %v2228, %v2252
  %v2257 = vadd.f32 %v2253, -0.16666667
  %v2258 = vadd.f32 %v2254, -0.16666667
  %v2259 = vadd.f32 %v2255, -0.16666667
  %v2260 = vadd.f32 %v2256, -0.16666667
  %v2261 = vmul.f32 %v2225, %v2257
  %v2262 = vmul.f32 %v2226, %v2258
  %v2263 = vmul.f32 %v2227, %v2259
  %v2264 = vmul.f32 %v2228, %v2260
  %v2265 = vadd.f32 %v2261, 1.0
  %v2266 = vadd.f32 %v2262, 1.0
  %v2267 = vadd.f32 %v2263, 1.0
  %v2268 = vadd.f32 %v2264, 1.0
  %v2269 = vmul.f32 %v2221, %v2265
  %v2270 = vmul.f32 %v2222, %v2266
  %v2271 = vmul.f32 %v2223, %v2267
  %v2272 = vmul.f32 %v2224, %v2268
  %v2273 = vmul.f32 %v2225, 2.0876756e-09
  %v2274 = vmul.f32 %v2226, 2.0876756e-09
  %v2275 = vmul.f32 %v2227, 2.0876756e-09
  %v2276 = vmul.f32 %v2228, 2.0876756e-09
  %v2277 = vadd.f32 %v2273, -2.755732e-07
  %v2278 = vadd.f32 %v2274, -2.755732e-07
  %v2279 = vadd.f32 %v2275, -2.755732e-07
  %v2280 = vadd.f32 %v2276, -2.755732e-07
  %v2281 = vmul.f32 %v2225, %v2277
  %v2282 = vmul.f32 %v2226, %v2278
  %v2283 = vmul.f32 %v2227, %v2279
  %v2284 = vmul.f32 %v2228, %v2280
  %v2285 = vadd.f32 %v2281, 2.4801588e-05
  %v2286 = vadd.f32 %v2282, 2.4801588e-05
  %v2287 = vadd.f32 %v2283, 2.4801588e-05
  %v2288 = vadd.f32 %v2284, 2.4801588e-05
  %v2289 = vmul.f32 %v2225, %v2285
  %v2290 = vmul.f32 %v2226, %v2286
  %v2291 = vmul.f32 %v2227, %v2287
  %v2292 = vmul.f32 %v2228, %v2288
  %v2293 = vadd.f32 %v2289, -0.0013888889
  %v2294 = vadd.f32 %v2290, -0.0013888889
  %v2295 = vadd.f32 %v2291, -0.0013888889
  %v2296 = vadd.f32 %v2292, -0.0013888889
  %v2297 = vmul.f32 %v2225, %v2293
  %v2298 = vmul.f32 %v2226, %v2294
  %v2299 = vmul.f32 %v2227, %v2295
  %v2300 = vmul.f32 %v2228, %v2296
  %v2301 = vadd.f32 %v2297, 0.041666668
  %v2302 = vadd.f32 %v2298, 0.041666668
  %v2303 = vadd.f32 %v2299, 0.041666668
  %v2304 = vadd.f32 %v2300, 0.041666668
  %v2305 = vmul.f32 %v2225, %v2301
  %v2306 = vmul.f32 %v2226, %v2302
  %v2307 = vmul.f32 %v2227, %v2303
  %v2308 = vmul.f32 %v2228, %v2304
  %v2309 = vadd.f32 %v2305, -0.5
  %v2310 = vadd.f32 %v2306, -0.5
  %v2311 = vadd.f32 %v2307, -0.5
  %v2312 = vadd.f32 %v2308, -0.5
  %v2313 = vmul.f32 %v2225, %v2309
  %v2314 = vmul.f32 %v2226, %v2310
  %v2315 = vmul.f32 %v2227, %v2311
  %v2316 = vmul.f32 %v2228, %v2312
  %v2317 = vadd.f32 %v2313, 1.0
  %v2318 = vadd.f32 %v2314, 1.0
  %v2319 = vadd.f32 %v2315, 1.0
  %v2320 = vadd.f32 %v2316, 1.0
  %v2321 = vrcp.pop %v2317
  %v2322 = vrcp.pop %v2318
  %v2323 = vrcp.pop %v2319
  %v2324 = vrcp.pop %v2320
  %v2325 = vmul.f32 %v2269, %v2321
  %v2326 = vmul.f32 %v2270, %v2322
  %v2327 = vmul.f32 %v2271, %v2323
  %v2328 = vmul.f32 %v2272, %v2324
  %2329 = vrot.lane.b32.xlu0 %v35, 16
  %v2330 = vpop.permute.xlu0 %2329
  %2332 = vmatprep.subr.bf16.mxu0 0
  %2333 = vmatpush1.bf16.msra.mxu0 %v2330
  %2334 = vmatprep.subr.bf16.mxu0 0
  %2335 = vmatpush1.bf16.msra.mxu0 0
  %2336 = vmatprep.subr.bf16.mxu0 0
  %2337 = vmatpush1.bf16.msra.mxu0 0
  %2338 = vmatprep.subr.bf16.mxu0 0
  %2339 = vmatpush1.bf16.msra.mxu0 0
  %2340 = vmatprep.subr.bf16.mxu0 0
  %2341 = vmatpush1.bf16.msra.mxu0 0
  %2342 = vmatprep.subr.bf16.mxu0 0
  %2343 = vmatpush1.bf16.msra.mxu0 0
  %2344 = vmatprep.subr.bf16.mxu0 0
  %2345 = vmatpush1.bf16.msra.mxu0 0
  %2346 = vmatprep.subr.bf16.mxu0 0
  %2347 = vmatpush1.bf16.msra.mxu0 0
  %2348 = vmatprep.subr.bf16.mxu0 0
  %2349 = vmatpush1.bf16.msra.mxu0 0
  %2350 = vmatprep.subr.bf16.mxu0 0
  %2351 = vmatpush1.bf16.msra.mxu0 0
  %2352 = vmatprep.subr.bf16.mxu0 0
  %2353 = vmatpush1.bf16.msra.mxu0 0
  %2354 = vmatprep.subr.bf16.mxu0 0
  %2355 = vmatpush1.bf16.msra.mxu0 0
  %2356 = vmatprep.subr.bf16.mxu0 0
  %2357 = vmatpush1.bf16.msra.mxu0 0
  %2358 = vmatprep.subr.bf16.mxu0 0
  %2359 = vmatpush1.bf16.msra.mxu0 0
  %2360 = vmatprep.subr.bf16.mxu0 0
  %2361 = vmatpush1.bf16.msra.mxu0 0
  %2362 = vmatprep.subr.bf16.mxu0 0
  %2363 = vmatpush1.bf16.msra.mxu0 0
  %2364 = vmatprep.mubr.bf16.mxu0 0
  %2365 = vmatmul.mubr.bf16.gmra.mrb[0].mxu0 %v2163
  %v2366 = vpop.f32.mrb[0].mxu0
  %v2367 = vadd.f32 0.0, %v2366
  %v2368 = vpop.f32.mrb[0].mxu0
  %v2369 = vpop.f32.mrb[0].mxu0
  %v2370 = vadd.f32 0.0, %v2369
  %v2371 = vpop.f32.mrb[0].mxu0
  %2372 = vmatprep.mubr.bf16.mxu0 0
  %2373 = vmatmul.mubr.bf16.gmra.mrb[0].mxu0 %v2166
  %v2374 = vpop.f32.mrb[0].mxu0
  %v2375 = vadd.f32 0.0, %v2374
  %v2376 = vpop.f32.mrb[0].mxu0
  %v2377 = vpop.f32.mrb[0].mxu0
  %v2378 = vadd.f32 0.0, %v2377
  %v2379 = vpop.f32.mrb[0].mxu0
  %2380 = vdwg.mxu0
  %v2381 = vpack.c.bf16 %v2370, %v2367
  %v2382 = vpack.c.bf16 %v2378, %v2375
  %2383 = vrot.lane.b32.xlu0 %v263, 32
  %v2384 = vpop.permute.xlu0 %2383
  %2386 = vmatprep.subr.bf16.mxu0 0
  %2387 = vmatpush1.bf16.msra.mxu0 %v2381
  %2388 = vmatprep.subr.bf16.mxu0 0
  %2389 = vmatpush1.bf16.msra.mxu0 %v2382
  %2390 = vmatprep.subr.bf16.mxu0 0
  %2391 = vmatpush1.bf16.msra.mxu0 0
  %2392 = vmatprep.subr.bf16.mxu0 0
  %2393 = vmatpush1.bf16.msra.mxu0 0
  %2394 = vmatprep.subr.bf16.mxu0 0
  %2395 = vmatpush1.bf16.msra.mxu0 0
  %2396 = vmatprep.subr.bf16.mxu0 0
  %2397 = vmatpush1.bf16.msra.mxu0 0
  %2398 = vmatprep.subr.bf16.mxu0 0
  %2399 = vmatpush1.bf16.msra.mxu0 0
  %2400 = vmatprep.subr.bf16.mxu0 0
  %2401 = vmatpush1.bf16.msra.mxu0 0
  %2402 = vmatprep.subr.bf16.mxu0 0
  %2403 = vmatpush1.bf16.msra.mxu0 0
  %2404 = vmatprep.subr.bf16.mxu0 0
  %2405 = vmatpush1.bf16.msra.mxu0 0
  %2406 = vmatprep.subr.bf16.mxu0 0
  %2407 = vmatpush1.bf16.msra.mxu0 0
  %2408 = vmatprep.subr.bf16.mxu0 0
  %2409 = vmatpush1.bf16.msra.mxu0 0
  %2410 = vmatprep.subr.bf16.mxu0 0
  %2411 = vmatpush1.bf16.msra.mxu0 0
  %2412 = vmatprep.subr.bf16.mxu0 0
  %2413 = vmatpush1.bf16.msra.mxu0 0
  %2414 = vmatprep.subr.bf16.mxu0 0
  %2415 = vmatpush1.bf16.msra.mxu0 0
  %2416 = vmatprep.subr.bf16.mxu0 0
  %2417 = vmatpush1.bf16.msra.mxu0 0
  %2418 = vmatprep.mubr.bf16.mxu0 0
  %2419 = vmatmul.mubr.bf16.gmra.mrb[0].mxu0 %v277
  %v2420 = vpop.f32.mrb[0].mxu0
  %v2421 = vadd.f32 %v2384, %v2420
  %v2422 = vpop.f32.mrb[0].mxu0
  %v2423 = vpop.f32.mrb[0].mxu0
  %v2424 = vadd.f32 %v2384, %v2423
  %v2425 = vpop.f32.mrb[0].mxu0
  %2426 = vmatprep.mubr.bf16.mxu0 0
  %2427 = vmatmul.mubr.bf16.gmra.mrb[0].mxu0 %v280
  %v2428 = vpop.f32.mrb[0].mxu0
  %v2429 = vadd.f32 %v2384, %v2428
  %v2430 = vpop.f32.mrb[0].mxu0
  %v2431 = vpop.f32.mrb[0].mxu0
  %v2432 = vadd.f32 %v2384, %v2431
  %v2433 = vpop.f32.mrb[0].mxu0
  %2434 = vdwg.mxu0
  %v2435 = vadd.f32 %v2325, %v2421
  %v2436 = vadd.f32 %v2326, %v2424
  %v2437 = vadd.f32 %v2327, %v2429
  %v2438 = vadd.f32 %v2328, %v2432
  %v2439 = vand.u32 2147483647, %v2435
  %v2440 = vand.u32 2147483647, %v2436
  %v2441 = vand.u32 2147483647, %v2437
  %v2442 = vand.u32 2147483647, %v2438
  %vm2443 = vcmp.gt.f32.partialorder %v2439, 2.4142137
  %vm2444 = vcmp.gt.f32.partialorder %v2440, 2.4142137
  %vm2445 = vcmp.gt.f32.partialorder %v2441, 2.4142137
  %vm2446 = vcmp.gt.f32.partialorder %v2442, 2.4142137
  %vm2447 = vcmp.gt.f32.partialorder %v2439, 0.41421357
  %vm2448 = vcmp.gt.f32.partialorder %v2440, 0.41421357
  %vm2449 = vcmp.gt.f32.partialorder %v2441, 0.41421357
  %vm2450 = vcmp.gt.f32.partialorder %v2442, 0.41421357
  %v2451 = vmax.f32 %v2439, 1.0
  %v2452 = vmax.f32 %v2440, 1.0
  %v2453 = vmax.f32 %v2441, 1.0
  %v2454 = vmax.f32 %v2442, 1.0
  %v2455 = vrcp.pop %v2451
  %v2456 = vrcp.pop %v2452
  %v2457 = vrcp.pop %v2453
  %v2458 = vrcp.pop %v2454
  %v2459 = vsub.f32 0.0, %v2455
  %v2460 = vsub.f32 0.0, %v2456
  %v2461 = vsub.f32 0.0, %v2457
  %v2462 = vsub.f32 0.0, %v2458
  %v2463 = vsub.f32 %v2439, 1.0
  %v2464 = vsub.f32 %v2440, 1.0
  %v2465 = vsub.f32 %v2441, 1.0
  %v2466 = vsub.f32 %v2442, 1.0
  %v2467 = vadd.f32 %v2439, 1.0
  %v2468 = vadd.f32 %v2440, 1.0
  %v2469 = vadd.f32 %v2441, 1.0
  %v2470 = vadd.f32 %v2442, 1.0
  %v2471 = vrcp.pop %v2467
  %v2472 = vrcp.pop %v2468
  %v2473 = vrcp.pop %v2469
  %v2474 = vrcp.pop %v2470
  %v2475 = vmul.f32 %v2463, %v2471
  %v2476 = vmul.f32 %v2464, %v2472
  %v2477 = vmul.f32 %v2465, %v2473
  %v2478 = vmul.f32 %v2466, %v2474
  %v2479 = vsel %vm2447, %v2475, %v2439
  %v2480 = vsel %vm2448, %v2476, %v2440
  %v2481 = vsel %vm2449, %v2477, %v2441
  %v2482 = vsel %vm2450, %v2478, %v2442
  %v2483 = vsel %vm2443, %v2459, %v2479
  %v2484 = vsel %vm2444, %v2460, %v2480
  %v2485 = vsel %vm2445, %v2461, %v2481
  %v2486 = vsel %vm2446, %v2462, %v2482
  %v2487 = vsel %vm2447, 0.7853982, 0.0
  %v2488 = vsel %vm2448, 0.7853982, 0.0
  %v2489 = vsel %vm2449, 0.7853982, 0.0
  %v2490 = vsel %vm2450, 0.7853982, 0.0
  %v2491 = vsel %vm2443, 1.5707964, %v2487
  %v2492 = vsel %vm2444, 1.5707964, %v2488
  %v2493 = vsel %vm2445, 1.5707964, %v2489
  %v2494 = vsel %vm2446, 1.5707964, %v2490
  %v2495 = vmul.f32 %v2483, %v2483
  %v2496 = vmul.f32 %v2484, %v2484
  %v2497 = vmul.f32 %v2485, %v2485
  %v2498 = vmul.f32 %v2486, %v2486
  %v2499 = vmul.f32 %v2495, 0.080537446
  %v2500 = vmul.f32 %v2496, 0.080537446
  %v2501 = vmul.f32 %v2497, 0.080537446
  %v2502 = vmul.f32 %v2498, 0.080537446
  %v2503 = vsub.f32 %v2499, 0.13877685
  %v2504 = vsub.f32 %v2500, 0.13877685
  %v2505 = vsub.f32 %v2501, 0.13877685
  %v2506 = vsub.f32 %v2502, 0.13877685
  %v2507 = vmul.f32 %v2503, %v2495
  %v2508 = vmul.f32 %v2504, %v2496
  %v2509 = vmul.f32 %v2505, %v2497
  %v2510 = vmul.f32 %v2506, %v2498
  %v2511 = vadd.f32 %v2507, 0.19977711
  %v2512 = vadd.f32 %v2508, 0.19977711
  %v2513 = vadd.f32 %v2509, 0.19977711
  %v2514 = vadd.f32 %v2510, 0.19977711
  %v2515 = vmul.f32 %v2511, %v2495
  %v2516 = vmul.f32 %v2512, %v2496
  %v2517 = vmul.f32 %v2513, %v2497
  %v2518 = vmul.f32 %v2514, %v2498
  %v2519 = vsub.f32 %v2515, 0.3333295
  %v2520 = vsub.f32 %v2516, 0.3333295
  %v2521 = vsub.f32 %v2517, 0.3333295
  %v2522 = vsub.f32 %v2518, 0.3333295
  %v2523 = vadd.f32 %v2491, %v2483
  %v2524 = vadd.f32 %v2492, %v2484
  %v2525 = vadd.f32 %v2493, %v2485
  %v2526 = vadd.f32 %v2494, %v2486
  %v2527 = vmul.f32 %v2483, %v2495
  %v2528 = vmul.f32 %v2484, %v2496
  %v2529 = vmul.f32 %v2485, %v2497
  %v2530 = vmul.f32 %v2486, %v2498
  %v2531 = vmul.f32 %v2527, %v2519
  %v2532 = vmul.f32 %v2528, %v2520
  %v2533 = vmul.f32 %v2529, %v2521
  %v2534 = vmul.f32 %v2530, %v2522
  %v2535 = vadd.f32 %v2523, %v2531
  %v2536 = vadd.f32 %v2524, %v2532
  %v2537 = vadd.f32 %v2525, %v2533
  %v2538 = vadd.f32 %v2526, %v2534
  %vm2539 = vcmp.lt.f32.partialorder %v2435, 0.0
  %vm2540 = vcmp.lt.f32.partialorder %v2436, 0.0
  %vm2541 = vcmp.lt.f32.partialorder %v2437, 0.0
  %vm2542 = vcmp.lt.f32.partialorder %v2438, 0.0
  %v2543 = vsub.f32 0.0, %v2535
  %v2544 = vsub.f32 0.0, %v2536
  %v2545 = vsub.f32 0.0, %v2537
  %v2546 = vsub.f32 0.0, %v2538
  %v2547 = vsel %vm2539, %v2543, %v2535
  %v2548 = vsel %vm2540, %v2544, %v2536
  %v2549 = vsel %vm2541, %v2545, %v2537
  %v2550 = vsel %vm2542, %v2546, %v2538
  %vm2551 = vcmask 64512
  %v2552 = vsel %vm2551, %v2547, -inf
  %2553 = vmax.xlane.f32.xlu0 %v2552
  %v2554 = vpop.xlane.xlu0 %2553
  %v2555 = vsel %vm2551, %v2548, -inf
  %2556 = vmax.xlane.f32.xlu0 %v2555
  %v2557 = vpop.xlane.xlu0 %2556
  %v2558 = vsel %vm2551, %v2549, -inf
  %2559 = vmax.xlane.f32.xlu0 %v2558
  %v2560 = vpop.xlane.xlu0 %2559
  %v2561 = vsel %vm2551, %v2550, -inf
  %2562 = vmax.xlane.f32.xlu0 %v2561
  %v2563 = vpop.xlane.xlu0 %2562
  %v2564 = vsub.f32 %v2547, %v2554
  %v2565 = vsub.f32 %v2548, %v2557
  %v2566 = vsub.f32 %v2549, %v2560
  %v2567 = vsub.f32 %v2550, %v2563
  %v2568 = vmul.f32 %v2564, 1.442695
  %v2569 = vpow.pop %v2568
  %v2570 = vmul.f32 %v2565, 1.442695
  %v2571 = vpow.pop %v2570
  %v2572 = vmul.f32 %v2566, 1.442695
  %v2573 = vpow.pop %v2572
  %v2574 = vmul.f32 %v2567, 1.442695
  %v2575 = vpow.pop %v2574
  %v2576 = vsel %vm2551, %v2569, 0.0
  %2577 = vadd.xlane.f32.xlu0 %v2576
  %v2578 = vpop.xlane.xlu0 %2577
  %v2579 = vsel %vm2551, %v2571, 0.0
  %2580 = vadd.xlane.f32.xlu0 %v2579
  %v2581 = vpop.xlane.xlu0 %2580
  %v2582 = vsel %vm2551, %v2573, 0.0
  %2583 = vadd.xlane.f32.xlu0 %v2582
  %v2584 = vpop.xlane.xlu0 %2583
  %v2585 = vsel %vm2551, %v2575, 0.0
  %2586 = vadd.xlane.f32.xlu0 %v2585
  %v2587 = vpop.xlane.xlu0 %2586
  %v2588 = vlog2.pop %v2578
  %v2589 = vmul.f32 %v2588, 0.6931472
  %v2590 = vlog2.pop %v2581
  %v2591 = vmul.f32 %v2590, 0.6931472
  %v2592 = vlog2.pop %v2584
  %v2593 = vmul.f32 %v2592, 0.6931472
  %v2594 = vlog2.pop %v2587
  %v2595 = vmul.f32 %v2594, 0.6931472
  %v2596 = vsub.f32 %v2564, %v2589
  %v2597 = vsub.f32 %v2565, %v2591
  %v2598 = vsub.f32 %v2566, %v2593
  %v2599 = vsub.f32 %v2567, %v2595
  %v2600 = vsel %vm2551, %v2596, 0.0
  %v2601 = vsel %vm2551, %v2597, 0.0
  %v2602 = vsel %vm2551, %v2598, 0.0
  %v2603 = vsel %vm2551, %v2599, 0.0
  %2604 = vst [vmem:[%s4] sm:$0xff] %v2600
  %2605 = vst [vmem:[%s4 + $0x8] sm:$0xff] %v2601
  %2606 = vst [vmem:[%s4 + $0x10] sm:$0xff] %v2602
  %2607 = vst [vmem:[%s4 + $0x18] sm:$0xff] %v2603
  // Predicated region
  $region18: #{forward.1} parent=0 // pred_check
    _
  $region19: #{forward.1} parent=0 // pred_check_branch
    %2609 = sbr.rel (0) target = $region21
  $region20: #{forward.1} parent=0 // pred_region
    _
  $region21: #{forward.1} parent=0 // pred_fallthru
    _
  // Predicated region
  $region22: #{forward.1} parent=0 // pred_check
    _
  $region23: #{forward.1} parent=0 // pred_check_branch
    %2611 = sbr.rel (0) target = $region25
  $region24: #{forward.1} parent=0 // pred_region
    _
  $region25: #{forward.1} parent=0 // pred_fallthru
    _

</llo_original>
